<compile_context>
chip_gen: v5e
topology: v5e:2x2
jax: 0.10.0
libtpu: 0.0.40
codegen_flags: <defaults>
</compile_context>

<pallas_src>
import functools

import jax
import jax.numpy as jnp
from jax import lax
from jax.experimental import pallas as pl
from jax.experimental.pallas import tpu as pltpu


def _round_up(x, m):
    return (x + m - 1) // m * m


# --------------------------------------------------------------------------
# Pallas kernel: fused bidirectional GRU recurrence + output-sum epilogue
# --------------------------------------------------------------------------
def encoder_gru_kernel(gi_ref, whh_ref, bhhn_ref, out_ref, hid_ref,
                       h_scr, hist_scr, *, seq_len, hidden_pad):
    T = seq_len
    Hp = hidden_pad
    H2 = 2 * Hp
    B = h_scr.shape[0]

    # hidden=None in the PyTorch module -> zero initial state for both dirs.
    h_scr[...] = jnp.zeros_like(h_scr)                   # (Bp, 2Hp) = [h_f|h_b]

    w_hh = whh_ref[...]                                  # (2Hp, 6Hp) block-diag
    b_hh_n = jnp.broadcast_to(bhhn_ref[...], (B, H2))    # hoisted broadcast

    def step(s, carry):
        # gi_ref[s]: precomputed input projections for BOTH directions (fwd at
        # source time s, bwd at source time T-1-s), gate-interleaved as
        # [r_f|r_b|z_f|z_b|n_f|n_b]; b_ih (all gates) and b_hh (r,z) folded in.
        gi = gi_ref[s]                                   # (Bp, 6Hp)
        h = h_scr[...]                                   # (Bp, 2Hp)

        # One matmul covers both directions (block-diagonal weight, K = 2Hp).
        gh = jnp.dot(h, w_hh, preferred_element_type=jnp.float32)   # (Bp, 6Hp)

        # sigmoid(x) = 0.5*(1 + tanh(0.5*x)): one EUP push per gate instead of
        # exp + reciprocal on the serial recurrence path.
        r = 0.5 * (1.0 + jnp.tanh(0.5 * (gi[:, :H2] + gh[:, :H2])))
        z = 0.5 * (1.0 + jnp.tanh(0.5 * (gi[:, H2:2 * H2] + gh[:, H2:2 * H2])))
        n = jnp.tanh(gi[:, 2 * H2:] + r * (gh[:, 2 * H2:] + b_hh_n))
        h_new = n + z * (h - n)                          # == (1-z)*n + z*h

        h_scr[...] = h_new
        hist_scr[s] = h_new          # single plain full-width store, no RMW
        return carry

    # TODO(synk): bounded unroll (4-8) once T is non-toy.
    lax.fori_loop(0, T, step, None, unroll=True)

    # Epilogue: outputs[s] = fwd_out[s] + bwd_out[s] (bwd lives at hist[T-1-s]).
    def epilogue(s, carry):
        rev = T - 1 - s
        out_ref[s] = hist_scr[s][:, :Hp] + hist_scr[rev][:, Hp:]
        return carry

    lax.fori_loop(0, T, epilogue, None, unroll=True)

    # Final hidden written exactly once (matches PyTorch's (2, B, H) hidden).
    hid_ref[0] = h_scr[:, :Hp]
    hid_ref[1] = h_scr[:, Hp:]


# --------------------------------------------------------------------------
# Wrapper: embedding gather + hoisted, pre-permuted input projection (JAX glue)
# --------------------------------------------------------------------------
def encoder_forward(src, params, hidden_size):
    H = hidden_size
    emb = params["embedding"][src].astype(jnp.float32)   # (T, B, E) gather glue
    T, B, E = emb.shape
    Hp = _round_up(H, 128)        # lane-dense gates / outputs
    Bp = _round_up(B, 8)          # full sublanes
    f32 = jnp.float32

    pad_c = lambda w: jnp.pad(w, ((0, 0), (0, Hp - H)))          # (X,H)->(X,Hp)
    pad_b = lambda w: jnp.pad(w, ((0, Hp - H), (0, Hp - H)))     # (H,H)->(Hp,Hp)

    wif, wib = params["w_ih_f"], params["w_ih_b"]
    bif, bib = params["b_ih_f"], params["b_ih_b"]
    bhf, bhb = params["b_hh_f"], params["b_hh_b"]

    # Input-projection weight pre-permuted to the padded, per-gate-interleaved
    # kernel layout [r_f|r_b|z_f|z_b|n_f|n_b]; all b_ih and the r/z b_hh biases
    # are folded in so the big matmul output is already in kernel layout.
    w_ih_packed = jnp.concatenate([
        pad_c(wif[:, :H]),        pad_c(wib[:, :H]),
        pad_c(wif[:, H:2 * H]),   pad_c(wib[:, H:2 * H]),
        pad_c(wif[:, 2 * H:]),    pad_c(wib[:, 2 * H:])], axis=1)   # (E, 6Hp)
    bias_packed = jnp.concatenate([
        pad_c(bif[:, :H] + bhf[:, :H]),
        pad_c(bib[:, :H] + bhb[:, :H]),
        pad_c(bif[:, H:2 * H] + bhf[:, H:2 * H]),
        pad_c(bib[:, H:2 * H] + bhb[:, H:2 * H]),
        pad_c(bif[:, 2 * H:]),
        pad_c(bib[:, 2 * H:])], axis=1)                             # (1, 6Hp)

    # Hoisted input projection: one matmul for all T steps and both directions.
    # TODO(synk): at production sizes run this projection / store gi in bf16.
    emb_p = jnp.pad(emb, ((0, 0), (0, Bp - B), (0, 0)))             # (T, Bp, E)
    gi_all = (jnp.dot(emb_p.reshape(T * Bp, E), w_ih_packed,
                      preferred_element_type=f32)
              + bias_packed).reshape(T, Bp, 6 * Hp)

    # Only remaining pass over the big tensor: time-flip the backward blocks.
    g6 = gi_all.reshape(T, Bp, 6, Hp)
    g6 = g6.at[:, :, 1::2, :].set(g6[::-1, :, 1::2, :])
    gi = g6.reshape(T, Bp, 6 * Hp)

    # Block-diagonal recurrent weight matching the gi column layout.
    Z = jnp.zeros((Hp, Hp), f32)
    whf, whb = params["w_hh_f"], params["w_hh_b"]
    w_hh = jnp.concatenate([
        jnp.concatenate([pad_b(whf[:, :H]), Z, pad_b(whf[:, H:2 * H]), Z,
                         pad_b(whf[:, 2 * H:]), Z], axis=1),
        jnp.concatenate([Z, pad_b(whb[:, :H]), Z, pad_b(whb[:, H:2 * H]),
                         Z, pad_b(whb[:, 2 * H:])], axis=1),
    ], axis=0)                                                      # (2Hp, 6Hp)

    b_hh_n = jnp.concatenate([pad_c(bhf[:, 2 * H:]),
                              pad_c(bhb[:, 2 * H:])], axis=1)       # (1, 2Hp)

    kern = functools.partial(encoder_gru_kernel, seq_len=T, hidden_pad=Hp)

    grid_spec = pltpu.PrefetchScalarGridSpec(
        num_scalar_prefetch=0,
        grid=(1,),                                 # recurrence loop is in-kernel
        in_specs=[
            pl.BlockSpec((T, Bp, 6 * Hp), lambda i: (0, 0, 0)),   # packed gi
            pl.BlockSpec((2 * Hp, 6 * Hp), lambda i: (0, 0)),     # packed W_hh
            pl.BlockSpec((1, 2 * Hp), lambda i: (0, 0)),          # b_hh (n gate)
        ],
        out_specs=(
            pl.BlockSpec((T, Bp, Hp), lambda i: (0, 0, 0)),       # fwd+bwd sum
            pl.BlockSpec((2, Bp, Hp), lambda i: (0, 0, 0)),       # final hidden
        ),
        scratch_shapes=[
            pltpu.VMEM((Bp, 2 * Hp), f32),       # running [h_f | h_b] state
            pltpu.VMEM((T, Bp, 2 * Hp), f32),    # per-step hidden history
        ],
    )

    out_p, hid_p = pl.pallas_call(
        kern,
        grid_spec=grid_spec,
        out_shape=(
            jax.ShapeDtypeStruct((T, Bp, Hp), f32),
            jax.ShapeDtypeStruct((2, Bp, Hp), f32),
        ),
        compiler_params=pltpu.CompilerParams(
            dimension_semantics=("arbitrary",),       # sequential recurrence
            vmem_limit_bytes=32 * 1024 * 1024),
    )(gi, w_hh, b_hh_n)

    # Strip hardware padding back to the logical shapes.
    return out_p[:, :B, :H], hid_p[:, :B, :H]


encoder_forward_jit = jax.jit(encoder_forward, static_argnames=("hidden_size",))


# --------------------------------------------------------------------------
# Pure-JAX reference (uses raw, unpacked per-direction parameters)
# --------------------------------------------------------------------------
def _gru_cell_ref(x, h, w_ih, w_hh, b_ih, b_hh, H):
    gi = jnp.dot(x, w_ih, preferred_element_type=jnp.float32) + b_ih
    gh = jnp.dot(h, w_hh, preferred_element_type=jnp.float32) + b_hh
    r = jax.nn.sigmoid(gi[:, :H] + gh[:, :H])
    z = jax.nn.sigmoid(gi[:, H:2 * H] + gh[:, H:2 * H])
    n = jnp.tanh(gi[:, 2 * H:] + r * gh[:, 2 * H:])
    return (1.0 - z) * n + z * h


def encoder_reference(src, params, hidden_size):
    H = hidden_size
    emb = params["embedding"][src].astype(jnp.float32)
    T, B, E = emb.shape
    h0 = jnp.zeros((B, H), jnp.float32)

    def make_step(w_ih, w_hh, b_ih, b_hh):
        def step(h, x):
            h2 = _gru_cell_ref(x, h, w_ih, w_hh, b_ih, b_hh, H)
            return h2, h2
        return step

    hT_f, ys_f = lax.scan(
        make_step(params["w_ih_f"], params["w_hh_f"],
                  params["b_ih_f"], params["b_hh_f"]), h0, emb)
    hT_b, ys_b = lax.scan(
        make_step(params["w_ih_b"], params["w_hh_b"],
                  params["b_ih_b"], params["b_hh_b"]), h0, emb[::-1])
    ys_b = ys_b[::-1]
    return ys_f + ys_b, jnp.stack([hT_f, hT_b], axis=0)


# --------------------------------------------------------------------------
# Main
# --------------------------------------------------------------------------
if __name__ == "__main__":
    input_size = 10     # vocab
    embed_size = 16
    hidden_size = 32
    seq_len = 8
    batch = 2

    key = jax.random.PRNGKey(0)
    keys = jax.random.split(key, 11)
    bound = 1.0 / jnp.sqrt(hidden_size)   # PyTorch GRU init range

    params = {
        "embedding": jax.random.normal(keys[0], (input_size, embed_size),
                                       jnp.float32),
        # forward direction (stored transposed: x @ W, gate order r|z|n)
        "w_ih_f": jax.random.uniform(keys[1], (embed_size, 3 * hidden_size),
                                     jnp.float32, -bound, bound),
        "w_hh_f": jax.random.uniform(keys[2], (hidden_size, 3 * hidden_size),
                                     jnp.float32, -bound, bound),
        "b_ih_f": jax.random.uniform(keys[3], (1, 3 * hidden_size),
                                     jnp.float32, -bound, bound),
        "b_hh_f": jax.random.uniform(keys[4], (1, 3 * hidden_size),
                                     jnp.float32, -bound, bound),
        # backward direction
        "w_ih_b": jax.random.uniform(keys[5], (embed_size, 3 * hidden_size),
                                     jnp.float32, -bound, bound),
        "w_hh_b": jax.random.uniform(keys[6], (hidden_size, 3 * hidden_size),
                                     jnp.float32, -bound, bound),
        "b_ih_b": jax.random.uniform(keys[7], (1, 3 * hidden_size),
                                     jnp.float32, -bound, bound),
        "b_hh_b": jax.random.uniform(keys[8], (1, 3 * hidden_size),
                                     jnp.float32, -bound, bound),
    }

    # Main test: even T.
    src = jax.random.randint(keys[9], (seq_len, batch), 0, input_size,
                             dtype=jnp.int32)
    outputs, hidden = encoder_forward_jit(src, params, hidden_size=hidden_size)
    outputs = jax.block_until_ready(outputs)
    hidden = jax.block_until_ready(hidden)

    ref_out, ref_hid = encoder_reference(src, params, hidden_size)
    assert outputs.shape == (seq_len, batch, hidden_size)
    assert hidden.shape == (2, batch, hidden_size)
    assert jnp.allclose(outputs, ref_out, atol=1e-5, rtol=1e-5)
    assert jnp.allclose(hidden, ref_hid, atol=1e-5, rtol=1e-5)

    # Secondary test: odd T and a batch that exercises sublane padding.
    src_odd = jax.random.randint(keys[10], (7, 3), 0, input_size,
                                 dtype=jnp.int32)
    out2, hid2 = encoder_forward_jit(src_odd, params, hidden_size=hidden_size)
    out2 = jax.block_until_ready(out2)
    hid2 = jax.block_until_ready(hid2)
    ref_out2, ref_hid2 = encoder_reference(src_odd, params, hidden_size)
    assert out2.shape == (7, 3, hidden_size)
    assert hid2.shape == (2, 3, hidden_size)
    assert jnp.allclose(out2, ref_out2, atol=1e-5, rtol=1e-5)
    assert jnp.allclose(hid2, ref_hid2, atol=1e-5, rtol=1e-5)

    print("KERNEL_OK")
</pallas_src>

<mosaic_0001>
module attributes {stable_mosaic.version = 11 : i64} {
  func.func @encoder_gru_kernel(%arg0: i32, %arg1: memref<8x8x768xf32, #tpu.memory_space<vmem>>, %arg2: memref<256x768xf32, #tpu.memory_space<vmem>>, %arg3: memref<1x256xf32, #tpu.memory_space<vmem>>, %arg4: memref<8x8x128xf32, #tpu.memory_space<vmem>>, %arg5: memref<2x8x128xf32, #tpu.memory_space<vmem>>, %arg6: memref<8x256xf32, #tpu.memory_space<vmem>>, %arg7: memref<8x8x256xf32, #tpu.memory_space<vmem>>) attributes {dimension_semantics = [#tpu.dimension_semantics<arbitrary>], iteration_bounds = array<i64: 1>, scalar_prefetch = 0 : i64, scratch_operands = 2 : i64, tpu.core_type = #tpu.core_type<tc>, window_params = [{pipeline_mode = #tpu.pipeline_mode<synchronous>, transform_indices = @transform_0, window_bounds = array<i64: 8, 8, 768>}, {pipeline_mode = #tpu.pipeline_mode<synchronous>, transform_indices = @transform_1, window_bounds = array<i64: 256, 768>}, {pipeline_mode = #tpu.pipeline_mode<synchronous>, transform_indices = @transform_2, window_bounds = array<i64: 1, 256>}, {pipeline_mode = #tpu.pipeline_mode<synchronous>, transform_indices = @transform_3, window_bounds = array<i64: 8, 8, 128>}, {pipeline_mode = #tpu.pipeline_mode<synchronous>, transform_indices = @transform_4, window_bounds = array<i64: 2, 8, 128>}]} {
    %cst = arith.constant 0.000000e+00 : f32
    %0 = vector.broadcast %cst : f32 to vector<8x256xf32>
    %c0 = arith.constant 0 : index
    %c0_0 = arith.constant 0 : index
    %1 = vector.load %arg6[%c0, %c0_0] : memref<8x256xf32, #tpu.memory_space<vmem>>, vector<8x256xf32>
    tpu.vector_store %arg6[%c0, %c0_0], %0 {strides = array<i32>} : memref<8x256xf32, #tpu.memory_space<vmem>>, vector<8x256xf32>,
    %c0_1 = arith.constant 0 : index
    %c0_2 = arith.constant 0 : index
    %2 = vector.load %arg2[%c0_1, %c0_2] : memref<256x768xf32, #tpu.memory_space<vmem>>, vector<256x768xf32>
    %c0_3 = arith.constant 0 : index
    %c0_4 = arith.constant 0 : index
    %3 = vector.load %arg3[%c0_3, %c0_4] : memref<1x256xf32, #tpu.memory_space<vmem>>, vector<1x256xf32>
    %4 = vector.shape_cast %3 : vector<1x256xf32> to vector<1x256xf32>
    %5 = vector.broadcast %4 : vector<1x256xf32> to vector<8x256xf32>
    %c0_i32 = arith.constant 0 : i32
    %6 = arith.index_cast %c0_i32 : i32 to index
    %c0_5 = arith.constant 0 : index
    %c0_6 = arith.constant 0 : index
    %7 = vector.load %arg1[%6, %c0_5, %c0_6] : memref<8x8x768xf32, #tpu.memory_space<vmem>>, vector<1x8x768xf32>
    %8 = vector.shape_cast %7 : vector<1x8x768xf32> to vector<8x768xf32>
    %c0_7 = arith.constant 0 : index
    %c0_8 = arith.constant 0 : index
    %9 = vector.load %arg6[%c0_7, %c0_8] : memref<8x256xf32, #tpu.memory_space<vmem>>, vector<8x256xf32>
    %cst_9 = arith.constant dense<0.000000e+00> : vector<8x768xf32>
    %10 = tpu.matmul %9, %2, %cst_9 {dimension_numbers = #tpu.dot_dimension_numbers<[1], [0], [0], [1], [0, 0, 1, 1], [], []>} : vector<8x256xf32>, vector<256x768xf32>, vector<8x768xf32> -> vector<8x768xf32>
    %11 = vector.extract_strided_slice %8 {offsets = [0, 0], sizes = [8, 256], strides = [1, 1]} : vector<8x768xf32> to vector<8x256xf32>
    %12 = vector.extract_strided_slice %10 {offsets = [0, 0], sizes = [8, 256], strides = [1, 1]} : vector<8x768xf32> to vector<8x256xf32>
    %13 = arith.addf %11, %12 : vector<8x256xf32>
    %cst_10 = arith.constant 5.000000e-01 : f32
    %14 = vector.broadcast %cst_10 : f32 to vector<8x256xf32>
    %15 = arith.mulf %14, %13 : vector<8x256xf32>
    %16 = math.tanh %15 : vector<8x256xf32>
    %cst_11 = arith.constant 1.000000e+00 : f32
    %17 = vector.broadcast %cst_11 : f32 to vector<8x256xf32>
    %18 = arith.addf %17, %16 : vector<8x256xf32>
    %cst_12 = arith.constant 5.000000e-01 : f32
    %19 = vector.broadcast %cst_12 : f32 to vector<8x256xf32>
    %20 = arith.mulf %19, %18 : vector<8x256xf32>
    %21 = vector.extract_strided_slice %8 {offsets = [0, 256], sizes = [8, 256], strides = [1, 1]} : vector<8x768xf32> to vector<8x256xf32>
    %22 = vector.extract_strided_slice %10 {offsets = [0, 256], sizes = [8, 256], strides = [1, 1]} : vector<8x768xf32> to vector<8x256xf32>
    %23 = arith.addf %21, %22 : vector<8x256xf32>
    %cst_13 = arith.constant 5.000000e-01 : f32
    %24 = vector.broadcast %cst_13 : f32 to vector<8x256xf32>
    %25 = arith.mulf %24, %23 : vector<8x256xf32>
    %26 = math.tanh %25 : vector<8x256xf32>
    %cst_14 = arith.constant 1.000000e+00 : f32
    %27 = vector.broadcast %cst_14 : f32 to vector<8x256xf32>
    %28 = arith.addf %27, %26 : vector<8x256xf32>
    %cst_15 = arith.constant 5.000000e-01 : f32
    %29 = vector.broadcast %cst_15 : f32 to vector<8x256xf32>
    %30 = arith.mulf %29, %28 : vector<8x256xf32>
    %31 = vector.extract_strided_slice %8 {offsets = [0, 512], sizes = [8, 256], strides = [1, 1]} : vector<8x768xf32> to vector<8x256xf32>
    %32 = vector.extract_strided_slice %10 {offsets = [0, 512], sizes = [8, 256], strides = [1, 1]} : vector<8x768xf32> to vector<8x256xf32>
    %33 = arith.addf %32, %5 : vector<8x256xf32>
    %34 = arith.mulf %20, %33 : vector<8x256xf32>
    %35 = arith.addf %31, %34 : vector<8x256xf32>
    %36 = math.tanh %35 : vector<8x256xf32>
    %37 = arith.subf %9, %36 : vector<8x256xf32>
    %38 = arith.mulf %30, %37 : vector<8x256xf32>
    %39 = arith.addf %36, %38 : vector<8x256xf32>
    %c0_16 = arith.constant 0 : index
    %c0_17 = arith.constant 0 : index
    %40 = vector.load %arg6[%c0_16, %c0_17] : memref<8x256xf32, #tpu.memory_space<vmem>>, vector<8x256xf32>
    tpu.vector_store %arg6[%c0_16, %c0_17], %39 {strides = array<i32>} : memref<8x256xf32, #tpu.memory_space<vmem>>, vector<8x256xf32>,
    %41 = arith.index_cast %c0_i32 : i32 to index
    %c0_18 = arith.constant 0 : index
    %c0_19 = arith.constant 0 : index
    %42 = vector.load %arg7[%41, %c0_18, %c0_19] : memref<8x8x256xf32, #tpu.memory_space<vmem>>, vector<1x8x256xf32>
    %43 = vector.shape_cast %42 : vector<1x8x256xf32> to vector<8x256xf32>
    %44 = vector.shape_cast %39 : vector<8x256xf32> to vector<1x8x256xf32>
    tpu.vector_store %arg7[%41, %c0_18, %c0_19], %44 {strides = array<i32>} : memref<8x8x256xf32, #tpu.memory_space<vmem>>, vector<1x8x256xf32>,
    %c1_i32 = arith.constant 1 : i32
    %45 = arith.index_cast %c1_i32 : i32 to index
    %c0_20 = arith.constant 0 : index
    %c0_21 = arith.constant 0 : index
    %46 = vector.load %arg1[%45, %c0_20, %c0_21] : memref<8x8x768xf32, #tpu.memory_space<vmem>>, vector<1x8x768xf32>
    %47 = vector.shape_cast %46 : vector<1x8x768xf32> to vector<8x768xf32>
    %c0_22 = arith.constant 0 : index
    %c0_23 = arith.constant 0 : index
    %48 = vector.load %arg6[%c0_22, %c0_23] : memref<8x256xf32, #tpu.memory_space<vmem>>, vector<8x256xf32>
    %cst_24 = arith.constant dense<0.000000e+00> : vector<8x768xf32>
    %49 = tpu.matmul %48, %2, %cst_24 {dimension_numbers = #tpu.dot_dimension_numbers<[1], [0], [0], [1], [0, 0, 1, 1], [], []>} : vector<8x256xf32>, vector<256x768xf32>, vector<8x768xf32> -> vector<8x768xf32>
    %50 = vector.extract_strided_slice %47 {offsets = [0, 0], sizes = [8, 256], strides = [1, 1]} : vector<8x768xf32> to vector<8x256xf32>
    %51 = vector.extract_strided_slice %49 {offsets = [0, 0], sizes = [8, 256], strides = [1, 1]} : vector<8x768xf32> to vector<8x256xf32>
    %52 = arith.addf %50, %51 : vector<8x256xf32>
    %cst_25 = arith.constant 5.000000e-01 : f32
    %53 = vector.broadcast %cst_25 : f32 to vector<8x256xf32>
    %54 = arith.mulf %53, %52 : vector<8x256xf32>
    %55 = math.tanh %54 : vector<8x256xf32>
    %cst_26 = arith.constant 1.000000e+00 : f32
    %56 = vector.broadcast %cst_26 : f32 to vector<8x256xf32>
    %57 = arith.addf %56, %55 : vector<8x256xf32>
    %cst_27 = arith.constant 5.000000e-01 : f32
    %58 = vector.broadcast %cst_27 : f32 to vector<8x256xf32>
    %59 = arith.mulf %58, %57 : vector<8x256xf32>
    %60 = vector.extract_strided_slice %47 {offsets = [0, 256], sizes = [8, 256], strides = [1, 1]} : vector<8x768xf32> to vector<8x256xf32>
    %61 = vector.extract_strided_slice %49 {offsets = [0, 256], sizes = [8, 256], strides = [1, 1]} : vector<8x768xf32> to vector<8x256xf32>
    %62 = arith.addf %60, %61 : vector<8x256xf32>
    %cst_28 = arith.constant 5.000000e-01 : f32
    %63 = vector.broadcast %cst_28 : f32 to vector<8x256xf32>
    %64 = arith.mulf %63, %62 : vector<8x256xf32>
    %65 = math.tanh %64 : vector<8x256xf32>
    %cst_29 = arith.constant 1.000000e+00 : f32
    %66 = vector.broadcast %cst_29 : f32 to vector<8x256xf32>
    %67 = arith.addf %66, %65 : vector<8x256xf32>
    %cst_30 = arith.constant 5.000000e-01 : f32
    %68 = vector.broadcast %cst_30 : f32 to vector<8x256xf32>
    %69 = arith.mulf %68, %67 : vector<8x256xf32>
    %70 = vector.extract_strided_slice %47 {offsets = [0, 512], sizes = [8, 256], strides = [1, 1]} : vector<8x768xf32> to vector<8x256xf32>
    %71 = vector.extract_strided_slice %49 {offsets = [0, 512], sizes = [8, 256], strides = [1, 1]} : vector<8x768xf32> to vector<8x256xf32>
    %72 = arith.addf %71, %5 : vector<8x256xf32>
    %73 = arith.mulf %59, %72 : vector<8x256xf32>
    %74 = arith.addf %70, %73 : vector<8x256xf32>
    %75 = math.tanh %74 : vector<8x256xf32>
    %76 = arith.subf %48, %75 : vector<8x256xf32>
    %77 = arith.mulf %69, %76 : vector<8x256xf32>
    %78 = arith.addf %75, %77 : vector<8x256xf32>
    %c0_31 = arith.constant 0 : index
    %c0_32 = arith.constant 0 : index
    %79 = vector.load %arg6[%c0_31, %c0_32] : memref<8x256xf32, #tpu.memory_space<vmem>>, vector<8x256xf32>
    tpu.vector_store %arg6[%c0_31, %c0_32], %78 {strides = array<i32>} : memref<8x256xf32, #tpu.memory_space<vmem>>, vector<8x256xf32>,
    %80 = arith.index_cast %c1_i32 : i32 to index
    %c0_33 = arith.constant 0 : index
    %c0_34 = arith.constant 0 : index
    %81 = vector.load %arg7[%80, %c0_33, %c0_34] : memref<8x8x256xf32, #tpu.memory_space<vmem>>, vector<1x8x256xf32>
    %82 = vector.shape_cast %81 : vector<1x8x256xf32> to vector<8x256xf32>
    %83 = vector.shape_cast %78 : vector<8x256xf32> to vector<1x8x256xf32>
    tpu.vector_store %arg7[%80, %c0_33, %c0_34], %83 {strides = array<i32>} : memref<8x8x256xf32, #tpu.memory_space<vmem>>, vector<1x8x256xf32>,
    %c2_i32 = arith.constant 2 : i32
    %84 = arith.index_cast %c2_i32 : i32 to index
    %c0_35 = arith.constant 0 : index
    %c0_36 = arith.constant 0 : index
    %85 = vector.load %arg1[%84, %c0_35, %c0_36] : memref<8x8x768xf32, #tpu.memory_space<vmem>>, vector<1x8x768xf32>
    %86 = vector.shape_cast %85 : vector<1x8x768xf32> to vector<8x768xf32>
    %c0_37 = arith.constant 0 : index
    %c0_38 = arith.constant 0 : index
    %87 = vector.load %arg6[%c0_37, %c0_38] : memref<8x256xf32, #tpu.memory_space<vmem>>, vector<8x256xf32>
    %cst_39 = arith.constant dense<0.000000e+00> : vector<8x768xf32>
    %88 = tpu.matmul %87, %2, %cst_39 {dimension_numbers = #tpu.dot_dimension_numbers<[1], [0], [0], [1], [0, 0, 1, 1], [], []>} : vector<8x256xf32>, vector<256x768xf32>, vector<8x768xf32> -> vector<8x768xf32>
    %89 = vector.extract_strided_slice %86 {offsets = [0, 0], sizes = [8, 256], strides = [1, 1]} : vector<8x768xf32> to vector<8x256xf32>
    %90 = vector.extract_strided_slice %88 {offsets = [0, 0], sizes = [8, 256], strides = [1, 1]} : vector<8x768xf32> to vector<8x256xf32>
    %91 = arith.addf %89, %90 : vector<8x256xf32>
    %cst_40 = arith.constant 5.000000e-01 : f32
    %92 = vector.broadcast %cst_40 : f32 to vector<8x256xf32>
    %93 = arith.mulf %92, %91 : vector<8x256xf32>
    %94 = math.tanh %93 : vector<8x256xf32>
    %cst_41 = arith.constant 1.000000e+00 : f32
    %95 = vector.broadcast %cst_41 : f32 to vector<8x256xf32>
    %96 = arith.addf %95, %94 : vector<8x256xf32>
    %cst_42 = arith.constant 5.000000e-01 : f32
    %97 = vector.broadcast %cst_42 : f32 to vector<8x256xf32>
    %98 = arith.mulf %97, %96 : vector<8x256xf32>
    %99 = vector.extract_strided_slice %86 {offsets = [0, 256], sizes = [8, 256], strides = [1, 1]} : vector<8x768xf32> to vector<8x256xf32>
    %100 = vector.extract_strided_slice %88 {offsets = [0, 256], sizes = [8, 256], strides = [1, 1]} : vector<8x768xf32> to vector<8x256xf32>
    %101 = arith.addf %99, %100 : vector<8x256xf32>
    %cst_43 = arith.constant 5.000000e-01 : f32
    %102 = vector.broadcast %cst_43 : f32 to vector<8x256xf32>
    %103 = arith.mulf %102, %101 : vector<8x256xf32>
    %104 = math.tanh %103 : vector<8x256xf32>
    %cst_44 = arith.constant 1.000000e+00 : f32
    %105 = vector.broadcast %cst_44 : f32 to vector<8x256xf32>
    %106 = arith.addf %105, %104 : vector<8x256xf32>
    %cst_45 = arith.constant 5.000000e-01 : f32
    %107 = vector.broadcast %cst_45 : f32 to vector<8x256xf32>
    %108 = arith.mulf %107, %106 : vector<8x256xf32>
    %109 = vector.extract_strided_slice %86 {offsets = [0, 512], sizes = [8, 256], strides = [1, 1]} : vector<8x768xf32> to vector<8x256xf32>
    %110 = vector.extract_strided_slice %88 {offsets = [0, 512], sizes = [8, 256], strides = [1, 1]} : vector<8x768xf32> to vector<8x256xf32>
    %111 = arith.addf %110, %5 : vector<8x256xf32>
    %112 = arith.mulf %98, %111 : vector<8x256xf32>
    %113 = arith.addf %109, %112 : vector<8x256xf32>
    %114 = math.tanh %113 : vector<8x256xf32>
    %115 = arith.subf %87, %114 : vector<8x256xf32>
    %116 = arith.mulf %108, %115 : vector<8x256xf32>
    %117 = arith.addf %114, %116 : vector<8x256xf32>
    %c0_46 = arith.constant 0 : index
    %c0_47 = arith.constant 0 : index
    %118 = vector.load %arg6[%c0_46, %c0_47] : memref<8x256xf32, #tpu.memory_space<vmem>>, vector<8x256xf32>
    tpu.vector_store %arg6[%c0_46, %c0_47], %117 {strides = array<i32>} : memref<8x256xf32, #tpu.memory_space<vmem>>, vector<8x256xf32>,
    %119 = arith.index_cast %c2_i32 : i32 to index
    %c0_48 = arith.constant 0 : index
    %c0_49 = arith.constant 0 : index
    %120 = vector.load %arg7[%119, %c0_48, %c0_49] : memref<8x8x256xf32, #tpu.memory_space<vmem>>, vector<1x8x256xf32>
    %121 = vector.shape_cast %120 : vector<1x8x256xf32> to vector<8x256xf32>
    %122 = vector.shape_cast %117 : vector<8x256xf32> to vector<1x8x256xf32>
    tpu.vector_store %arg7[%119, %c0_48, %c0_49], %122 {strides = array<i32>} : memref<8x8x256xf32, #tpu.memory_space<vmem>>, vector<1x8x256xf32>,
    %c3_i32 = arith.constant 3 : i32
    %123 = arith.index_cast %c3_i32 : i32 to index
    %c0_50 = arith.constant 0 : index
    %c0_51 = arith.constant 0 : index
    %124 = vector.load %arg1[%123, %c0_50, %c0_51] : memref<8x8x768xf32, #tpu.memory_space<vmem>>, vector<1x8x768xf32>
    %125 = vector.shape_cast %124 : vector<1x8x768xf32> to vector<8x768xf32>
    %c0_52 = arith.constant 0 : index
    %c0_53 = arith.constant 0 : index
    %126 = vector.load %arg6[%c0_52, %c0_53] : memref<8x256xf32, #tpu.memory_space<vmem>>, vector<8x256xf32>
    %cst_54 = arith.constant dense<0.000000e+00> : vector<8x768xf32>
    %127 = tpu.matmul %126, %2, %cst_54 {dimension_numbers = #tpu.dot_dimension_numbers<[1], [0], [0], [1], [0, 0, 1, 1], [], []>} : vector<8x256xf32>, vector<256x768xf32>, vector<8x768xf32> -> vector<8x768xf32>
    %128 = vector.extract_strided_slice %125 {offsets = [0, 0], sizes = [8, 256], strides = [1, 1]} : vector<8x768xf32> to vector<8x256xf32>
    %129 = vector.extract_strided_slice %127 {offsets = [0, 0], sizes = [8, 256], strides = [1, 1]} : vector<8x768xf32> to vector<8x256xf32>
    %130 = arith.addf %128, %129 : vector<8x256xf32>
    %cst_55 = arith.constant 5.000000e-01 : f32
    %131 = vector.broadcast %cst_55 : f32 to vector<8x256xf32>
    %132 = arith.mulf %131, %130 : vector<8x256xf32>
    %133 = math.tanh %132 : vector<8x256xf32>
    %cst_56 = arith.constant 1.000000e+00 : f32
    %134 = vector.broadcast %cst_56 : f32 to vector<8x256xf32>
    %135 = arith.addf %134, %133 : vector<8x256xf32>
    %cst_57 = arith.constant 5.000000e-01 : f32
    %136 = vector.broadcast %cst_57 : f32 to vector<8x256xf32>
    %137 = arith.mulf %136, %135 : vector<8x256xf32>
    %138 = vector.extract_strided_slice %125 {offsets = [0, 256], sizes = [8, 256], strides = [1, 1]} : vector<8x768xf32> to vector<8x256xf32>
    %139 = vector.extract_strided_slice %127 {offsets = [0, 256], sizes = [8, 256], strides = [1, 1]} : vector<8x768xf32> to vector<8x256xf32>
    %140 = arith.addf %138, %139 : vector<8x256xf32>
    %cst_58 = arith.constant 5.000000e-01 : f32
    %141 = vector.broadcast %cst_58 : f32 to vector<8x256xf32>
    %142 = arith.mulf %141, %140 : vector<8x256xf32>
    %143 = math.tanh %142 : vector<8x256xf32>
    %cst_59 = arith.constant 1.000000e+00 : f32
    %144 = vector.broadcast %cst_59 : f32 to vector<8x256xf32>
    %145 = arith.addf %144, %143 : vector<8x256xf32>
    %cst_60 = arith.constant 5.000000e-01 : f32
    %146 = vector.broadcast %cst_60 : f32 to vector<8x256xf32>
    %147 = arith.mulf %146, %145 : vector<8x256xf32>
    %148 = vector.extract_strided_slice %125 {offsets = [0, 512], sizes = [8, 256], strides = [1, 1]} : vector<8x768xf32> to vector<8x256xf32>
    %149 = vector.extract_strided_slice %127 {offsets = [0, 512], sizes = [8, 256], strides = [1, 1]} : vector<8x768xf32> to vector<8x256xf32>
    %150 = arith.addf %149, %5 : vector<8x256xf32>
    %151 = arith.mulf %137, %150 : vector<8x256xf32>
    %152 = arith.addf %148, %151 : vector<8x256xf32>
    %153 = math.tanh %152 : vector<8x256xf32>
    %154 = arith.subf %126, %153 : vector<8x256xf32>
    %155 = arith.mulf %147, %154 : vector<8x256xf32>
    %156 = arith.addf %153, %155 : vector<8x256xf32>
    %c0_61 = arith.constant 0 : index
    %c0_62 = arith.constant 0 : index
    %157 = vector.load %arg6[%c0_61, %c0_62] : memref<8x256xf32, #tpu.memory_space<vmem>>, vector<8x256xf32>
    tpu.vector_store %arg6[%c0_61, %c0_62], %156 {strides = array<i32>} : memref<8x256xf32, #tpu.memory_space<vmem>>, vector<8x256xf32>,
    %158 = arith.index_cast %c3_i32 : i32 to index
    %c0_63 = arith.constant 0 : index
    %c0_64 = arith.constant 0 : index
    %159 = vector.load %arg7[%158, %c0_63, %c0_64] : memref<8x8x256xf32, #tpu.memory_space<vmem>>, vector<1x8x256xf32>
    %160 = vector.shape_cast %159 : vector<1x8x256xf32> to vector<8x256xf32>
    %161 = vector.shape_cast %156 : vector<8x256xf32> to vector<1x8x256xf32>
    tpu.vector_store %arg7[%158, %c0_63, %c0_64], %161 {strides = array<i32>} : memref<8x8x256xf32, #tpu.memory_space<vmem>>, vector<1x8x256xf32>,
    %c4_i32 = arith.constant 4 : i32
    %162 = arith.index_cast %c4_i32 : i32 to index
    %c0_65 = arith.constant 0 : index
    %c0_66 = arith.constant 0 : index
    %163 = vector.load %arg1[%162, %c0_65, %c0_66] : memref<8x8x768xf32, #tpu.memory_space<vmem>>, vector<1x8x768xf32>
    %164 = vector.shape_cast %163 : vector<1x8x768xf32> to vector<8x768xf32>
    %c0_67 = arith.constant 0 : index
    %c0_68 = arith.constant 0 : index
    %165 = vector.load %arg6[%c0_67, %c0_68] : memref<8x256xf32, #tpu.memory_space<vmem>>, vector<8x256xf32>
    %cst_69 = arith.constant dense<0.000000e+00> : vector<8x768xf32>
    %166 = tpu.matmul %165, %2, %cst_69 {dimension_numbers = #tpu.dot_dimension_numbers<[1], [0], [0], [1], [0, 0, 1, 1], [], []>} : vector<8x256xf32>, vector<256x768xf32>, vector<8x768xf32> -> vector<8x768xf32>
    %167 = vector.extract_strided_slice %164 {offsets = [0, 0], sizes = [8, 256], strides = [1, 1]} : vector<8x768xf32> to vector<8x256xf32>
    %168 = vector.extract_strided_slice %166 {offsets = [0, 0], sizes = [8, 256], strides = [1, 1]} : vector<8x768xf32> to vector<8x256xf32>
    %169 = arith.addf %167, %168 : vector<8x256xf32>
    %cst_70 = arith.constant 5.000000e-01 : f32
    %170 = vector.broadcast %cst_70 : f32 to vector<8x256xf32>
    %171 = arith.mulf %170, %169 : vector<8x256xf32>
    %172 = math.tanh %171 : vector<8x256xf32>
    %cst_71 = arith.constant 1.000000e+00 : f32
    %173 = vector.broadcast %cst_71 : f32 to vector<8x256xf32>
    %174 = arith.addf %173, %172 : vector<8x256xf32>
    %cst_72 = arith.constant 5.000000e-01 : f32
    %175 = vector.broadcast %cst_72 : f32 to vector<8x256xf32>
    %176 = arith.mulf %175, %174 : vector<8x256xf32>
    %177 = vector.extract_strided_slice %164 {offsets = [0, 256], sizes = [8, 256], strides = [1, 1]} : vector<8x768xf32> to vector<8x256xf32>
    %178 = vector.extract_strided_slice %166 {offsets = [0, 256], sizes = [8, 256], strides = [1, 1]} : vector<8x768xf32> to vector<8x256xf32>
    %179 = arith.addf %177, %178 : vector<8x256xf32>
    %cst_73 = arith.constant 5.000000e-01 : f32
    %180 = vector.broadcast %cst_73 : f32 to vector<8x256xf32>
    %181 = arith.mulf %180, %179 : vector<8x256xf32>
    %182 = math.tanh %181 : vector<8x256xf32>
    %cst_74 = arith.constant 1.000000e+00 : f32
    %183 = vector.broadcast %cst_74 : f32 to vector<8x256xf32>
    %184 = arith.addf %183, %182 : vector<8x256xf32>
    %cst_75 = arith.constant 5.000000e-01 : f32
    %185 = vector.broadcast %cst_75 : f32 to vector<8x256xf32>
    %186 = arith.mulf %185, %184 : vector<8x256xf32>
    %187 = vector.extract_strided_slice %164 {offsets = [0, 512], sizes = [8, 256], strides = [1, 1]} : vector<8x768xf32> to vector<8x256xf32>
    %188 = vector.extract_strided_slice %166 {offsets = [0, 512], sizes = [8, 256], strides = [1, 1]} : vector<8x768xf32> to vector<8x256xf32>
    %189 = arith.addf %188, %5 : vector<8x256xf32>
    %190 = arith.mulf %176, %189 : vector<8x256xf32>
    %191 = arith.addf %187, %190 : vector<8x256xf32>
    %192 = math.tanh %191 : vector<8x256xf32>
    %193 = arith.subf %165, %192 : vector<8x256xf32>
    %194 = arith.mulf %186, %193 : vector<8x256xf32>
    %195 = arith.addf %192, %194 : vector<8x256xf32>
    %c0_76 = arith.constant 0 : index
    %c0_77 = arith.constant 0 : index
    %196 = vector.load %arg6[%c0_76, %c0_77] : memref<8x256xf32, #tpu.memory_space<vmem>>, vector<8x256xf32>
    tpu.vector_store %arg6[%c0_76, %c0_77], %195 {strides = array<i32>} : memref<8x256xf32, #tpu.memory_space<vmem>>, vector<8x256xf32>,
    %197 = arith.index_cast %c4_i32 : i32 to index
    %c0_78 = arith.constant 0 : index
    %c0_79 = arith.constant 0 : index
    %198 = vector.load %arg7[%197, %c0_78, %c0_79] : memref<8x8x256xf32, #tpu.memory_space<vmem>>, vector<1x8x256xf32>
    %199 = vector.shape_cast %198 : vector<1x8x256xf32> to vector<8x256xf32>
    %200 = vector.shape_cast %195 : vector<8x256xf32> to vector<1x8x256xf32>
    tpu.vector_store %arg7[%197, %c0_78, %c0_79], %200 {strides = array<i32>} : memref<8x8x256xf32, #tpu.memory_space<vmem>>, vector<1x8x256xf32>,
    %c5_i32 = arith.constant 5 : i32
    %201 = arith.index_cast %c5_i32 : i32 to index
    %c0_80 = arith.constant 0 : index
    %c0_81 = arith.constant 0 : index
    %202 = vector.load %arg1[%201, %c0_80, %c0_81] : memref<8x8x768xf32, #tpu.memory_space<vmem>>, vector<1x8x768xf32>
    %203 = vector.shape_cast %202 : vector<1x8x768xf32> to vector<8x768xf32>
    %c0_82 = arith.constant 0 : index
    %c0_83 = arith.constant 0 : index
    %204 = vector.load %arg6[%c0_82, %c0_83] : memref<8x256xf32, #tpu.memory_space<vmem>>, vector<8x256xf32>
    %cst_84 = arith.constant dense<0.000000e+00> : vector<8x768xf32>
    %205 = tpu.matmul %204, %2, %cst_84 {dimension_numbers = #tpu.dot_dimension_numbers<[1], [0], [0], [1], [0, 0, 1, 1], [], []>} : vector<8x256xf32>, vector<256x768xf32>, vector<8x768xf32> -> vector<8x768xf32>
    %206 = vector.extract_strided_slice %203 {offsets = [0, 0], sizes = [8, 256], strides = [1, 1]} : vector<8x768xf32> to vector<8x256xf32>
    %207 = vector.extract_strided_slice %205 {offsets = [0, 0], sizes = [8, 256], strides = [1, 1]} : vector<8x768xf32> to vector<8x256xf32>
    %208 = arith.addf %206, %207 : vector<8x256xf32>
    %cst_85 = arith.constant 5.000000e-01 : f32
    %209 = vector.broadcast %cst_85 : f32 to vector<8x256xf32>
    %210 = arith.mulf %209, %208 : vector<8x256xf32>
    %211 = math.tanh %210 : vector<8x256xf32>
    %cst_86 = arith.constant 1.000000e+00 : f32
    %212 = vector.broadcast %cst_86 : f32 to vector<8x256xf32>
    %213 = arith.addf %212, %211 : vector<8x256xf32>
    %cst_87 = arith.constant 5.000000e-01 : f32
    %214 = vector.broadcast %cst_87 : f32 to vector<8x256xf32>
    %215 = arith.mulf %214, %213 : vector<8x256xf32>
    %216 = vector.extract_strided_slice %203 {offsets = [0, 256], sizes = [8, 256], strides = [1, 1]} : vector<8x768xf32> to vector<8x256xf32>
    %217 = vector.extract_strided_slice %205 {offsets = [0, 256], sizes = [8, 256], strides = [1, 1]} : vector<8x768xf32> to vector<8x256xf32>
    %218 = arith.addf %216, %217 : vector<8x256xf32>
    %cst_88 = arith.constant 5.000000e-01 : f32
    %219 = vector.broadcast %cst_88 : f32 to vector<8x256xf32>
    %220 = arith.mulf %219, %218 : vector<8x256xf32>
    %221 = math.tanh %220 : vector<8x256xf32>
    %cst_89 = arith.constant 1.000000e+00 : f32
    %222 = vector.broadcast %cst_89 : f32 to vector<8x256xf32>
    %223 = arith.addf %222, %221 : vector<8x256xf32>
    %cst_90 = arith.constant 5.000000e-01 : f32
    %224 = vector.broadcast %cst_90 : f32 to vector<8x256xf32>
    %225 = arith.mulf %224, %223 : vector<8x256xf32>
    %226 = vector.extract_strided_slice %203 {offsets = [0, 512], sizes = [8, 256], strides = [1, 1]} : vector<8x768xf32> to vector<8x256xf32>
    %227 = vector.extract_strided_slice %205 {offsets = [0, 512], sizes = [8, 256], strides = [1, 1]} : vector<8x768xf32> to vector<8x256xf32>
    %228 = arith.addf %227, %5 : vector<8x256xf32>
    %229 = arith.mulf %215, %228 : vector<8x256xf32>
    %230 = arith.addf %226, %229 : vector<8x256xf32>
    %231 = math.tanh %230 : vector<8x256xf32>
    %232 = arith.subf %204, %231 : vector<8x256xf32>
    %233 = arith.mulf %225, %232 : vector<8x256xf32>
    %234 = arith.addf %231, %233 : vector<8x256xf32>
    %c0_91 = arith.constant 0 : index
    %c0_92 = arith.constant 0 : index
    %235 = vector.load %arg6[%c0_91, %c0_92] : memref<8x256xf32, #tpu.memory_space<vmem>>, vector<8x256xf32>
    tpu.vector_store %arg6[%c0_91, %c0_92], %234 {strides = array<i32>} : memref<8x256xf32, #tpu.memory_space<vmem>>, vector<8x256xf32>,
    %236 = arith.index_cast %c5_i32 : i32 to index
    %c0_93 = arith.constant 0 : index
    %c0_94 = arith.constant 0 : index
    %237 = vector.load %arg7[%236, %c0_93, %c0_94] : memref<8x8x256xf32, #tpu.memory_space<vmem>>, vector<1x8x256xf32>
    %238 = vector.shape_cast %237 : vector<1x8x256xf32> to vector<8x256xf32>
    %239 = vector.shape_cast %234 : vector<8x256xf32> to vector<1x8x256xf32>
    tpu.vector_store %arg7[%236, %c0_93, %c0_94], %239 {strides = array<i32>} : memref<8x8x256xf32, #tpu.memory_space<vmem>>, vector<1x8x256xf32>,
    %c6_i32 = arith.constant 6 : i32
    %240 = arith.index_cast %c6_i32 : i32 to index
    %c0_95 = arith.constant 0 : index
    %c0_96 = arith.constant 0 : index
    %241 = vector.load %arg1[%240, %c0_95, %c0_96] : memref<8x8x768xf32, #tpu.memory_space<vmem>>, vector<1x8x768xf32>
    %242 = vector.shape_cast %241 : vector<1x8x768xf32> to vector<8x768xf32>
    %c0_97 = arith.constant 0 : index
    %c0_98 = arith.constant 0 : index
    %243 = vector.load %arg6[%c0_97, %c0_98] : memref<8x256xf32, #tpu.memory_space<vmem>>, vector<8x256xf32>
    %cst_99 = arith.constant dense<0.000000e+00> : vector<8x768xf32>
    %244 = tpu.matmul %243, %2, %cst_99 {dimension_numbers = #tpu.dot_dimension_numbers<[1], [0], [0], [1], [0, 0, 1, 1], [], []>} : vector<8x256xf32>, vector<256x768xf32>, vector<8x768xf32> -> vector<8x768xf32>
    %245 = vector.extract_strided_slice %242 {offsets = [0, 0], sizes = [8, 256], strides = [1, 1]} : vector<8x768xf32> to vector<8x256xf32>
    %246 = vector.extract_strided_slice %244 {offsets = [0, 0], sizes = [8, 256], strides = [1, 1]} : vector<8x768xf32> to vector<8x256xf32>
    %247 = arith.addf %245, %246 : vector<8x256xf32>
    %cst_100 = arith.constant 5.000000e-01 : f32
    %248 = vector.broadcast %cst_100 : f32 to vector<8x256xf32>
    %249 = arith.mulf %248, %247 : vector<8x256xf32>
    %250 = math.tanh %249 : vector<8x256xf32>
    %cst_101 = arith.constant 1.000000e+00 : f32
    %251 = vector.broadcast %cst_101 : f32 to vector<8x256xf32>
    %252 = arith.addf %251, %250 : vector<8x256xf32>
    %cst_102 = arith.constant 5.000000e-01 : f32
    %253 = vector.broadcast %cst_102 : f32 to vector<8x256xf32>
    %254 = arith.mulf %253, %252 : vector<8x256xf32>
    %255 = vector.extract_strided_slice %242 {offsets = [0, 256], sizes = [8, 256], strides = [1, 1]} : vector<8x768xf32> to vector<8x256xf32>
    %256 = vector.extract_strided_slice %244 {offsets = [0, 256], sizes = [8, 256], strides = [1, 1]} : vector<8x768xf32> to vector<8x256xf32>
    %257 = arith.addf %255, %256 : vector<8x256xf32>
    %cst_103 = arith.constant 5.000000e-01 : f32
    %258 = vector.broadcast %cst_103 : f32 to vector<8x256xf32>
    %259 = arith.mulf %258, %257 : vector<8x256xf32>
    %260 = math.tanh %259 : vector<8x256xf32>
    %cst_104 = arith.constant 1.000000e+00 : f32
    %261 = vector.broadcast %cst_104 : f32 to vector<8x256xf32>
    %262 = arith.addf %261, %260 : vector<8x256xf32>
    %cst_105 = arith.constant 5.000000e-01 : f32
    %263 = vector.broadcast %cst_105 : f32 to vector<8x256xf32>
    %264 = arith.mulf %263, %262 : vector<8x256xf32>
    %265 = vector.extract_strided_slice %242 {offsets = [0, 512], sizes = [8, 256], strides = [1, 1]} : vector<8x768xf32> to vector<8x256xf32>
    %266 = vector.extract_strided_slice %244 {offsets = [0, 512], sizes = [8, 256], strides = [1, 1]} : vector<8x768xf32> to vector<8x256xf32>
    %267 = arith.addf %266, %5 : vector<8x256xf32>
    %268 = arith.mulf %254, %267 : vector<8x256xf32>
    %269 = arith.addf %265, %268 : vector<8x256xf32>
    %270 = math.tanh %269 : vector<8x256xf32>
    %271 = arith.subf %243, %270 : vector<8x256xf32>
    %272 = arith.mulf %264, %271 : vector<8x256xf32>
    %273 = arith.addf %270, %272 : vector<8x256xf32>
    %c0_106 = arith.constant 0 : index
    %c0_107 = arith.constant 0 : index
    %274 = vector.load %arg6[%c0_106, %c0_107] : memref<8x256xf32, #tpu.memory_space<vmem>>, vector<8x256xf32>
    tpu.vector_store %arg6[%c0_106, %c0_107], %273 {strides = array<i32>} : memref<8x256xf32, #tpu.memory_space<vmem>>, vector<8x256xf32>,
    %275 = arith.index_cast %c6_i32 : i32 to index
    %c0_108 = arith.constant 0 : index
    %c0_109 = arith.constant 0 : index
    %276 = vector.load %arg7[%275, %c0_108, %c0_109] : memref<8x8x256xf32, #tpu.memory_space<vmem>>, vector<1x8x256xf32>
    %277 = vector.shape_cast %276 : vector<1x8x256xf32> to vector<8x256xf32>
    %278 = vector.shape_cast %273 : vector<8x256xf32> to vector<1x8x256xf32>
    tpu.vector_store %arg7[%275, %c0_108, %c0_109], %278 {strides = array<i32>} : memref<8x8x256xf32, #tpu.memory_space<vmem>>, vector<1x8x256xf32>,
    %c7_i32 = arith.constant 7 : i32
    %279 = arith.index_cast %c7_i32 : i32 to index
    %c0_110 = arith.constant 0 : index
    %c0_111 = arith.constant 0 : index
    %280 = vector.load %arg1[%279, %c0_110, %c0_111] : memref<8x8x768xf32, #tpu.memory_space<vmem>>, vector<1x8x768xf32>
    %281 = vector.shape_cast %280 : vector<1x8x768xf32> to vector<8x768xf32>
    %c0_112 = arith.constant 0 : index
    %c0_113 = arith.constant 0 : index
    %282 = vector.load %arg6[%c0_112, %c0_113] : memref<8x256xf32, #tpu.memory_space<vmem>>, vector<8x256xf32>
    %cst_114 = arith.constant dense<0.000000e+00> : vector<8x768xf32>
    %283 = tpu.matmul %282, %2, %cst_114 {dimension_numbers = #tpu.dot_dimension_numbers<[1], [0], [0], [1], [0, 0, 1, 1], [], []>} : vector<8x256xf32>, vector<256x768xf32>, vector<8x768xf32> -> vector<8x768xf32>
    %284 = vector.extract_strided_slice %281 {offsets = [0, 0], sizes = [8, 256], strides = [1, 1]} : vector<8x768xf32> to vector<8x256xf32>
    %285 = vector.extract_strided_slice %283 {offsets = [0, 0], sizes = [8, 256], strides = [1, 1]} : vector<8x768xf32> to vector<8x256xf32>
    %286 = arith.addf %284, %285 : vector<8x256xf32>
    %cst_115 = arith.constant 5.000000e-01 : f32
    %287 = vector.broadcast %cst_115 : f32 to vector<8x256xf32>
    %288 = arith.mulf %287, %286 : vector<8x256xf32>
    %289 = math.tanh %288 : vector<8x256xf32>
    %cst_116 = arith.constant 1.000000e+00 : f32
    %290 = vector.broadcast %cst_116 : f32 to vector<8x256xf32>
    %291 = arith.addf %290, %289 : vector<8x256xf32>
    %cst_117 = arith.constant 5.000000e-01 : f32
    %292 = vector.broadcast %cst_117 : f32 to vector<8x256xf32>
    %293 = arith.mulf %292, %291 : vector<8x256xf32>
    %294 = vector.extract_strided_slice %281 {offsets = [0, 256], sizes = [8, 256], strides = [1, 1]} : vector<8x768xf32> to vector<8x256xf32>
    %295 = vector.extract_strided_slice %283 {offsets = [0, 256], sizes = [8, 256], strides = [1, 1]} : vector<8x768xf32> to vector<8x256xf32>
    %296 = arith.addf %294, %295 : vector<8x256xf32>
    %cst_118 = arith.constant 5.000000e-01 : f32
    %297 = vector.broadcast %cst_118 : f32 to vector<8x256xf32>
    %298 = arith.mulf %297, %296 : vector<8x256xf32>
    %299 = math.tanh %298 : vector<8x256xf32>
    %cst_119 = arith.constant 1.000000e+00 : f32
    %300 = vector.broadcast %cst_119 : f32 to vector<8x256xf32>
    %301 = arith.addf %300, %299 : vector<8x256xf32>
    %cst_120 = arith.constant 5.000000e-01 : f32
    %302 = vector.broadcast %cst_120 : f32 to vector<8x256xf32>
    %303 = arith.mulf %302, %301 : vector<8x256xf32>
    %304 = vector.extract_strided_slice %281 {offsets = [0, 512], sizes = [8, 256], strides = [1, 1]} : vector<8x768xf32> to vector<8x256xf32>
    %305 = vector.extract_strided_slice %283 {offsets = [0, 512], sizes = [8, 256], strides = [1, 1]} : vector<8x768xf32> to vector<8x256xf32>
    %306 = arith.addf %305, %5 : vector<8x256xf32>
    %307 = arith.mulf %293, %306 : vector<8x256xf32>
    %308 = arith.addf %304, %307 : vector<8x256xf32>
    %309 = math.tanh %308 : vector<8x256xf32>
    %310 = arith.subf %282, %309 : vector<8x256xf32>
    %311 = arith.mulf %303, %310 : vector<8x256xf32>
    %312 = arith.addf %309, %311 : vector<8x256xf32>
    %c0_121 = arith.constant 0 : index
    %c0_122 = arith.constant 0 : index
    %313 = vector.load %arg6[%c0_121, %c0_122] : memref<8x256xf32, #tpu.memory_space<vmem>>, vector<8x256xf32>
    tpu.vector_store %arg6[%c0_121, %c0_122], %312 {strides = array<i32>} : memref<8x256xf32, #tpu.memory_space<vmem>>, vector<8x256xf32>,
    %314 = arith.index_cast %c7_i32 : i32 to index
    %c0_123 = arith.constant 0 : index
    %c0_124 = arith.constant 0 : index
    %315 = vector.load %arg7[%314, %c0_123, %c0_124] : memref<8x8x256xf32, #tpu.memory_space<vmem>>, vector<1x8x256xf32>
    %316 = vector.shape_cast %315 : vector<1x8x256xf32> to vector<8x256xf32>
    %317 = vector.shape_cast %312 : vector<8x256xf32> to vector<1x8x256xf32>
    tpu.vector_store %arg7[%314, %c0_123, %c0_124], %317 {strides = array<i32>} : memref<8x8x256xf32, #tpu.memory_space<vmem>>, vector<1x8x256xf32>,
    %c8_i32 = arith.constant 8 : i32
    %c0_i32_125 = arith.constant 0 : i32
    %c7_i32_126 = arith.constant 7 : i32
    %318 = arith.subi %c7_i32_126, %c0_i32_125 : i32
    %319 = arith.index_cast %c0_i32_125 : i32 to index
    %c0_127 = arith.constant 0 : index
    %c0_128 = arith.constant 0 : index
    %320 = vector.load %arg7[%319, %c0_127, %c0_128] : memref<8x8x256xf32, #tpu.memory_space<vmem>>, vector<1x8x256xf32>
    %321 = vector.shape_cast %320 : vector<1x8x256xf32> to vector<8x256xf32>
    %322 = vector.extract_strided_slice %321 {offsets = [0, 0], sizes = [8, 128], strides = [1, 1]} : vector<8x256xf32> to vector<8x128xf32>
    %323 = arith.index_cast %318 : i32 to index
    %c0_129 = arith.constant 0 : index
    %c0_130 = arith.constant 0 : index
    %324 = vector.load %arg7[%323, %c0_129, %c0_130] : memref<8x8x256xf32, #tpu.memory_space<vmem>>, vector<1x8x256xf32>
    %325 = vector.shape_cast %324 : vector<1x8x256xf32> to vector<8x256xf32>
    %326 = vector.extract_strided_slice %325 {offsets = [0, 128], sizes = [8, 128], strides = [1, 1]} : vector<8x256xf32> to vector<8x128xf32>
    %327 = arith.addf %322, %326 : vector<8x128xf32>
    %328 = arith.index_cast %c0_i32_125 : i32 to index
    %c0_131 = arith.constant 0 : index
    %c0_132 = arith.constant 0 : index
    %329 = vector.load %arg4[%328, %c0_131, %c0_132] : memref<8x8x128xf32, #tpu.memory_space<vmem>>, vector<1x8x128xf32>
    %330 = vector.shape_cast %329 : vector<1x8x128xf32> to vector<8x128xf32>
    %331 = vector.shape_cast %327 : vector<8x128xf32> to vector<1x8x128xf32>
    tpu.vector_store %arg4[%328, %c0_131, %c0_132], %331 {strides = array<i32>} : memref<8x8x128xf32, #tpu.memory_space<vmem>>, vector<1x8x128xf32>,
    %c1_i32_133 = arith.constant 1 : i32
    %c7_i32_134 = arith.constant 7 : i32
    %332 = arith.subi %c7_i32_134, %c1_i32_133 : i32
    %333 = arith.index_cast %c1_i32_133 : i32 to index
    %c0_135 = arith.constant 0 : index
    %c0_136 = arith.constant 0 : index
    %334 = vector.load %arg7[%333, %c0_135, %c0_136] : memref<8x8x256xf32, #tpu.memory_space<vmem>>, vector<1x8x256xf32>
    %335 = vector.shape_cast %334 : vector<1x8x256xf32> to vector<8x256xf32>
    %336 = vector.extract_strided_slice %335 {offsets = [0, 0], sizes = [8, 128], strides = [1, 1]} : vector<8x256xf32> to vector<8x128xf32>
    %337 = arith.index_cast %332 : i32 to index
    %c0_137 = arith.constant 0 : index
    %c0_138 = arith.constant 0 : index
    %338 = vector.load %arg7[%337, %c0_137, %c0_138] : memref<8x8x256xf32, #tpu.memory_space<vmem>>, vector<1x8x256xf32>
    %339 = vector.shape_cast %338 : vector<1x8x256xf32> to vector<8x256xf32>
    %340 = vector.extract_strided_slice %339 {offsets = [0, 128], sizes = [8, 128], strides = [1, 1]} : vector<8x256xf32> to vector<8x128xf32>
    %341 = arith.addf %336, %340 : vector<8x128xf32>
    %342 = arith.index_cast %c1_i32_133 : i32 to index
    %c0_139 = arith.constant 0 : index
    %c0_140 = arith.constant 0 : index
    %343 = vector.load %arg4[%342, %c0_139, %c0_140] : memref<8x8x128xf32, #tpu.memory_space<vmem>>, vector<1x8x128xf32>
    %344 = vector.shape_cast %343 : vector<1x8x128xf32> to vector<8x128xf32>
    %345 = vector.shape_cast %341 : vector<8x128xf32> to vector<1x8x128xf32>
    tpu.vector_store %arg4[%342, %c0_139, %c0_140], %345 {strides = array<i32>} : memref<8x8x128xf32, #tpu.memory_space<vmem>>, vector<1x8x128xf32>,
    %c2_i32_141 = arith.constant 2 : i32
    %c7_i32_142 = arith.constant 7 : i32
    %346 = arith.subi %c7_i32_142, %c2_i32_141 : i32
    %347 = arith.index_cast %c2_i32_141 : i32 to index
    %c0_143 = arith.constant 0 : index
    %c0_144 = arith.constant 0 : index
    %348 = vector.load %arg7[%347, %c0_143, %c0_144] : memref<8x8x256xf32, #tpu.memory_space<vmem>>, vector<1x8x256xf32>
    %349 = vector.shape_cast %348 : vector<1x8x256xf32> to vector<8x256xf32>
    %350 = vector.extract_strided_slice %349 {offsets = [0, 0], sizes = [8, 128], strides = [1, 1]} : vector<8x256xf32> to vector<8x128xf32>
    %351 = arith.index_cast %346 : i32 to index
    %c0_145 = arith.constant 0 : index
    %c0_146 = arith.constant 0 : index
    %352 = vector.load %arg7[%351, %c0_145, %c0_146] : memref<8x8x256xf32, #tpu.memory_space<vmem>>, vector<1x8x256xf32>
    %353 = vector.shape_cast %352 : vector<1x8x256xf32> to vector<8x256xf32>
    %354 = vector.extract_strided_slice %353 {offsets = [0, 128], sizes = [8, 128], strides = [1, 1]} : vector<8x256xf32> to vector<8x128xf32>
    %355 = arith.addf %350, %354 : vector<8x128xf32>
    %356 = arith.index_cast %c2_i32_141 : i32 to index
    %c0_147 = arith.constant 0 : index
    %c0_148 = arith.constant 0 : index
    %357 = vector.load %arg4[%356, %c0_147, %c0_148] : memref<8x8x128xf32, #tpu.memory_space<vmem>>, vector<1x8x128xf32>
    %358 = vector.shape_cast %357 : vector<1x8x128xf32> to vector<8x128xf32>
    %359 = vector.shape_cast %355 : vector<8x128xf32> to vector<1x8x128xf32>
    tpu.vector_store %arg4[%356, %c0_147, %c0_148], %359 {strides = array<i32>} : memref<8x8x128xf32, #tpu.memory_space<vmem>>, vector<1x8x128xf32>,
    %c3_i32_149 = arith.constant 3 : i32
    %c7_i32_150 = arith.constant 7 : i32
    %360 = arith.subi %c7_i32_150, %c3_i32_149 : i32
    %361 = arith.index_cast %c3_i32_149 : i32 to index
    %c0_151 = arith.constant 0 : index
    %c0_152 = arith.constant 0 : index
    %362 = vector.load %arg7[%361, %c0_151, %c0_152] : memref<8x8x256xf32, #tpu.memory_space<vmem>>, vector<1x8x256xf32>
    %363 = vector.shape_cast %362 : vector<1x8x256xf32> to vector<8x256xf32>
    %364 = vector.extract_strided_slice %363 {offsets = [0, 0], sizes = [8, 128], strides = [1, 1]} : vector<8x256xf32> to vector<8x128xf32>
    %365 = arith.index_cast %360 : i32 to index
    %c0_153 = arith.constant 0 : index
    %c0_154 = arith.constant 0 : index
    %366 = vector.load %arg7[%365, %c0_153, %c0_154] : memref<8x8x256xf32, #tpu.memory_space<vmem>>, vector<1x8x256xf32>
    %367 = vector.shape_cast %366 : vector<1x8x256xf32> to vector<8x256xf32>
    %368 = vector.extract_strided_slice %367 {offsets = [0, 128], sizes = [8, 128], strides = [1, 1]} : vector<8x256xf32> to vector<8x128xf32>
    %369 = arith.addf %364, %368 : vector<8x128xf32>
    %370 = arith.index_cast %c3_i32_149 : i32 to index
    %c0_155 = arith.constant 0 : index
    %c0_156 = arith.constant 0 : index
    %371 = vector.load %arg4[%370, %c0_155, %c0_156] : memref<8x8x128xf32, #tpu.memory_space<vmem>>, vector<1x8x128xf32>
    %372 = vector.shape_cast %371 : vector<1x8x128xf32> to vector<8x128xf32>
    %373 = vector.shape_cast %369 : vector<8x128xf32> to vector<1x8x128xf32>
    tpu.vector_store %arg4[%370, %c0_155, %c0_156], %373 {strides = array<i32>} : memref<8x8x128xf32, #tpu.memory_space<vmem>>, vector<1x8x128xf32>,
    %c4_i32_157 = arith.constant 4 : i32
    %c7_i32_158 = arith.constant 7 : i32
    %374 = arith.subi %c7_i32_158, %c4_i32_157 : i32
    %375 = arith.index_cast %c4_i32_157 : i32 to index
    %c0_159 = arith.constant 0 : index
    %c0_160 = arith.constant 0 : index
    %376 = vector.load %arg7[%375, %c0_159, %c0_160] : memref<8x8x256xf32, #tpu.memory_space<vmem>>, vector<1x8x256xf32>
    %377 = vector.shape_cast %376 : vector<1x8x256xf32> to vector<8x256xf32>
    %378 = vector.extract_strided_slice %377 {offsets = [0, 0], sizes = [8, 128], strides = [1, 1]} : vector<8x256xf32> to vector<8x128xf32>
    %379 = arith.index_cast %374 : i32 to index
    %c0_161 = arith.constant 0 : index
    %c0_162 = arith.constant 0 : index
    %380 = vector.load %arg7[%379, %c0_161, %c0_162] : memref<8x8x256xf32, #tpu.memory_space<vmem>>, vector<1x8x256xf32>
    %381 = vector.shape_cast %380 : vector<1x8x256xf32> to vector<8x256xf32>
    %382 = vector.extract_strided_slice %381 {offsets = [0, 128], sizes = [8, 128], strides = [1, 1]} : vector<8x256xf32> to vector<8x128xf32>
    %383 = arith.addf %378, %382 : vector<8x128xf32>
    %384 = arith.index_cast %c4_i32_157 : i32 to index
    %c0_163 = arith.constant 0 : index
    %c0_164 = arith.constant 0 : index
    %385 = vector.load %arg4[%384, %c0_163, %c0_164] : memref<8x8x128xf32, #tpu.memory_space<vmem>>, vector<1x8x128xf32>
    %386 = vector.shape_cast %385 : vector<1x8x128xf32> to vector<8x128xf32>
    %387 = vector.shape_cast %383 : vector<8x128xf32> to vector<1x8x128xf32>
    tpu.vector_store %arg4[%384, %c0_163, %c0_164], %387 {strides = array<i32>} : memref<8x8x128xf32, #tpu.memory_space<vmem>>, vector<1x8x128xf32>,
    %c5_i32_165 = arith.constant 5 : i32
    %c7_i32_166 = arith.constant 7 : i32
    %388 = arith.subi %c7_i32_166, %c5_i32_165 : i32
    %389 = arith.index_cast %c5_i32_165 : i32 to index
    %c0_167 = arith.constant 0 : index
    %c0_168 = arith.constant 0 : index
    %390 = vector.load %arg7[%389, %c0_167, %c0_168] : memref<8x8x256xf32, #tpu.memory_space<vmem>>, vector<1x8x256xf32>
    %391 = vector.shape_cast %390 : vector<1x8x256xf32> to vector<8x256xf32>
    %392 = vector.extract_strided_slice %391 {offsets = [0, 0], sizes = [8, 128], strides = [1, 1]} : vector<8x256xf32> to vector<8x128xf32>
    %393 = arith.index_cast %388 : i32 to index
    %c0_169 = arith.constant 0 : index
    %c0_170 = arith.constant 0 : index
    %394 = vector.load %arg7[%393, %c0_169, %c0_170] : memref<8x8x256xf32, #tpu.memory_space<vmem>>, vector<1x8x256xf32>
    %395 = vector.shape_cast %394 : vector<1x8x256xf32> to vector<8x256xf32>
    %396 = vector.extract_strided_slice %395 {offsets = [0, 128], sizes = [8, 128], strides = [1, 1]} : vector<8x256xf32> to vector<8x128xf32>
    %397 = arith.addf %392, %396 : vector<8x128xf32>
    %398 = arith.index_cast %c5_i32_165 : i32 to index
    %c0_171 = arith.constant 0 : index
    %c0_172 = arith.constant 0 : index
    %399 = vector.load %arg4[%398, %c0_171, %c0_172] : memref<8x8x128xf32, #tpu.memory_space<vmem>>, vector<1x8x128xf32>
    %400 = vector.shape_cast %399 : vector<1x8x128xf32> to vector<8x128xf32>
    %401 = vector.shape_cast %397 : vector<8x128xf32> to vector<1x8x128xf32>
    tpu.vector_store %arg4[%398, %c0_171, %c0_172], %401 {strides = array<i32>} : memref<8x8x128xf32, #tpu.memory_space<vmem>>, vector<1x8x128xf32>,
    %c6_i32_173 = arith.constant 6 : i32
    %c7_i32_174 = arith.constant 7 : i32
    %402 = arith.subi %c7_i32_174, %c6_i32_173 : i32
    %403 = arith.index_cast %c6_i32_173 : i32 to index
    %c0_175 = arith.constant 0 : index
    %c0_176 = arith.constant 0 : index
    %404 = vector.load %arg7[%403, %c0_175, %c0_176] : memref<8x8x256xf32, #tpu.memory_space<vmem>>, vector<1x8x256xf32>
    %405 = vector.shape_cast %404 : vector<1x8x256xf32> to vector<8x256xf32>
    %406 = vector.extract_strided_slice %405 {offsets = [0, 0], sizes = [8, 128], strides = [1, 1]} : vector<8x256xf32> to vector<8x128xf32>
    %407 = arith.index_cast %402 : i32 to index
    %c0_177 = arith.constant 0 : index
    %c0_178 = arith.constant 0 : index
    %408 = vector.load %arg7[%407, %c0_177, %c0_178] : memref<8x8x256xf32, #tpu.memory_space<vmem>>, vector<1x8x256xf32>
    %409 = vector.shape_cast %408 : vector<1x8x256xf32> to vector<8x256xf32>
    %410 = vector.extract_strided_slice %409 {offsets = [0, 128], sizes = [8, 128], strides = [1, 1]} : vector<8x256xf32> to vector<8x128xf32>
    %411 = arith.addf %406, %410 : vector<8x128xf32>
    %412 = arith.index_cast %c6_i32_173 : i32 to index
    %c0_179 = arith.constant 0 : index
    %c0_180 = arith.constant 0 : index
    %413 = vector.load %arg4[%412, %c0_179, %c0_180] : memref<8x8x128xf32, #tpu.memory_space<vmem>>, vector<1x8x128xf32>
    %414 = vector.shape_cast %413 : vector<1x8x128xf32> to vector<8x128xf32>
    %415 = vector.shape_cast %411 : vector<8x128xf32> to vector<1x8x128xf32>
    tpu.vector_store %arg4[%412, %c0_179, %c0_180], %415 {strides = array<i32>} : memref<8x8x128xf32, #tpu.memory_space<vmem>>, vector<1x8x128xf32>,
    %c7_i32_181 = arith.constant 7 : i32
    %c7_i32_182 = arith.constant 7 : i32
    %416 = arith.subi %c7_i32_182, %c7_i32_181 : i32
    %417 = arith.index_cast %c7_i32_181 : i32 to index
    %c0_183 = arith.constant 0 : index
    %c0_184 = arith.constant 0 : index
    %418 = vector.load %arg7[%417, %c0_183, %c0_184] : memref<8x8x256xf32, #tpu.memory_space<vmem>>, vector<1x8x256xf32>
    %419 = vector.shape_cast %418 : vector<1x8x256xf32> to vector<8x256xf32>
    %420 = vector.extract_strided_slice %419 {offsets = [0, 0], sizes = [8, 128], strides = [1, 1]} : vector<8x256xf32> to vector<8x128xf32>
    %421 = arith.index_cast %416 : i32 to index
    %c0_185 = arith.constant 0 : index
    %c0_186 = arith.constant 0 : index
    %422 = vector.load %arg7[%421, %c0_185, %c0_186] : memref<8x8x256xf32, #tpu.memory_space<vmem>>, vector<1x8x256xf32>
    %423 = vector.shape_cast %422 : vector<1x8x256xf32> to vector<8x256xf32>
    %424 = vector.extract_strided_slice %423 {offsets = [0, 128], sizes = [8, 128], strides = [1, 1]} : vector<8x256xf32> to vector<8x128xf32>
    %425 = arith.addf %420, %424 : vector<8x128xf32>
    %426 = arith.index_cast %c7_i32_181 : i32 to index
    %c0_187 = arith.constant 0 : index
    %c0_188 = arith.constant 0 : index
    %427 = vector.load %arg4[%426, %c0_187, %c0_188] : memref<8x8x128xf32, #tpu.memory_space<vmem>>, vector<1x8x128xf32>
    %428 = vector.shape_cast %427 : vector<1x8x128xf32> to vector<8x128xf32>
    %429 = vector.shape_cast %425 : vector<8x128xf32> to vector<1x8x128xf32>
    tpu.vector_store %arg4[%426, %c0_187, %c0_188], %429 {strides = array<i32>} : memref<8x8x128xf32, #tpu.memory_space<vmem>>, vector<1x8x128xf32>,
    %c8_i32_189 = arith.constant 8 : i32
    %c0_190 = arith.constant 0 : index
    %c0_191 = arith.constant 0 : index
    %430 = vector.load %arg6[%c0_190, %c0_191] : memref<8x256xf32, #tpu.memory_space<vmem>>, vector<8x128xf32>
    %c0_192 = arith.constant 0 : index
    %c0_193 = arith.constant 0 : index
    %c0_194 = arith.constant 0 : index
    %431 = vector.load %arg5[%c0_192, %c0_193, %c0_194] : memref<2x8x128xf32, #tpu.memory_space<vmem>>, vector<1x8x128xf32>
    %432 = vector.shape_cast %431 : vector<1x8x128xf32> to vector<8x128xf32>
    %433 = vector.shape_cast %430 : vector<8x128xf32> to vector<1x8x128xf32>
    tpu.vector_store %arg5[%c0_192, %c0_193, %c0_194], %433 {strides = array<i32>} : memref<2x8x128xf32, #tpu.memory_space<vmem>>, vector<1x8x128xf32>,
    %c0_195 = arith.constant 0 : index
    %c128 = arith.constant 128 : index
    %434 = vector.load %arg6[%c0_195, %c128] : memref<8x256xf32, #tpu.memory_space<vmem>>, vector<8x128xf32>
    %c1 = arith.constant 1 : index
    %c0_196 = arith.constant 0 : index
    %c0_197 = arith.constant 0 : index
    %435 = vector.load %arg5[%c1, %c0_196, %c0_197] : memref<2x8x128xf32, #tpu.memory_space<vmem>>, vector<1x8x128xf32>
    %436 = vector.shape_cast %435 : vector<1x8x128xf32> to vector<8x128xf32>
    %437 = vector.shape_cast %434 : vector<8x128xf32> to vector<1x8x128xf32>
    tpu.vector_store %arg5[%c1, %c0_196, %c0_197], %437 {strides = array<i32>} : memref<2x8x128xf32, #tpu.memory_space<vmem>>, vector<1x8x128xf32>,
    return
  }
  func.func @transform_0(%arg0: i32) -> (i32, i32, i32) {
    %c0_i32 = arith.constant 0 : i32
    %c0_i32_0 = arith.constant 0 : i32
    %c0_i32_1 = arith.constant 0 : i32
    %c0_i32_2 = arith.constant 0 : i32
    return %c0_i32, %c0_i32_0, %c0_i32_1 : i32, i32, i32
  }
  func.func @transform_1(%arg0: i32) -> (i32, i32) {
    %c0_i32 = arith.constant 0 : i32
    %c0_i32_0 = arith.constant 0 : i32
    %c0_i32_1 = arith.constant 0 : i32
    return %c0_i32, %c0_i32_0 : i32, i32
  }
  func.func @transform_2(%arg0: i32) -> (i32, i32) {
    %c0_i32 = arith.constant 0 : i32
    %c0_i32_0 = arith.constant 0 : i32
    %c0_i32_1 = arith.constant 0 : i32
    return %c0_i32, %c0_i32_0 : i32, i32
  }
  func.func @transform_3(%arg0: i32) -> (i32, i32, i32) {
    %c0_i32 = arith.constant 0 : i32
    %c0_i32_0 = arith.constant 0 : i32
    %c0_i32_1 = arith.constant 0 : i32
    %c0_i32_2 = arith.constant 0 : i32
    return %c0_i32, %c0_i32_0, %c0_i32_1 : i32, i32, i32
  }
  func.func @transform_4(%arg0: i32) -> (i32, i32, i32) {
    %c0_i32 = arith.constant 0 : i32
    %c0_i32_0 = arith.constant 0 : i32
    %c0_i32_1 = arith.constant 0 : i32
    %c0_i32_2 = arith.constant 0 : i32
    return %c0_i32, %c0_i32_0, %c0_i32_1 : i32, i32, i32
  }
}

</mosaic_0001>

<llo_original>
// kernel: encoder_forward.1
$region0: #{encoder_forward.1}
  #allocation0 [shape = 'u32[]', space=smem, size = 0x4, offset = 0x4, fixed_abs, tag = 'smem constant byte address 0x4 - core index']
  #allocation1 [shape = 'u32[72,128]{1,0:T(1,128)}', space=vmem, size = 0x9000, scoped, tag = 'internal scratch']
  #allocation2 [shape = 'f32[8,256]{1,0:T(8,128)}', space=vmem, size = 0x2000, scoped, tag = 'scratch operand']
  #allocation3 [shape = 'f32[8,8,256]{2,1,0:T(8,128)}', space=vmem, size = 0x10000, scoped, tag = 'scratch operand']
  %s0 = inlined_call_operand.vmem [shape: f32[8,8,768], index: 0, kind: input, shape index: {}]
  %s1 = inlined_call_operand.vmem [shape: f32[256,768], index: 1, kind: input, shape index: {}]
  %s2 = inlined_call_operand.vmem [shape: f32[1,256], index: 2, kind: input, shape index: {}]
  %s3 = inlined_call_operand.vmem [shape: f32[8,8,128], index: 3, kind: output, shape index: {0}]
  %s4 = inlined_call_operand.vmem [shape: f32[2,8,128], index: 4, kind: output, shape index: {1}]
  %5 = xla_tuple %s3, %s4
  %s6 = sld [smem:[#allocation0]]
  $region30: #{encoder_forward.1} parent=0
    _
  %s8 = ssub.s32 1, %s6
  %s9 = scalar_select 0, %s8, %s6
  // Predicated region
  $region2: #{encoder_forward.1} parent=0 // pred_check
    _
  $region3: #{encoder_forward.1} parent=0 // pred_check_branch
    %11 = sbr.rel (0) target = $region5
  $region4: #{encoder_forward.1} parent=0 // pred_region
    _
  $region5: #{encoder_forward.1} parent=0 // pred_fallthru
    _
  // Predicated region
  $region6: #{encoder_forward.1} parent=0 // pred_check
    _
  $region7: #{encoder_forward.1} parent=0 // pred_check_branch
    %13 = sbr.rel (0) target = $region9
  $region8: #{encoder_forward.1} parent=0 // pred_region
    _
  $region9: #{encoder_forward.1} parent=0 // pred_fallthru
    _
  // Predicated region
  $region10: #{encoder_forward.1} parent=0 // pred_check
    _
  $region11: #{encoder_forward.1} parent=0 // pred_check_branch
    %15 = sbr.rel (0) target = $region13
  $region12: #{encoder_forward.1} parent=0 // pred_region
    _
  $region13: #{encoder_forward.1} parent=0 // pred_fallthru
    _
  %16 = vst [vmem:[#allocation2] sm:$0xff] 0.0
  %17 = vst [vmem:[#allocation2 + $0x8] sm:$0xff] 0.0
  %v18 = vld [vmem:[%s1] sm:$0xff]
  %v19 = vld [vmem:[%s1 + $0x8] sm:$0xff]
  %v20 = vld [vmem:[%s1 + $0x10] sm:$0xff]
  %v21 = vld [vmem:[%s1 + $0x18] sm:$0xff]
  %v22 = vld [vmem:[%s1 + $0x20] sm:$0xff]
  %v23 = vld [vmem:[%s1 + $0x28] sm:$0xff]
  %v24 = vld [vmem:[%s1 + $0x30] sm:$0xff]
  %v25 = vld [vmem:[%s1 + $0x38] sm:$0xff]
  %v26 = vld [vmem:[%s1 + $0x40] sm:$0xff]
  %v27 = vld [vmem:[%s1 + $0x48] sm:$0xff]
  %v28 = vld [vmem:[%s1 + $0x50] sm:$0xff]
  %v29 = vld [vmem:[%s1 + $0x58] sm:$0xff]
  %v30 = vld [vmem:[%s1 + $0x60] sm:$0xff]
  %v31 = vld [vmem:[%s1 + $0x68] sm:$0xff]
  %v32 = vld [vmem:[%s1 + $0x70] sm:$0xff]
  %v33 = vld [vmem:[%s1 + $0x78] sm:$0xff]
  %v34 = vld [vmem:[%s1 + $0x80] sm:$0xff]
  %v35 = vld [vmem:[%s1 + $0x88] sm:$0xff]
  %v36 = vld [vmem:[%s1 + $0x90] sm:$0xff]
  %v37 = vld [vmem:[%s1 + $0x98] sm:$0xff]
  %v38 = vld [vmem:[%s1 + $0xa0] sm:$0xff]
  %v39 = vld [vmem:[%s1 + $0xa8] sm:$0xff]
  %v40 = vld [vmem:[%s1 + $0xb0] sm:$0xff]
  %v41 = vld [vmem:[%s1 + $0xb8] sm:$0xff]
  %v42 = vld [vmem:[%s1 + $0xc0] sm:$0xff]
  %v43 = vld [vmem:[%s1 + $0xc8] sm:$0xff]
  %v44 = vld [vmem:[%s1 + $0xd0] sm:$0xff]
  %v45 = vld [vmem:[%s1 + $0xd8] sm:$0xff]
  %v46 = vld [vmem:[%s1 + $0xe0] sm:$0xff]
  %v47 = vld [vmem:[%s1 + $0xe8] sm:$0xff]
  %v48 = vld [vmem:[%s1 + $0xf0] sm:$0xff]
  %v49 = vld [vmem:[%s1 + $0xf8] sm:$0xff]
  %v50 = vld [vmem:[%s1 + $0x100] sm:$0xff]
  %v51 = vld [vmem:[%s1 + $0x108] sm:$0xff]
  %v52 = vld [vmem:[%s1 + $0x110] sm:$0xff]
  %v53 = vld [vmem:[%s1 + $0x118] sm:$0xff]
  %v54 = vld [vmem:[%s1 + $0x120] sm:$0xff]
  %v55 = vld [vmem:[%s1 + $0x128] sm:$0xff]
  %v56 = vld [vmem:[%s1 + $0x130] sm:$0xff]
  %v57 = vld [vmem:[%s1 + $0x138] sm:$0xff]
  %v58 = vld [vmem:[%s1 + $0x140] sm:$0xff]
  %v59 = vld [vmem:[%s1 + $0x148] sm:$0xff]
  %v60 = vld [vmem:[%s1 + $0x150] sm:$0xff]
  %v61 = vld [vmem:[%s1 + $0x158] sm:$0xff]
  %v62 = vld [vmem:[%s1 + $0x160] sm:$0xff]
  %v63 = vld [vmem:[%s1 + $0x168] sm:$0xff]
  %v64 = vld [vmem:[%s1 + $0x170] sm:$0xff]
  %v65 = vld [vmem:[%s1 + $0x178] sm:$0xff]
  %v66 = vld [vmem:[%s1 + $0x180] sm:$0xff]
  %v67 = vld [vmem:[%s1 + $0x188] sm:$0xff]
  %v68 = vld [vmem:[%s1 + $0x190] sm:$0xff]
  %v69 = vld [vmem:[%s1 + $0x198] sm:$0xff]
  %v70 = vld [vmem:[%s1 + $0x1a0] sm:$0xff]
  %v71 = vld [vmem:[%s1 + $0x1a8] sm:$0xff]
  %v72 = vld [vmem:[%s1 + $0x1b0] sm:$0xff]
  %v73 = vld [vmem:[%s1 + $0x1b8] sm:$0xff]
  %v74 = vld [vmem:[%s1 + $0x1c0] sm:$0xff]
  %v75 = vld [vmem:[%s1 + $0x1c8] sm:$0xff]
  %v76 = vld [vmem:[%s1 + $0x1d0] sm:$0xff]
  %v77 = vld [vmem:[%s1 + $0x1d8] sm:$0xff]
  %v78 = vld [vmem:[%s1 + $0x1e0] sm:$0xff]
  %v79 = vld [vmem:[%s1 + $0x1e8] sm:$0xff]
  %v80 = vld [vmem:[%s1 + $0x1f0] sm:$0xff]
  %v81 = vld [vmem:[%s1 + $0x1f8] sm:$0xff]
  %v82 = vld [vmem:[%s1 + $0x200] sm:$0xff]
  %v83 = vld [vmem:[%s1 + $0x208] sm:$0xff]
  %v84 = vld [vmem:[%s1 + $0x210] sm:$0xff]
  %v85 = vld [vmem:[%s1 + $0x218] sm:$0xff]
  %v86 = vld [vmem:[%s1 + $0x220] sm:$0xff]
  %v87 = vld [vmem:[%s1 + $0x228] sm:$0xff]
  %v88 = vld [vmem:[%s1 + $0x230] sm:$0xff]
  %v89 = vld [vmem:[%s1 + $0x238] sm:$0xff]
  %v90 = vld [vmem:[%s1 + $0x240] sm:$0xff]
  %v91 = vld [vmem:[%s1 + $0x248] sm:$0xff]
  %v92 = vld [vmem:[%s1 + $0x250] sm:$0xff]
  %v93 = vld [vmem:[%s1 + $0x258] sm:$0xff]
  %v94 = vld [vmem:[%s1 + $0x260] sm:$0xff]
  %v95 = vld [vmem:[%s1 + $0x268] sm:$0xff]
  %v96 = vld [vmem:[%s1 + $0x270] sm:$0xff]
  %v97 = vld [vmem:[%s1 + $0x278] sm:$0xff]
  %v98 = vld [vmem:[%s1 + $0x280] sm:$0xff]
  %v99 = vld [vmem:[%s1 + $0x288] sm:$0xff]
  %v100 = vld [vmem:[%s1 + $0x290] sm:$0xff]
  %v101 = vld [vmem:[%s1 + $0x298] sm:$0xff]
  %v102 = vld [vmem:[%s1 + $0x2a0] sm:$0xff]
  %v103 = vld [vmem:[%s1 + $0x2a8] sm:$0xff]
  %v104 = vld [vmem:[%s1 + $0x2b0] sm:$0xff]
  %v105 = vld [vmem:[%s1 + $0x2b8] sm:$0xff]
  %v106 = vld [vmem:[%s1 + $0x2c0] sm:$0xff]
  %v107 = vld [vmem:[%s1 + $0x2c8] sm:$0xff]
  %v108 = vld [vmem:[%s1 + $0x2d0] sm:$0xff]
  %v109 = vld [vmem:[%s1 + $0x2d8] sm:$0xff]
  %v110 = vld [vmem:[%s1 + $0x2e0] sm:$0xff]
  %v111 = vld [vmem:[%s1 + $0x2e8] sm:$0xff]
  %v112 = vld [vmem:[%s1 + $0x2f0] sm:$0xff]
  %v113 = vld [vmem:[%s1 + $0x2f8] sm:$0xff]
  %v114 = vld [vmem:[%s1 + $0x300] sm:$0xff]
  %v115 = vld [vmem:[%s1 + $0x308] sm:$0xff]
  %v116 = vld [vmem:[%s1 + $0x310] sm:$0xff]
  %v117 = vld [vmem:[%s1 + $0x318] sm:$0xff]
  %v118 = vld [vmem:[%s1 + $0x320] sm:$0xff]
  %v119 = vld [vmem:[%s1 + $0x328] sm:$0xff]
  %v120 = vld [vmem:[%s1 + $0x330] sm:$0xff]
  %v121 = vld [vmem:[%s1 + $0x338] sm:$0xff]
  %v122 = vld [vmem:[%s1 + $0x340] sm:$0xff]
  %v123 = vld [vmem:[%s1 + $0x348] sm:$0xff]
  %v124 = vld [vmem:[%s1 + $0x350] sm:$0xff]
  %v125 = vld [vmem:[%s1 + $0x358] sm:$0xff]
  %v126 = vld [vmem:[%s1 + $0x360] sm:$0xff]
  %v127 = vld [vmem:[%s1 + $0x368] sm:$0xff]
  %v128 = vld [vmem:[%s1 + $0x370] sm:$0xff]
  %v129 = vld [vmem:[%s1 + $0x378] sm:$0xff]
  %v130 = vld [vmem:[%s1 + $0x380] sm:$0xff]
  %v131 = vld [vmem:[%s1 + $0x388] sm:$0xff]
  %v132 = vld [vmem:[%s1 + $0x390] sm:$0xff]
  %v133 = vld [vmem:[%s1 + $0x398] sm:$0xff]
  %v134 = vld [vmem:[%s1 + $0x3a0] sm:$0xff]
  %v135 = vld [vmem:[%s1 + $0x3a8] sm:$0xff]
  %v136 = vld [vmem:[%s1 + $0x3b0] sm:$0xff]
  %v137 = vld [vmem:[%s1 + $0x3b8] sm:$0xff]
  %v138 = vld [vmem:[%s1 + $0x3c0] sm:$0xff]
  %v139 = vld [vmem:[%s1 + $0x3c8] sm:$0xff]
  %v140 = vld [vmem:[%s1 + $0x3d0] sm:$0xff]
  %v141 = vld [vmem:[%s1 + $0x3d8] sm:$0xff]
  %v142 = vld [vmem:[%s1 + $0x3e0] sm:$0xff]
  %v143 = vld [vmem:[%s1 + $0x3e8] sm:$0xff]
  %v144 = vld [vmem:[%s1 + $0x3f0] sm:$0xff]
  %v145 = vld [vmem:[%s1 + $0x3f8] sm:$0xff]
  %v146 = vld [vmem:[%s1 + $0x400] sm:$0xff]
  %v147 = vld [vmem:[%s1 + $0x408] sm:$0xff]
  %v148 = vld [vmem:[%s1 + $0x410] sm:$0xff]
  %v149 = vld [vmem:[%s1 + $0x418] sm:$0xff]
  %v150 = vld [vmem:[%s1 + $0x420] sm:$0xff]
  %v151 = vld [vmem:[%s1 + $0x428] sm:$0xff]
  %v152 = vld [vmem:[%s1 + $0x430] sm:$0xff]
  %v153 = vld [vmem:[%s1 + $0x438] sm:$0xff]
  %v154 = vld [vmem:[%s1 + $0x440] sm:$0xff]
  %v155 = vld [vmem:[%s1 + $0x448] sm:$0xff]
  %v156 = vld [vmem:[%s1 + $0x450] sm:$0xff]
  %v157 = vld [vmem:[%s1 + $0x458] sm:$0xff]
  %v158 = vld [vmem:[%s1 + $0x460] sm:$0xff]
  %v159 = vld [vmem:[%s1 + $0x468] sm:$0xff]
  %v160 = vld [vmem:[%s1 + $0x470] sm:$0xff]
  %v161 = vld [vmem:[%s1 + $0x478] sm:$0xff]
  %v162 = vld [vmem:[%s1 + $0x480] sm:$0xff]
  %v163 = vld [vmem:[%s1 + $0x488] sm:$0xff]
  %v164 = vld [vmem:[%s1 + $0x490] sm:$0xff]
  %v165 = vld [vmem:[%s1 + $0x498] sm:$0xff]
  %v166 = vld [vmem:[%s1 + $0x4a0] sm:$0xff]
  %v167 = vld [vmem:[%s1 + $0x4a8] sm:$0xff]
  %v168 = vld [vmem:[%s1 + $0x4b0] sm:$0xff]
  %v169 = vld [vmem:[%s1 + $0x4b8] sm:$0xff]
  %v170 = vld [vmem:[%s1 + $0x4c0] sm:$0xff]
  %v171 = vld [vmem:[%s1 + $0x4c8] sm:$0xff]
  %v172 = vld [vmem:[%s1 + $0x4d0] sm:$0xff]
  %v173 = vld [vmem:[%s1 + $0x4d8] sm:$0xff]
  %v174 = vld [vmem:[%s1 + $0x4e0] sm:$0xff]
  %v175 = vld [vmem:[%s1 + $0x4e8] sm:$0xff]
  %v176 = vld [vmem:[%s1 + $0x4f0] sm:$0xff]
  %v177 = vld [vmem:[%s1 + $0x4f8] sm:$0xff]
  %v178 = vld [vmem:[%s1 + $0x500] sm:$0xff]
  %v179 = vld [vmem:[%s1 + $0x508] sm:$0xff]
  %v180 = vld [vmem:[%s1 + $0x510] sm:$0xff]
  %v181 = vld [vmem:[%s1 + $0x518] sm:$0xff]
  %v182 = vld [vmem:[%s1 + $0x520] sm:$0xff]
  %v183 = vld [vmem:[%s1 + $0x528] sm:$0xff]
  %v184 = vld [vmem:[%s1 + $0x530] sm:$0xff]
  %v185 = vld [vmem:[%s1 + $0x538] sm:$0xff]
  %v186 = vld [vmem:[%s1 + $0x540] sm:$0xff]
  %v187 = vld [vmem:[%s1 + $0x548] sm:$0xff]
  %v188 = vld [vmem:[%s1 + $0x550] sm:$0xff]
  %v189 = vld [vmem:[%s1 + $0x558] sm:$0xff]
  %v190 = vld [vmem:[%s1 + $0x560] sm:$0xff]
  %v191 = vld [vmem:[%s1 + $0x568] sm:$0xff]
  %v192 = vld [vmem:[%s1 + $0x570] sm:$0xff]
  %v193 = vld [vmem:[%s1 + $0x578] sm:$0xff]
  %v194 = vld [vmem:[%s1 + $0x580] sm:$0xff]
  %v195 = vld [vmem:[%s1 + $0x588] sm:$0xff]
  %v196 = vld [vmem:[%s1 + $0x590] sm:$0xff]
  %v197 = vld [vmem:[%s1 + $0x598] sm:$0xff]
  %v198 = vld [vmem:[%s1 + $0x5a0] sm:$0xff]
  %v199 = vld [vmem:[%s1 + $0x5a8] sm:$0xff]
  %v200 = vld [vmem:[%s1 + $0x5b0] sm:$0xff]
  %v201 = vld [vmem:[%s1 + $0x5b8] sm:$0xff]
  %v202 = vld [vmem:[%s1 + $0x5c0] sm:$0xff]
  %v203 = vld [vmem:[%s1 + $0x5c8] sm:$0xff]
  %v204 = vld [vmem:[%s1 + $0x5d0] sm:$0xff]
  %v205 = vld [vmem:[%s1 + $0x5d8] sm:$0xff]
  %v206 = vld [vmem:[%s1 + $0x5e0] sm:$0xff]
  %v207 = vld [vmem:[%s1 + $0x5e8] sm:$0xff]
  %v208 = vld [vmem:[%s1 + $0x5f0] sm:$0xff]
  %v209 = vld [vmem:[%s1 + $0x5f8] sm:$0xff]
  %v210 = vld [vmem:[%s2] sm:$0x3]
  %v212 = vperm.slane %v210, 0
  %v213 = vperm.slane %v210, 1
  %v216 = vld [vmem:[%s0] sm:$0xff]
  %v217 = vld [vmem:[%s0 + $0x8] sm:$0xff]
  %v218 = vld [vmem:[%s0 + $0x10] sm:$0xff]
  %v219 = vld [vmem:[%s0 + $0x18] sm:$0xff]
  %v220 = vld [vmem:[%s0 + $0x20] sm:$0xff]
  %v221 = vld [vmem:[%s0 + $0x28] sm:$0xff]
  %v222 = vld [vmem:[#allocation2] sm:$0xff]
  %v223 = vld [vmem:[#allocation2 + $0x8] sm:$0xff]
  %224 = vmatpush.msra.mxu0 %v108
  %225 = vmatpush.msra.mxu0 %v102
  %226 = vmatpush.msra.mxu0 %v96
  %227 = vmatpush.msra.mxu0 %v90
  %228 = vmatpush.msra.mxu0 %v84
  %229 = vmatpush.msra.mxu0 %v78
  %230 = vmatpush.msra.mxu0 %v72
  %231 = vmatpush.msra.mxu0 %v66
  %232 = vmatpush.msra.mxu0 %v60
  %233 = vmatpush.msra.mxu0 %v54
  %234 = vmatpush.msra.mxu0 %v48
  %235 = vmatpush.msra.mxu0 %v42
  %236 = vmatpush.msra.mxu0 %v36
  %237 = vmatpush.msra.mxu0 %v30
  %238 = vmatpush.msra.mxu0 %v24
  %239 = vmatpush.msra.mxu0 %v18
  %240 = vmatmul.f32.gmra.mxu0 %v222
  %v241 = vpop.f32.mrf.mxu0
  %v242 = vadd.f32 0.0, %v241
  %243 = vdwg.mxu0
  %244 = vmatpush.msra.mxu0 %v204
  %245 = vmatpush.msra.mxu0 %v198
  %246 = vmatpush.msra.mxu0 %v192
  %247 = vmatpush.msra.mxu0 %v186
  %248 = vmatpush.msra.mxu0 %v180
  %249 = vmatpush.msra.mxu0 %v174
  %250 = vmatpush.msra.mxu0 %v168
  %251 = vmatpush.msra.mxu0 %v162
  %252 = vmatpush.msra.mxu0 %v156
  %253 = vmatpush.msra.mxu0 %v150
  %254 = vmatpush.msra.mxu0 %v144
  %255 = vmatpush.msra.mxu0 %v138
  %256 = vmatpush.msra.mxu0 %v132
  %257 = vmatpush.msra.mxu0 %v126
  %258 = vmatpush.msra.mxu0 %v120
  %259 = vmatpush.msra.mxu0 %v114
  %260 = vmatmul.f32.gmra.mxu0 %v223
  %v261 = vpop.f32.mrf.mxu0
  %v262 = vadd.f32 %v242, %v261
  %263 = vdwg.mxu0
  %264 = vmatpush.msra.mxu0 %v109
  %265 = vmatpush.msra.mxu0 %v103
  %266 = vmatpush.msra.mxu0 %v97
  %267 = vmatpush.msra.mxu0 %v91
  %268 = vmatpush.msra.mxu0 %v85
  %269 = vmatpush.msra.mxu0 %v79
  %270 = vmatpush.msra.mxu0 %v73
  %271 = vmatpush.msra.mxu0 %v67
  %272 = vmatpush.msra.mxu0 %v61
  %273 = vmatpush.msra.mxu0 %v55
  %274 = vmatpush.msra.mxu0 %v49
  %275 = vmatpush.msra.mxu0 %v43
  %276 = vmatpush.msra.mxu0 %v37
  %277 = vmatpush.msra.mxu0 %v31
  %278 = vmatpush.msra.mxu0 %v25
  %279 = vmatpush.msra.mxu0 %v19
  %280 = vmatmul.f32.gmra.mxu0 %v222
  %v281 = vpop.f32.mrf.mxu0
  %v282 = vadd.f32 0.0, %v281
  %283 = vdwg.mxu0
  %284 = vmatpush.msra.mxu0 %v205
  %285 = vmatpush.msra.mxu0 %v199
  %286 = vmatpush.msra.mxu0 %v193
  %287 = vmatpush.msra.mxu0 %v187
  %288 = vmatpush.msra.mxu0 %v181
  %289 = vmatpush.msra.mxu0 %v175
  %290 = vmatpush.msra.mxu0 %v169
  %291 = vmatpush.msra.mxu0 %v163
  %292 = vmatpush.msra.mxu0 %v157
  %293 = vmatpush.msra.mxu0 %v151
  %294 = vmatpush.msra.mxu0 %v145
  %295 = vmatpush.msra.mxu0 %v139
  %296 = vmatpush.msra.mxu0 %v133
  %297 = vmatpush.msra.mxu0 %v127
  %298 = vmatpush.msra.mxu0 %v121
  %299 = vmatpush.msra.mxu0 %v115
  %300 = vmatmul.f32.gmra.mxu0 %v223
  %v301 = vpop.f32.mrf.mxu0
  %v302 = vadd.f32 %v282, %v301
  %303 = vdwg.mxu0
  %304 = vmatpush.msra.mxu0 %v110
  %305 = vmatpush.msra.mxu0 %v104
  %306 = vmatpush.msra.mxu0 %v98
  %307 = vmatpush.msra.mxu0 %v92
  %308 = vmatpush.msra.mxu0 %v86
  %309 = vmatpush.msra.mxu0 %v80
  %310 = vmatpush.msra.mxu0 %v74
  %311 = vmatpush.msra.mxu0 %v68
  %312 = vmatpush.msra.mxu0 %v62
  %313 = vmatpush.msra.mxu0 %v56
  %314 = vmatpush.msra.mxu0 %v50
  %315 = vmatpush.msra.mxu0 %v44
  %316 = vmatpush.msra.mxu0 %v38
  %317 = vmatpush.msra.mxu0 %v32
  %318 = vmatpush.msra.mxu0 %v26
  %319 = vmatpush.msra.mxu0 %v20
  %320 = vmatmul.f32.gmra.mxu0 %v222
  %v321 = vpop.f32.mrf.mxu0
  %v322 = vadd.f32 0.0, %v321
  %323 = vdwg.mxu0
  %324 = vmatpush.msra.mxu0 %v206
  %325 = vmatpush.msra.mxu0 %v200
  %326 = vmatpush.msra.mxu0 %v194
  %327 = vmatpush.msra.mxu0 %v188
  %328 = vmatpush.msra.mxu0 %v182
  %329 = vmatpush.msra.mxu0 %v176
  %330 = vmatpush.msra.mxu0 %v170
  %331 = vmatpush.msra.mxu0 %v164
  %332 = vmatpush.msra.mxu0 %v158
  %333 = vmatpush.msra.mxu0 %v152
  %334 = vmatpush.msra.mxu0 %v146
  %335 = vmatpush.msra.mxu0 %v140
  %336 = vmatpush.msra.mxu0 %v134
  %337 = vmatpush.msra.mxu0 %v128
  %338 = vmatpush.msra.mxu0 %v122
  %339 = vmatpush.msra.mxu0 %v116
  %340 = vmatmul.f32.gmra.mxu0 %v223
  %v341 = vpop.f32.mrf.mxu0
  %v342 = vadd.f32 %v322, %v341
  %343 = vdwg.mxu0
  %344 = vmatpush.msra.mxu0 %v111
  %345 = vmatpush.msra.mxu0 %v105
  %346 = vmatpush.msra.mxu0 %v99
  %347 = vmatpush.msra.mxu0 %v93
  %348 = vmatpush.msra.mxu0 %v87
  %349 = vmatpush.msra.mxu0 %v81
  %350 = vmatpush.msra.mxu0 %v75
  %351 = vmatpush.msra.mxu0 %v69
  %352 = vmatpush.msra.mxu0 %v63
  %353 = vmatpush.msra.mxu0 %v57
  %354 = vmatpush.msra.mxu0 %v51
  %355 = vmatpush.msra.mxu0 %v45
  %356 = vmatpush.msra.mxu0 %v39
  %357 = vmatpush.msra.mxu0 %v33
  %358 = vmatpush.msra.mxu0 %v27
  %359 = vmatpush.msra.mxu0 %v21
  %360 = vmatmul.f32.gmra.mxu0 %v222
  %v361 = vpop.f32.mrf.mxu0
  %v362 = vadd.f32 0.0, %v361
  %363 = vdwg.mxu0
  %364 = vmatpush.msra.mxu0 %v207
  %365 = vmatpush.msra.mxu0 %v201
  %366 = vmatpush.msra.mxu0 %v195
  %367 = vmatpush.msra.mxu0 %v189
  %368 = vmatpush.msra.mxu0 %v183
  %369 = vmatpush.msra.mxu0 %v177
  %370 = vmatpush.msra.mxu0 %v171
  %371 = vmatpush.msra.mxu0 %v165
  %372 = vmatpush.msra.mxu0 %v159
  %373 = vmatpush.msra.mxu0 %v153
  %374 = vmatpush.msra.mxu0 %v147
  %375 = vmatpush.msra.mxu0 %v141
  %376 = vmatpush.msra.mxu0 %v135
  %377 = vmatpush.msra.mxu0 %v129
  %378 = vmatpush.msra.mxu0 %v123
  %379 = vmatpush.msra.mxu0 %v117
  %380 = vmatmul.f32.gmra.mxu0 %v223
  %v381 = vpop.f32.mrf.mxu0
  %v382 = vadd.f32 %v362, %v381
  %383 = vdwg.mxu0
  %384 = vmatpush.msra.mxu0 %v112
  %385 = vmatpush.msra.mxu0 %v106
  %386 = vmatpush.msra.mxu0 %v100
  %387 = vmatpush.msra.mxu0 %v94
  %388 = vmatpush.msra.mxu0 %v88
  %389 = vmatpush.msra.mxu0 %v82
  %390 = vmatpush.msra.mxu0 %v76
  %391 = vmatpush.msra.mxu0 %v70
  %392 = vmatpush.msra.mxu0 %v64
  %393 = vmatpush.msra.mxu0 %v58
  %394 = vmatpush.msra.mxu0 %v52
  %395 = vmatpush.msra.mxu0 %v46
  %396 = vmatpush.msra.mxu0 %v40
  %397 = vmatpush.msra.mxu0 %v34
  %398 = vmatpush.msra.mxu0 %v28
  %399 = vmatpush.msra.mxu0 %v22
  %400 = vmatmul.f32.gmra.mxu0 %v222
  %v401 = vpop.f32.mrf.mxu0
  %v402 = vadd.f32 0.0, %v401
  %403 = vdwg.mxu0
  %404 = vmatpush.msra.mxu0 %v208
  %405 = vmatpush.msra.mxu0 %v202
  %406 = vmatpush.msra.mxu0 %v196
  %407 = vmatpush.msra.mxu0 %v190
  %408 = vmatpush.msra.mxu0 %v184
  %409 = vmatpush.msra.mxu0 %v178
  %410 = vmatpush.msra.mxu0 %v172
  %411 = vmatpush.msra.mxu0 %v166
  %412 = vmatpush.msra.mxu0 %v160
  %413 = vmatpush.msra.mxu0 %v154
  %414 = vmatpush.msra.mxu0 %v148
  %415 = vmatpush.msra.mxu0 %v142
  %416 = vmatpush.msra.mxu0 %v136
  %417 = vmatpush.msra.mxu0 %v130
  %418 = vmatpush.msra.mxu0 %v124
  %419 = vmatpush.msra.mxu0 %v118
  %420 = vmatmul.f32.gmra.mxu0 %v223
  %v421 = vpop.f32.mrf.mxu0
  %v422 = vadd.f32 %v402, %v421
  %423 = vdwg.mxu0
  %424 = vmatpush.msra.mxu0 %v113
  %425 = vmatpush.msra.mxu0 %v107
  %426 = vmatpush.msra.mxu0 %v101
  %427 = vmatpush.msra.mxu0 %v95
  %428 = vmatpush.msra.mxu0 %v89
  %429 = vmatpush.msra.mxu0 %v83
  %430 = vmatpush.msra.mxu0 %v77
  %431 = vmatpush.msra.mxu0 %v71
  %432 = vmatpush.msra.mxu0 %v65
  %433 = vmatpush.msra.mxu0 %v59
  %434 = vmatpush.msra.mxu0 %v53
  %435 = vmatpush.msra.mxu0 %v47
  %436 = vmatpush.msra.mxu0 %v41
  %437 = vmatpush.msra.mxu0 %v35
  %438 = vmatpush.msra.mxu0 %v29
  %439 = vmatpush.msra.mxu0 %v23
  %440 = vmatmul.f32.gmra.mxu0 %v222
  %v441 = vpop.f32.mrf.mxu0
  %v442 = vadd.f32 0.0, %v441
  %443 = vdwg.mxu0
  %444 = vmatpush.msra.mxu0 %v209
  %445 = vmatpush.msra.mxu0 %v203
  %446 = vmatpush.msra.mxu0 %v197
  %447 = vmatpush.msra.mxu0 %v191
  %448 = vmatpush.msra.mxu0 %v185
  %449 = vmatpush.msra.mxu0 %v179
  %450 = vmatpush.msra.mxu0 %v173
  %451 = vmatpush.msra.mxu0 %v167
  %452 = vmatpush.msra.mxu0 %v161
  %453 = vmatpush.msra.mxu0 %v155
  %454 = vmatpush.msra.mxu0 %v149
  %455 = vmatpush.msra.mxu0 %v143
  %456 = vmatpush.msra.mxu0 %v137
  %457 = vmatpush.msra.mxu0 %v131
  %458 = vmatpush.msra.mxu0 %v125
  %459 = vmatpush.msra.mxu0 %v119
  %460 = vmatmul.f32.gmra.mxu0 %v223
  %v461 = vpop.f32.mrf.mxu0
  %v462 = vadd.f32 %v442, %v461
  %463 = vdwg.mxu0
  %v464 = vadd.f32 %v216, %v262
  %v465 = vadd.f32 %v217, %v302
  %v466 = vmul.f32 %v464, 0.5
  %v467 = vmul.f32 %v465, 0.5
  %v468 = vtanh.pop %v466
  %v469 = vtanh.pop %v467
  %v470 = vadd.f32 %v468, 1.0
  %v471 = vadd.f32 %v469, 1.0
  %v472 = vmul.f32 %v470, 0.5
  %v473 = vmul.f32 %v471, 0.5
  %v474 = vadd.f32 %v218, %v342
  %v475 = vadd.f32 %v219, %v382
  %v476 = vmul.f32 %v474, 0.5
  %v477 = vmul.f32 %v475, 0.5
  %v478 = vtanh.pop %v476
  %v479 = vtanh.pop %v477
  %v480 = vadd.f32 %v478, 1.0
  %v481 = vadd.f32 %v479, 1.0
  %v482 = vmul.f32 %v480, 0.5
  %v483 = vmul.f32 %v481, 0.5
  %v484 = vadd.f32 %v422, %v212
  %v485 = vadd.f32 %v462, %v213
  %v486 = vmul.f32 %v472, %v484
  %v487 = vmul.f32 %v473, %v485
  %v488 = vadd.f32 %v220, %v486
  %v489 = vadd.f32 %v221, %v487
  %v490 = vtanh.pop %v488
  %v491 = vtanh.pop %v489
  %v492 = vsub.f32 %v222, %v490
  %v493 = vsub.f32 %v223, %v491
  %v494 = vmul.f32 %v482, %v492
  %v495 = vmul.f32 %v483, %v493
  %v496 = vadd.f32 %v490, %v494
  %v497 = vadd.f32 %v491, %v495
  %498 = vst [vmem:[#allocation2] sm:$0xff] %v496
  %499 = vst [vmem:[#allocation2 + $0x8] sm:$0xff] %v497
  %500 = vst [vmem:[#allocation3] sm:$0xff] %v496
  %501 = vst [vmem:[#allocation3 + $0x8] sm:$0xff] %v497
  %s502 = scalar_lea.vmem %s0, 48
  %v503 = vld [vmem:[%s502] sm:$0xff]
  %v504 = vld [vmem:[%s502 + $0x8] sm:$0xff]
  %v505 = vld [vmem:[%s502 + $0x10] sm:$0xff]
  %v506 = vld [vmem:[%s502 + $0x18] sm:$0xff]
  %v507 = vld [vmem:[%s502 + $0x20] sm:$0xff]
  %v508 = vld [vmem:[%s502 + $0x28] sm:$0xff]
  %v509 = vld [vmem:[#allocation2] sm:$0xff]
  %v510 = vld [vmem:[#allocation2 + $0x8] sm:$0xff]
  %511 = vmatpush.msra.mxu0 %v108
  %512 = vmatpush.msra.mxu0 %v102
  %513 = vmatpush.msra.mxu0 %v96
  %514 = vmatpush.msra.mxu0 %v90
  %515 = vmatpush.msra.mxu0 %v84
  %516 = vmatpush.msra.mxu0 %v78
  %517 = vmatpush.msra.mxu0 %v72
  %518 = vmatpush.msra.mxu0 %v66
  %519 = vmatpush.msra.mxu0 %v60
  %520 = vmatpush.msra.mxu0 %v54
  %521 = vmatpush.msra.mxu0 %v48
  %522 = vmatpush.msra.mxu0 %v42
  %523 = vmatpush.msra.mxu0 %v36
  %524 = vmatpush.msra.mxu0 %v30
  %525 = vmatpush.msra.mxu0 %v24
  %526 = vmatpush.msra.mxu0 %v18
  %527 = vmatmul.f32.gmra.mxu0 %v509
  %v528 = vpop.f32.mrf.mxu0
  %v529 = vadd.f32 0.0, %v528
  %530 = vdwg.mxu0
  %531 = vmatpush.msra.mxu0 %v204
  %532 = vmatpush.msra.mxu0 %v198
  %533 = vmatpush.msra.mxu0 %v192
  %534 = vmatpush.msra.mxu0 %v186
  %535 = vmatpush.msra.mxu0 %v180
  %536 = vmatpush.msra.mxu0 %v174
  %537 = vmatpush.msra.mxu0 %v168
  %538 = vmatpush.msra.mxu0 %v162
  %539 = vmatpush.msra.mxu0 %v156
  %540 = vmatpush.msra.mxu0 %v150
  %541 = vmatpush.msra.mxu0 %v144
  %542 = vmatpush.msra.mxu0 %v138
  %543 = vmatpush.msra.mxu0 %v132
  %544 = vmatpush.msra.mxu0 %v126
  %545 = vmatpush.msra.mxu0 %v120
  %546 = vmatpush.msra.mxu0 %v114
  %547 = vmatmul.f32.gmra.mxu0 %v510
  %v548 = vpop.f32.mrf.mxu0
  %v549 = vadd.f32 %v529, %v548
  %550 = vdwg.mxu0
  %551 = vmatpush.msra.mxu0 %v109
  %552 = vmatpush.msra.mxu0 %v103
  %553 = vmatpush.msra.mxu0 %v97
  %554 = vmatpush.msra.mxu0 %v91
  %555 = vmatpush.msra.mxu0 %v85
  %556 = vmatpush.msra.mxu0 %v79
  %557 = vmatpush.msra.mxu0 %v73
  %558 = vmatpush.msra.mxu0 %v67
  %559 = vmatpush.msra.mxu0 %v61
  %560 = vmatpush.msra.mxu0 %v55
  %561 = vmatpush.msra.mxu0 %v49
  %562 = vmatpush.msra.mxu0 %v43
  %563 = vmatpush.msra.mxu0 %v37
  %564 = vmatpush.msra.mxu0 %v31
  %565 = vmatpush.msra.mxu0 %v25
  %566 = vmatpush.msra.mxu0 %v19
  %567 = vmatmul.f32.gmra.mxu0 %v509
  %v568 = vpop.f32.mrf.mxu0
  %v569 = vadd.f32 0.0, %v568
  %570 = vdwg.mxu0
  %571 = vmatpush.msra.mxu0 %v205
  %572 = vmatpush.msra.mxu0 %v199
  %573 = vmatpush.msra.mxu0 %v193
  %574 = vmatpush.msra.mxu0 %v187
  %575 = vmatpush.msra.mxu0 %v181
  %576 = vmatpush.msra.mxu0 %v175
  %577 = vmatpush.msra.mxu0 %v169
  %578 = vmatpush.msra.mxu0 %v163
  %579 = vmatpush.msra.mxu0 %v157
  %580 = vmatpush.msra.mxu0 %v151
  %581 = vmatpush.msra.mxu0 %v145
  %582 = vmatpush.msra.mxu0 %v139
  %583 = vmatpush.msra.mxu0 %v133
  %584 = vmatpush.msra.mxu0 %v127
  %585 = vmatpush.msra.mxu0 %v121
  %586 = vmatpush.msra.mxu0 %v115
  %587 = vmatmul.f32.gmra.mxu0 %v510
  %v588 = vpop.f32.mrf.mxu0
  %v589 = vadd.f32 %v569, %v588
  %590 = vdwg.mxu0
  %591 = vmatpush.msra.mxu0 %v110
  %592 = vmatpush.msra.mxu0 %v104
  %593 = vmatpush.msra.mxu0 %v98
  %594 = vmatpush.msra.mxu0 %v92
  %595 = vmatpush.msra.mxu0 %v86
  %596 = vmatpush.msra.mxu0 %v80
  %597 = vmatpush.msra.mxu0 %v74
  %598 = vmatpush.msra.mxu0 %v68
  %599 = vmatpush.msra.mxu0 %v62
  %600 = vmatpush.msra.mxu0 %v56
  %601 = vmatpush.msra.mxu0 %v50
  %602 = vmatpush.msra.mxu0 %v44
  %603 = vmatpush.msra.mxu0 %v38
  %604 = vmatpush.msra.mxu0 %v32
  %605 = vmatpush.msra.mxu0 %v26
  %606 = vmatpush.msra.mxu0 %v20
  %607 = vmatmul.f32.gmra.mxu0 %v509
  %v608 = vpop.f32.mrf.mxu0
  %v609 = vadd.f32 0.0, %v608
  %610 = vdwg.mxu0
  %611 = vmatpush.msra.mxu0 %v206
  %612 = vmatpush.msra.mxu0 %v200
  %613 = vmatpush.msra.mxu0 %v194
  %614 = vmatpush.msra.mxu0 %v188
  %615 = vmatpush.msra.mxu0 %v182
  %616 = vmatpush.msra.mxu0 %v176
  %617 = vmatpush.msra.mxu0 %v170
  %618 = vmatpush.msra.mxu0 %v164
  %619 = vmatpush.msra.mxu0 %v158
  %620 = vmatpush.msra.mxu0 %v152
  %621 = vmatpush.msra.mxu0 %v146
  %622 = vmatpush.msra.mxu0 %v140
  %623 = vmatpush.msra.mxu0 %v134
  %624 = vmatpush.msra.mxu0 %v128
  %625 = vmatpush.msra.mxu0 %v122
  %626 = vmatpush.msra.mxu0 %v116
  %627 = vmatmul.f32.gmra.mxu0 %v510
  %v628 = vpop.f32.mrf.mxu0
  %v629 = vadd.f32 %v609, %v628
  %630 = vdwg.mxu0
  %631 = vmatpush.msra.mxu0 %v111
  %632 = vmatpush.msra.mxu0 %v105
  %633 = vmatpush.msra.mxu0 %v99
  %634 = vmatpush.msra.mxu0 %v93
  %635 = vmatpush.msra.mxu0 %v87
  %636 = vmatpush.msra.mxu0 %v81
  %637 = vmatpush.msra.mxu0 %v75
  %638 = vmatpush.msra.mxu0 %v69
  %639 = vmatpush.msra.mxu0 %v63
  %640 = vmatpush.msra.mxu0 %v57
  %641 = vmatpush.msra.mxu0 %v51
  %642 = vmatpush.msra.mxu0 %v45
  %643 = vmatpush.msra.mxu0 %v39
  %644 = vmatpush.msra.mxu0 %v33
  %645 = vmatpush.msra.mxu0 %v27
  %646 = vmatpush.msra.mxu0 %v21
  %647 = vmatmul.f32.gmra.mxu0 %v509
  %v648 = vpop.f32.mrf.mxu0
  %v649 = vadd.f32 0.0, %v648
  %650 = vdwg.mxu0
  %651 = vmatpush.msra.mxu0 %v207
  %652 = vmatpush.msra.mxu0 %v201
  %653 = vmatpush.msra.mxu0 %v195
  %654 = vmatpush.msra.mxu0 %v189
  %655 = vmatpush.msra.mxu0 %v183
  %656 = vmatpush.msra.mxu0 %v177
  %657 = vmatpush.msra.mxu0 %v171
  %658 = vmatpush.msra.mxu0 %v165
  %659 = vmatpush.msra.mxu0 %v159
  %660 = vmatpush.msra.mxu0 %v153
  %661 = vmatpush.msra.mxu0 %v147
  %662 = vmatpush.msra.mxu0 %v141
  %663 = vmatpush.msra.mxu0 %v135
  %664 = vmatpush.msra.mxu0 %v129
  %665 = vmatpush.msra.mxu0 %v123
  %666 = vmatpush.msra.mxu0 %v117
  %667 = vmatmul.f32.gmra.mxu0 %v510
  %v668 = vpop.f32.mrf.mxu0
  %v669 = vadd.f32 %v649, %v668
  %670 = vdwg.mxu0
  %671 = vmatpush.msra.mxu0 %v112
  %672 = vmatpush.msra.mxu0 %v106
  %673 = vmatpush.msra.mxu0 %v100
  %674 = vmatpush.msra.mxu0 %v94
  %675 = vmatpush.msra.mxu0 %v88
  %676 = vmatpush.msra.mxu0 %v82
  %677 = vmatpush.msra.mxu0 %v76
  %678 = vmatpush.msra.mxu0 %v70
  %679 = vmatpush.msra.mxu0 %v64
  %680 = vmatpush.msra.mxu0 %v58
  %681 = vmatpush.msra.mxu0 %v52
  %682 = vmatpush.msra.mxu0 %v46
  %683 = vmatpush.msra.mxu0 %v40
  %684 = vmatpush.msra.mxu0 %v34
  %685 = vmatpush.msra.mxu0 %v28
  %686 = vmatpush.msra.mxu0 %v22
  %687 = vmatmul.f32.gmra.mxu0 %v509
  %v688 = vpop.f32.mrf.mxu0
  %v689 = vadd.f32 0.0, %v688
  %690 = vdwg.mxu0
  %691 = vmatpush.msra.mxu0 %v208
  %692 = vmatpush.msra.mxu0 %v202
  %693 = vmatpush.msra.mxu0 %v196
  %694 = vmatpush.msra.mxu0 %v190
  %695 = vmatpush.msra.mxu0 %v184
  %696 = vmatpush.msra.mxu0 %v178
  %697 = vmatpush.msra.mxu0 %v172
  %698 = vmatpush.msra.mxu0 %v166
  %699 = vmatpush.msra.mxu0 %v160
  %700 = vmatpush.msra.mxu0 %v154
  %701 = vmatpush.msra.mxu0 %v148
  %702 = vmatpush.msra.mxu0 %v142
  %703 = vmatpush.msra.mxu0 %v136
  %704 = vmatpush.msra.mxu0 %v130
  %705 = vmatpush.msra.mxu0 %v124
  %706 = vmatpush.msra.mxu0 %v118
  %707 = vmatmul.f32.gmra.mxu0 %v510
  %v708 = vpop.f32.mrf.mxu0
  %v709 = vadd.f32 %v689, %v708
  %710 = vdwg.mxu0
  %711 = vmatpush.msra.mxu0 %v113
  %712 = vmatpush.msra.mxu0 %v107
  %713 = vmatpush.msra.mxu0 %v101
  %714 = vmatpush.msra.mxu0 %v95
  %715 = vmatpush.msra.mxu0 %v89
  %716 = vmatpush.msra.mxu0 %v83
  %717 = vmatpush.msra.mxu0 %v77
  %718 = vmatpush.msra.mxu0 %v71
  %719 = vmatpush.msra.mxu0 %v65
  %720 = vmatpush.msra.mxu0 %v59
  %721 = vmatpush.msra.mxu0 %v53
  %722 = vmatpush.msra.mxu0 %v47
  %723 = vmatpush.msra.mxu0 %v41
  %724 = vmatpush.msra.mxu0 %v35
  %725 = vmatpush.msra.mxu0 %v29
  %726 = vmatpush.msra.mxu0 %v23
  %727 = vmatmul.f32.gmra.mxu0 %v509
  %v728 = vpop.f32.mrf.mxu0
  %v729 = vadd.f32 0.0, %v728
  %730 = vdwg.mxu0
  %731 = vmatpush.msra.mxu0 %v209
  %732 = vmatpush.msra.mxu0 %v203
  %733 = vmatpush.msra.mxu0 %v197
  %734 = vmatpush.msra.mxu0 %v191
  %735 = vmatpush.msra.mxu0 %v185
  %736 = vmatpush.msra.mxu0 %v179
  %737 = vmatpush.msra.mxu0 %v173
  %738 = vmatpush.msra.mxu0 %v167
  %739 = vmatpush.msra.mxu0 %v161
  %740 = vmatpush.msra.mxu0 %v155
  %741 = vmatpush.msra.mxu0 %v149
  %742 = vmatpush.msra.mxu0 %v143
  %743 = vmatpush.msra.mxu0 %v137
  %744 = vmatpush.msra.mxu0 %v131
  %745 = vmatpush.msra.mxu0 %v125
  %746 = vmatpush.msra.mxu0 %v119
  %747 = vmatmul.f32.gmra.mxu0 %v510
  %v748 = vpop.f32.mrf.mxu0
  %v749 = vadd.f32 %v729, %v748
  %750 = vdwg.mxu0
  %v751 = vadd.f32 %v503, %v549
  %v752 = vadd.f32 %v504, %v589
  %v753 = vmul.f32 %v751, 0.5
  %v754 = vmul.f32 %v752, 0.5
  %v755 = vtanh.pop %v753
  %v756 = vtanh.pop %v754
  %v757 = vadd.f32 %v755, 1.0
  %v758 = vadd.f32 %v756, 1.0
  %v759 = vmul.f32 %v757, 0.5
  %v760 = vmul.f32 %v758, 0.5
  %v761 = vadd.f32 %v505, %v629
  %v762 = vadd.f32 %v506, %v669
  %v763 = vmul.f32 %v761, 0.5
  %v764 = vmul.f32 %v762, 0.5
  %v765 = vtanh.pop %v763
  %v766 = vtanh.pop %v764
  %v767 = vadd.f32 %v765, 1.0
  %v768 = vadd.f32 %v766, 1.0
  %v769 = vmul.f32 %v767, 0.5
  %v770 = vmul.f32 %v768, 0.5
  %v771 = vadd.f32 %v709, %v212
  %v772 = vadd.f32 %v749, %v213
  %v773 = vmul.f32 %v759, %v771
  %v774 = vmul.f32 %v760, %v772
  %v775 = vadd.f32 %v507, %v773
  %v776 = vadd.f32 %v508, %v774
  %v777 = vtanh.pop %v775
  %v778 = vtanh.pop %v776
  %v779 = vsub.f32 %v509, %v777
  %v780 = vsub.f32 %v510, %v778
  %v781 = vmul.f32 %v769, %v779
  %v782 = vmul.f32 %v770, %v780
  %v783 = vadd.f32 %v777, %v781
  %v784 = vadd.f32 %v778, %v782
  %785 = vst [vmem:[#allocation2] sm:$0xff] %v783
  %786 = vst [vmem:[#allocation2 + $0x8] sm:$0xff] %v784
  %s787 = scalar_lea.vmem [#allocation3], 16
  %788 = vst [vmem:[%s787] sm:$0xff] %v783
  %789 = vst [vmem:[%s787 + $0x8] sm:$0xff] %v784
  %s790 = scalar_lea.vmem %s0, 96
  %v791 = vld [vmem:[%s790] sm:$0xff]
  %v792 = vld [vmem:[%s790 + $0x8] sm:$0xff]
  %v793 = vld [vmem:[%s790 + $0x10] sm:$0xff]
  %v794 = vld [vmem:[%s790 + $0x18] sm:$0xff]
  %v795 = vld [vmem:[%s790 + $0x20] sm:$0xff]
  %v796 = vld [vmem:[%s790 + $0x28] sm:$0xff]
  %v797 = vld [vmem:[#allocation2] sm:$0xff]
  %v798 = vld [vmem:[#allocation2 + $0x8] sm:$0xff]
  %799 = vmatpush.msra.mxu0 %v108
  %800 = vmatpush.msra.mxu0 %v102
  %801 = vmatpush.msra.mxu0 %v96
  %802 = vmatpush.msra.mxu0 %v90
  %803 = vmatpush.msra.mxu0 %v84
  %804 = vmatpush.msra.mxu0 %v78
  %805 = vmatpush.msra.mxu0 %v72
  %806 = vmatpush.msra.mxu0 %v66
  %807 = vmatpush.msra.mxu0 %v60
  %808 = vmatpush.msra.mxu0 %v54
  %809 = vmatpush.msra.mxu0 %v48
  %810 = vmatpush.msra.mxu0 %v42
  %811 = vmatpush.msra.mxu0 %v36
  %812 = vmatpush.msra.mxu0 %v30
  %813 = vmatpush.msra.mxu0 %v24
  %814 = vmatpush.msra.mxu0 %v18
  %815 = vmatmul.f32.gmra.mxu0 %v797
  %v816 = vpop.f32.mrf.mxu0
  %v817 = vadd.f32 0.0, %v816
  %818 = vdwg.mxu0
  %819 = vmatpush.msra.mxu0 %v204
  %820 = vmatpush.msra.mxu0 %v198
  %821 = vmatpush.msra.mxu0 %v192
  %822 = vmatpush.msra.mxu0 %v186
  %823 = vmatpush.msra.mxu0 %v180
  %824 = vmatpush.msra.mxu0 %v174
  %825 = vmatpush.msra.mxu0 %v168
  %826 = vmatpush.msra.mxu0 %v162
  %827 = vmatpush.msra.mxu0 %v156
  %828 = vmatpush.msra.mxu0 %v150
  %829 = vmatpush.msra.mxu0 %v144
  %830 = vmatpush.msra.mxu0 %v138
  %831 = vmatpush.msra.mxu0 %v132
  %832 = vmatpush.msra.mxu0 %v126
  %833 = vmatpush.msra.mxu0 %v120
  %834 = vmatpush.msra.mxu0 %v114
  %835 = vmatmul.f32.gmra.mxu0 %v798
  %v836 = vpop.f32.mrf.mxu0
  %v837 = vadd.f32 %v817, %v836
  %838 = vdwg.mxu0
  %839 = vmatpush.msra.mxu0 %v109
  %840 = vmatpush.msra.mxu0 %v103
  %841 = vmatpush.msra.mxu0 %v97
  %842 = vmatpush.msra.mxu0 %v91
  %843 = vmatpush.msra.mxu0 %v85
  %844 = vmatpush.msra.mxu0 %v79
  %845 = vmatpush.msra.mxu0 %v73
  %846 = vmatpush.msra.mxu0 %v67
  %847 = vmatpush.msra.mxu0 %v61
  %848 = vmatpush.msra.mxu0 %v55
  %849 = vmatpush.msra.mxu0 %v49
  %850 = vmatpush.msra.mxu0 %v43
  %851 = vmatpush.msra.mxu0 %v37
  %852 = vmatpush.msra.mxu0 %v31
  %853 = vmatpush.msra.mxu0 %v25
  %854 = vmatpush.msra.mxu0 %v19
  %855 = vmatmul.f32.gmra.mxu0 %v797
  %v856 = vpop.f32.mrf.mxu0
  %v857 = vadd.f32 0.0, %v856
  %858 = vdwg.mxu0
  %859 = vmatpush.msra.mxu0 %v205
  %860 = vmatpush.msra.mxu0 %v199
  %861 = vmatpush.msra.mxu0 %v193
  %862 = vmatpush.msra.mxu0 %v187
  %863 = vmatpush.msra.mxu0 %v181
  %864 = vmatpush.msra.mxu0 %v175
  %865 = vmatpush.msra.mxu0 %v169
  %866 = vmatpush.msra.mxu0 %v163
  %867 = vmatpush.msra.mxu0 %v157
  %868 = vmatpush.msra.mxu0 %v151
  %869 = vmatpush.msra.mxu0 %v145
  %870 = vmatpush.msra.mxu0 %v139
  %871 = vmatpush.msra.mxu0 %v133
  %872 = vmatpush.msra.mxu0 %v127
  %873 = vmatpush.msra.mxu0 %v121
  %874 = vmatpush.msra.mxu0 %v115
  %875 = vmatmul.f32.gmra.mxu0 %v798
  %v876 = vpop.f32.mrf.mxu0
  %v877 = vadd.f32 %v857, %v876
  %878 = vdwg.mxu0
  %879 = vmatpush.msra.mxu0 %v110
  %880 = vmatpush.msra.mxu0 %v104
  %881 = vmatpush.msra.mxu0 %v98
  %882 = vmatpush.msra.mxu0 %v92
  %883 = vmatpush.msra.mxu0 %v86
  %884 = vmatpush.msra.mxu0 %v80
  %885 = vmatpush.msra.mxu0 %v74
  %886 = vmatpush.msra.mxu0 %v68
  %887 = vmatpush.msra.mxu0 %v62
  %888 = vmatpush.msra.mxu0 %v56
  %889 = vmatpush.msra.mxu0 %v50
  %890 = vmatpush.msra.mxu0 %v44
  %891 = vmatpush.msra.mxu0 %v38
  %892 = vmatpush.msra.mxu0 %v32
  %893 = vmatpush.msra.mxu0 %v26
  %894 = vmatpush.msra.mxu0 %v20
  %895 = vmatmul.f32.gmra.mxu0 %v797
  %v896 = vpop.f32.mrf.mxu0
  %v897 = vadd.f32 0.0, %v896
  %898 = vdwg.mxu0
  %899 = vmatpush.msra.mxu0 %v206
  %900 = vmatpush.msra.mxu0 %v200
  %901 = vmatpush.msra.mxu0 %v194
  %902 = vmatpush.msra.mxu0 %v188
  %903 = vmatpush.msra.mxu0 %v182
  %904 = vmatpush.msra.mxu0 %v176
  %905 = vmatpush.msra.mxu0 %v170
  %906 = vmatpush.msra.mxu0 %v164
  %907 = vmatpush.msra.mxu0 %v158
  %908 = vmatpush.msra.mxu0 %v152
  %909 = vmatpush.msra.mxu0 %v146
  %910 = vmatpush.msra.mxu0 %v140
  %911 = vmatpush.msra.mxu0 %v134
  %912 = vmatpush.msra.mxu0 %v128
  %913 = vmatpush.msra.mxu0 %v122
  %914 = vmatpush.msra.mxu0 %v116
  %915 = vmatmul.f32.gmra.mxu0 %v798
  %v916 = vpop.f32.mrf.mxu0
  %v917 = vadd.f32 %v897, %v916
  %918 = vdwg.mxu0
  %919 = vmatpush.msra.mxu0 %v111
  %920 = vmatpush.msra.mxu0 %v105
  %921 = vmatpush.msra.mxu0 %v99
  %922 = vmatpush.msra.mxu0 %v93
  %923 = vmatpush.msra.mxu0 %v87
  %924 = vmatpush.msra.mxu0 %v81
  %925 = vmatpush.msra.mxu0 %v75
  %926 = vmatpush.msra.mxu0 %v69
  %927 = vmatpush.msra.mxu0 %v63
  %928 = vmatpush.msra.mxu0 %v57
  %929 = vmatpush.msra.mxu0 %v51
  %930 = vmatpush.msra.mxu0 %v45
  %931 = vmatpush.msra.mxu0 %v39
  %932 = vmatpush.msra.mxu0 %v33
  %933 = vmatpush.msra.mxu0 %v27
  %934 = vmatpush.msra.mxu0 %v21
  %935 = vmatmul.f32.gmra.mxu0 %v797
  %v936 = vpop.f32.mrf.mxu0
  %v937 = vadd.f32 0.0, %v936
  %938 = vdwg.mxu0
  %939 = vmatpush.msra.mxu0 %v207
  %940 = vmatpush.msra.mxu0 %v201
  %941 = vmatpush.msra.mxu0 %v195
  %942 = vmatpush.msra.mxu0 %v189
  %943 = vmatpush.msra.mxu0 %v183
  %944 = vmatpush.msra.mxu0 %v177
  %945 = vmatpush.msra.mxu0 %v171
  %946 = vmatpush.msra.mxu0 %v165
  %947 = vmatpush.msra.mxu0 %v159
  %948 = vmatpush.msra.mxu0 %v153
  %949 = vmatpush.msra.mxu0 %v147
  %950 = vmatpush.msra.mxu0 %v141
  %951 = vmatpush.msra.mxu0 %v135
  %952 = vmatpush.msra.mxu0 %v129
  %953 = vmatpush.msra.mxu0 %v123
  %954 = vmatpush.msra.mxu0 %v117
  %955 = vmatmul.f32.gmra.mxu0 %v798
  %v956 = vpop.f32.mrf.mxu0
  %v957 = vadd.f32 %v937, %v956
  %958 = vdwg.mxu0
  %959 = vmatpush.msra.mxu0 %v112
  %960 = vmatpush.msra.mxu0 %v106
  %961 = vmatpush.msra.mxu0 %v100
  %962 = vmatpush.msra.mxu0 %v94
  %963 = vmatpush.msra.mxu0 %v88
  %964 = vmatpush.msra.mxu0 %v82
  %965 = vmatpush.msra.mxu0 %v76
  %966 = vmatpush.msra.mxu0 %v70
  %967 = vmatpush.msra.mxu0 %v64
  %968 = vmatpush.msra.mxu0 %v58
  %969 = vmatpush.msra.mxu0 %v52
  %970 = vmatpush.msra.mxu0 %v46
  %971 = vmatpush.msra.mxu0 %v40
  %972 = vmatpush.msra.mxu0 %v34
  %973 = vmatpush.msra.mxu0 %v28
  %974 = vmatpush.msra.mxu0 %v22
  %975 = vmatmul.f32.gmra.mxu0 %v797
  %v976 = vpop.f32.mrf.mxu0
  %v977 = vadd.f32 0.0, %v976
  %978 = vdwg.mxu0
  %979 = vmatpush.msra.mxu0 %v208
  %980 = vmatpush.msra.mxu0 %v202
  %981 = vmatpush.msra.mxu0 %v196
  %982 = vmatpush.msra.mxu0 %v190
  %983 = vmatpush.msra.mxu0 %v184
  %984 = vmatpush.msra.mxu0 %v178
  %985 = vmatpush.msra.mxu0 %v172
  %986 = vmatpush.msra.mxu0 %v166
  %987 = vmatpush.msra.mxu0 %v160
  %988 = vmatpush.msra.mxu0 %v154
  %989 = vmatpush.msra.mxu0 %v148
  %990 = vmatpush.msra.mxu0 %v142
  %991 = vmatpush.msra.mxu0 %v136
  %992 = vmatpush.msra.mxu0 %v130
  %993 = vmatpush.msra.mxu0 %v124
  %994 = vmatpush.msra.mxu0 %v118
  %995 = vmatmul.f32.gmra.mxu0 %v798
  %v996 = vpop.f32.mrf.mxu0
  %v997 = vadd.f32 %v977, %v996
  %998 = vdwg.mxu0
  %999 = vmatpush.msra.mxu0 %v113
  %1000 = vmatpush.msra.mxu0 %v107
  %1001 = vmatpush.msra.mxu0 %v101
  %1002 = vmatpush.msra.mxu0 %v95
  %1003 = vmatpush.msra.mxu0 %v89
  %1004 = vmatpush.msra.mxu0 %v83
  %1005 = vmatpush.msra.mxu0 %v77
  %1006 = vmatpush.msra.mxu0 %v71
  %1007 = vmatpush.msra.mxu0 %v65
  %1008 = vmatpush.msra.mxu0 %v59
  %1009 = vmatpush.msra.mxu0 %v53
  %1010 = vmatpush.msra.mxu0 %v47
  %1011 = vmatpush.msra.mxu0 %v41
  %1012 = vmatpush.msra.mxu0 %v35
  %1013 = vmatpush.msra.mxu0 %v29
  %1014 = vmatpush.msra.mxu0 %v23
  %1015 = vmatmul.f32.gmra.mxu0 %v797
  %v1016 = vpop.f32.mrf.mxu0
  %v1017 = vadd.f32 0.0, %v1016
  %1018 = vdwg.mxu0
  %1019 = vmatpush.msra.mxu0 %v209
  %1020 = vmatpush.msra.mxu0 %v203
  %1021 = vmatpush.msra.mxu0 %v197
  %1022 = vmatpush.msra.mxu0 %v191
  %1023 = vmatpush.msra.mxu0 %v185
  %1024 = vmatpush.msra.mxu0 %v179
  %1025 = vmatpush.msra.mxu0 %v173
  %1026 = vmatpush.msra.mxu0 %v167
  %1027 = vmatpush.msra.mxu0 %v161
  %1028 = vmatpush.msra.mxu0 %v155
  %1029 = vmatpush.msra.mxu0 %v149
  %1030 = vmatpush.msra.mxu0 %v143
  %1031 = vmatpush.msra.mxu0 %v137
  %1032 = vmatpush.msra.mxu0 %v131
  %1033 = vmatpush.msra.mxu0 %v125
  %1034 = vmatpush.msra.mxu0 %v119
  %1035 = vmatmul.f32.gmra.mxu0 %v798
  %v1036 = vpop.f32.mrf.mxu0
  %v1037 = vadd.f32 %v1017, %v1036
  %1038 = vdwg.mxu0
  %v1039 = vadd.f32 %v791, %v837
  %v1040 = vadd.f32 %v792, %v877
  %v1041 = vmul.f32 %v1039, 0.5
  %v1042 = vmul.f32 %v1040, 0.5
  %v1043 = vtanh.pop %v1041
  %v1044 = vtanh.pop %v1042
  %v1045 = vadd.f32 %v1043, 1.0
  %v1046 = vadd.f32 %v1044, 1.0
  %v1047 = vmul.f32 %v1045, 0.5
  %v1048 = vmul.f32 %v1046, 0.5
  %v1049 = vadd.f32 %v793, %v917
  %v1050 = vadd.f32 %v794, %v957
  %v1051 = vmul.f32 %v1049, 0.5
  %v1052 = vmul.f32 %v1050, 0.5
  %v1053 = vtanh.pop %v1051
  %v1054 = vtanh.pop %v1052
  %v1055 = vadd.f32 %v1053, 1.0
  %v1056 = vadd.f32 %v1054, 1.0
  %v1057 = vmul.f32 %v1055, 0.5
  %v1058 = vmul.f32 %v1056, 0.5
  %v1059 = vadd.f32 %v997, %v212
  %v1060 = vadd.f32 %v1037, %v213
  %v1061 = vmul.f32 %v1047, %v1059
  %v1062 = vmul.f32 %v1048, %v1060
  %v1063 = vadd.f32 %v795, %v1061
  %v1064 = vadd.f32 %v796, %v1062
  %v1065 = vtanh.pop %v1063
  %v1066 = vtanh.pop %v1064
  %v1067 = vsub.f32 %v797, %v1065
  %v1068 = vsub.f32 %v798, %v1066
  %v1069 = vmul.f32 %v1057, %v1067
  %v1070 = vmul.f32 %v1058, %v1068
  %v1071 = vadd.f32 %v1065, %v1069
  %v1072 = vadd.f32 %v1066, %v1070
  %1073 = vst [vmem:[#allocation2] sm:$0xff] %v1071
  %1074 = vst [vmem:[#allocation2 + $0x8] sm:$0xff] %v1072
  %s1075 = scalar_lea.vmem [#allocation3], 32
  %1076 = vst [vmem:[%s1075] sm:$0xff] %v1071
  %1077 = vst [vmem:[%s1075 + $0x8] sm:$0xff] %v1072
  %s1078 = scalar_lea.vmem %s0, 144
  %v1079 = vld [vmem:[%s1078] sm:$0xff]
  %v1080 = vld [vmem:[%s1078 + $0x8] sm:$0xff]
  %v1081 = vld [vmem:[%s1078 + $0x10] sm:$0xff]
  %v1082 = vld [vmem:[%s1078 + $0x18] sm:$0xff]
  %v1083 = vld [vmem:[%s1078 + $0x20] sm:$0xff]
  %v1084 = vld [vmem:[%s1078 + $0x28] sm:$0xff]
  %v1085 = vld [vmem:[#allocation2] sm:$0xff]
  %v1086 = vld [vmem:[#allocation2 + $0x8] sm:$0xff]
  %1087 = vmatpush.msra.mxu0 %v108
  %1088 = vmatpush.msra.mxu0 %v102
  %1089 = vmatpush.msra.mxu0 %v96
  %1090 = vmatpush.msra.mxu0 %v90
  %1091 = vmatpush.msra.mxu0 %v84
  %1092 = vmatpush.msra.mxu0 %v78
  %1093 = vmatpush.msra.mxu0 %v72
  %1094 = vmatpush.msra.mxu0 %v66
  %1095 = vmatpush.msra.mxu0 %v60
  %1096 = vmatpush.msra.mxu0 %v54
  %1097 = vmatpush.msra.mxu0 %v48
  %1098 = vmatpush.msra.mxu0 %v42
  %1099 = vmatpush.msra.mxu0 %v36
  %1100 = vmatpush.msra.mxu0 %v30
  %1101 = vmatpush.msra.mxu0 %v24
  %1102 = vmatpush.msra.mxu0 %v18
  %1103 = vmatmul.f32.gmra.mxu0 %v1085
  %v1104 = vpop.f32.mrf.mxu0
  %v1105 = vadd.f32 0.0, %v1104
  %1106 = vdwg.mxu0
  %1107 = vmatpush.msra.mxu0 %v204
  %1108 = vmatpush.msra.mxu0 %v198
  %1109 = vmatpush.msra.mxu0 %v192
  %1110 = vmatpush.msra.mxu0 %v186
  %1111 = vmatpush.msra.mxu0 %v180
  %1112 = vmatpush.msra.mxu0 %v174
  %1113 = vmatpush.msra.mxu0 %v168
  %1114 = vmatpush.msra.mxu0 %v162
  %1115 = vmatpush.msra.mxu0 %v156
  %1116 = vmatpush.msra.mxu0 %v150
  %1117 = vmatpush.msra.mxu0 %v144
  %1118 = vmatpush.msra.mxu0 %v138
  %1119 = vmatpush.msra.mxu0 %v132
  %1120 = vmatpush.msra.mxu0 %v126
  %1121 = vmatpush.msra.mxu0 %v120
  %1122 = vmatpush.msra.mxu0 %v114
  %1123 = vmatmul.f32.gmra.mxu0 %v1086
  %v1124 = vpop.f32.mrf.mxu0
  %v1125 = vadd.f32 %v1105, %v1124
  %1126 = vdwg.mxu0
  %1127 = vmatpush.msra.mxu0 %v109
  %1128 = vmatpush.msra.mxu0 %v103
  %1129 = vmatpush.msra.mxu0 %v97
  %1130 = vmatpush.msra.mxu0 %v91
  %1131 = vmatpush.msra.mxu0 %v85
  %1132 = vmatpush.msra.mxu0 %v79
  %1133 = vmatpush.msra.mxu0 %v73
  %1134 = vmatpush.msra.mxu0 %v67
  %1135 = vmatpush.msra.mxu0 %v61
  %1136 = vmatpush.msra.mxu0 %v55
  %1137 = vmatpush.msra.mxu0 %v49
  %1138 = vmatpush.msra.mxu0 %v43
  %1139 = vmatpush.msra.mxu0 %v37
  %1140 = vmatpush.msra.mxu0 %v31
  %1141 = vmatpush.msra.mxu0 %v25
  %1142 = vmatpush.msra.mxu0 %v19
  %1143 = vmatmul.f32.gmra.mxu0 %v1085
  %v1144 = vpop.f32.mrf.mxu0
  %v1145 = vadd.f32 0.0, %v1144
  %1146 = vdwg.mxu0
  %1147 = vmatpush.msra.mxu0 %v205
  %1148 = vmatpush.msra.mxu0 %v199
  %1149 = vmatpush.msra.mxu0 %v193
  %1150 = vmatpush.msra.mxu0 %v187
  %1151 = vmatpush.msra.mxu0 %v181
  %1152 = vmatpush.msra.mxu0 %v175
  %1153 = vmatpush.msra.mxu0 %v169
  %1154 = vmatpush.msra.mxu0 %v163
  %1155 = vmatpush.msra.mxu0 %v157
  %1156 = vmatpush.msra.mxu0 %v151
  %1157 = vmatpush.msra.mxu0 %v145
  %1158 = vmatpush.msra.mxu0 %v139
  %1159 = vmatpush.msra.mxu0 %v133
  %1160 = vmatpush.msra.mxu0 %v127
  %1161 = vmatpush.msra.mxu0 %v121
  %1162 = vmatpush.msra.mxu0 %v115
  %1163 = vmatmul.f32.gmra.mxu0 %v1086
  %v1164 = vpop.f32.mrf.mxu0
  %v1165 = vadd.f32 %v1145, %v1164
  %1166 = vdwg.mxu0
  %1167 = vmatpush.msra.mxu0 %v110
  %1168 = vmatpush.msra.mxu0 %v104
  %1169 = vmatpush.msra.mxu0 %v98
  %1170 = vmatpush.msra.mxu0 %v92
  %1171 = vmatpush.msra.mxu0 %v86
  %1172 = vmatpush.msra.mxu0 %v80
  %1173 = vmatpush.msra.mxu0 %v74
  %1174 = vmatpush.msra.mxu0 %v68
  %1175 = vmatpush.msra.mxu0 %v62
  %1176 = vmatpush.msra.mxu0 %v56
  %1177 = vmatpush.msra.mxu0 %v50
  %1178 = vmatpush.msra.mxu0 %v44
  %1179 = vmatpush.msra.mxu0 %v38
  %1180 = vmatpush.msra.mxu0 %v32
  %1181 = vmatpush.msra.mxu0 %v26
  %1182 = vmatpush.msra.mxu0 %v20
  %1183 = vmatmul.f32.gmra.mxu0 %v1085
  %v1184 = vpop.f32.mrf.mxu0
  %v1185 = vadd.f32 0.0, %v1184
  %1186 = vdwg.mxu0
  %1187 = vmatpush.msra.mxu0 %v206
  %1188 = vmatpush.msra.mxu0 %v200
  %1189 = vmatpush.msra.mxu0 %v194
  %1190 = vmatpush.msra.mxu0 %v188
  %1191 = vmatpush.msra.mxu0 %v182
  %1192 = vmatpush.msra.mxu0 %v176
  %1193 = vmatpush.msra.mxu0 %v170
  %1194 = vmatpush.msra.mxu0 %v164
  %1195 = vmatpush.msra.mxu0 %v158
  %1196 = vmatpush.msra.mxu0 %v152
  %1197 = vmatpush.msra.mxu0 %v146
  %1198 = vmatpush.msra.mxu0 %v140
  %1199 = vmatpush.msra.mxu0 %v134
  %1200 = vmatpush.msra.mxu0 %v128
  %1201 = vmatpush.msra.mxu0 %v122
  %1202 = vmatpush.msra.mxu0 %v116
  %1203 = vmatmul.f32.gmra.mxu0 %v1086
  %v1204 = vpop.f32.mrf.mxu0
  %v1205 = vadd.f32 %v1185, %v1204
  %1206 = vdwg.mxu0
  %1207 = vmatpush.msra.mxu0 %v111
  %1208 = vmatpush.msra.mxu0 %v105
  %1209 = vmatpush.msra.mxu0 %v99
  %1210 = vmatpush.msra.mxu0 %v93
  %1211 = vmatpush.msra.mxu0 %v87
  %1212 = vmatpush.msra.mxu0 %v81
  %1213 = vmatpush.msra.mxu0 %v75
  %1214 = vmatpush.msra.mxu0 %v69
  %1215 = vmatpush.msra.mxu0 %v63
  %1216 = vmatpush.msra.mxu0 %v57
  %1217 = vmatpush.msra.mxu0 %v51
  %1218 = vmatpush.msra.mxu0 %v45
  %1219 = vmatpush.msra.mxu0 %v39
  %1220 = vmatpush.msra.mxu0 %v33
  %1221 = vmatpush.msra.mxu0 %v27
  %1222 = vmatpush.msra.mxu0 %v21
  %1223 = vmatmul.f32.gmra.mxu0 %v1085
  %v1224 = vpop.f32.mrf.mxu0
  %v1225 = vadd.f32 0.0, %v1224
  %1226 = vdwg.mxu0
  %1227 = vmatpush.msra.mxu0 %v207
  %1228 = vmatpush.msra.mxu0 %v201
  %1229 = vmatpush.msra.mxu0 %v195
  %1230 = vmatpush.msra.mxu0 %v189
  %1231 = vmatpush.msra.mxu0 %v183
  %1232 = vmatpush.msra.mxu0 %v177
  %1233 = vmatpush.msra.mxu0 %v171
  %1234 = vmatpush.msra.mxu0 %v165
  %1235 = vmatpush.msra.mxu0 %v159
  %1236 = vmatpush.msra.mxu0 %v153
  %1237 = vmatpush.msra.mxu0 %v147
  %1238 = vmatpush.msra.mxu0 %v141
  %1239 = vmatpush.msra.mxu0 %v135
  %1240 = vmatpush.msra.mxu0 %v129
  %1241 = vmatpush.msra.mxu0 %v123
  %1242 = vmatpush.msra.mxu0 %v117
  %1243 = vmatmul.f32.gmra.mxu0 %v1086
  %v1244 = vpop.f32.mrf.mxu0
  %v1245 = vadd.f32 %v1225, %v1244
  %1246 = vdwg.mxu0
  %1247 = vmatpush.msra.mxu0 %v112
  %1248 = vmatpush.msra.mxu0 %v106
  %1249 = vmatpush.msra.mxu0 %v100
  %1250 = vmatpush.msra.mxu0 %v94
  %1251 = vmatpush.msra.mxu0 %v88
  %1252 = vmatpush.msra.mxu0 %v82
  %1253 = vmatpush.msra.mxu0 %v76
  %1254 = vmatpush.msra.mxu0 %v70
  %1255 = vmatpush.msra.mxu0 %v64
  %1256 = vmatpush.msra.mxu0 %v58
  %1257 = vmatpush.msra.mxu0 %v52
  %1258 = vmatpush.msra.mxu0 %v46
  %1259 = vmatpush.msra.mxu0 %v40
  %1260 = vmatpush.msra.mxu0 %v34
  %1261 = vmatpush.msra.mxu0 %v28
  %1262 = vmatpush.msra.mxu0 %v22
  %1263 = vmatmul.f32.gmra.mxu0 %v1085
  %v1264 = vpop.f32.mrf.mxu0
  %v1265 = vadd.f32 0.0, %v1264
  %1266 = vdwg.mxu0
  %1267 = vmatpush.msra.mxu0 %v208
  %1268 = vmatpush.msra.mxu0 %v202
  %1269 = vmatpush.msra.mxu0 %v196
  %1270 = vmatpush.msra.mxu0 %v190
  %1271 = vmatpush.msra.mxu0 %v184
  %1272 = vmatpush.msra.mxu0 %v178
  %1273 = vmatpush.msra.mxu0 %v172
  %1274 = vmatpush.msra.mxu0 %v166
  %1275 = vmatpush.msra.mxu0 %v160
  %1276 = vmatpush.msra.mxu0 %v154
  %1277 = vmatpush.msra.mxu0 %v148
  %1278 = vmatpush.msra.mxu0 %v142
  %1279 = vmatpush.msra.mxu0 %v136
  %1280 = vmatpush.msra.mxu0 %v130
  %1281 = vmatpush.msra.mxu0 %v124
  %1282 = vmatpush.msra.mxu0 %v118
  %1283 = vmatmul.f32.gmra.mxu0 %v1086
  %v1284 = vpop.f32.mrf.mxu0
  %v1285 = vadd.f32 %v1265, %v1284
  %1286 = vdwg.mxu0
  %1287 = vmatpush.msra.mxu0 %v113
  %1288 = vmatpush.msra.mxu0 %v107
  %1289 = vmatpush.msra.mxu0 %v101
  %1290 = vmatpush.msra.mxu0 %v95
  %1291 = vmatpush.msra.mxu0 %v89
  %1292 = vmatpush.msra.mxu0 %v83
  %1293 = vmatpush.msra.mxu0 %v77
  %1294 = vmatpush.msra.mxu0 %v71
  %1295 = vmatpush.msra.mxu0 %v65
  %1296 = vmatpush.msra.mxu0 %v59
  %1297 = vmatpush.msra.mxu0 %v53
  %1298 = vmatpush.msra.mxu0 %v47
  %1299 = vmatpush.msra.mxu0 %v41
  %1300 = vmatpush.msra.mxu0 %v35
  %1301 = vmatpush.msra.mxu0 %v29
  %1302 = vmatpush.msra.mxu0 %v23
  %1303 = vmatmul.f32.gmra.mxu0 %v1085
  %v1304 = vpop.f32.mrf.mxu0
  %v1305 = vadd.f32 0.0, %v1304
  %1306 = vdwg.mxu0
  %1307 = vmatpush.msra.mxu0 %v209
  %1308 = vmatpush.msra.mxu0 %v203
  %1309 = vmatpush.msra.mxu0 %v197
  %1310 = vmatpush.msra.mxu0 %v191
  %1311 = vmatpush.msra.mxu0 %v185
  %1312 = vmatpush.msra.mxu0 %v179
  %1313 = vmatpush.msra.mxu0 %v173
  %1314 = vmatpush.msra.mxu0 %v167
  %1315 = vmatpush.msra.mxu0 %v161
  %1316 = vmatpush.msra.mxu0 %v155
  %1317 = vmatpush.msra.mxu0 %v149
  %1318 = vmatpush.msra.mxu0 %v143
  %1319 = vmatpush.msra.mxu0 %v137
  %1320 = vmatpush.msra.mxu0 %v131
  %1321 = vmatpush.msra.mxu0 %v125
  %1322 = vmatpush.msra.mxu0 %v119
  %1323 = vmatmul.f32.gmra.mxu0 %v1086
  %v1324 = vpop.f32.mrf.mxu0
  %v1325 = vadd.f32 %v1305, %v1324
  %1326 = vdwg.mxu0
  %v1327 = vadd.f32 %v1079, %v1125
  %v1328 = vadd.f32 %v1080, %v1165
  %v1329 = vmul.f32 %v1327, 0.5
  %v1330 = vmul.f32 %v1328, 0.5
  %v1331 = vtanh.pop %v1329
  %v1332 = vtanh.pop %v1330
  %v1333 = vadd.f32 %v1331, 1.0
  %v1334 = vadd.f32 %v1332, 1.0
  %v1335 = vmul.f32 %v1333, 0.5
  %v1336 = vmul.f32 %v1334, 0.5
  %v1337 = vadd.f32 %v1081, %v1205
  %v1338 = vadd.f32 %v1082, %v1245
  %v1339 = vmul.f32 %v1337, 0.5
  %v1340 = vmul.f32 %v1338, 0.5
  %v1341 = vtanh.pop %v1339
  %v1342 = vtanh.pop %v1340
  %v1343 = vadd.f32 %v1341, 1.0
  %v1344 = vadd.f32 %v1342, 1.0
  %v1345 = vmul.f32 %v1343, 0.5
  %v1346 = vmul.f32 %v1344, 0.5
  %v1347 = vadd.f32 %v1285, %v212
  %v1348 = vadd.f32 %v1325, %v213
  %v1349 = vmul.f32 %v1335, %v1347
  %v1350 = vmul.f32 %v1336, %v1348
  %v1351 = vadd.f32 %v1083, %v1349
  %v1352 = vadd.f32 %v1084, %v1350
  %v1353 = vtanh.pop %v1351
  %v1354 = vtanh.pop %v1352
  %v1355 = vsub.f32 %v1085, %v1353
  %v1356 = vsub.f32 %v1086, %v1354
  %v1357 = vmul.f32 %v1345, %v1355
  %v1358 = vmul.f32 %v1346, %v1356
  %v1359 = vadd.f32 %v1353, %v1357
  %v1360 = vadd.f32 %v1354, %v1358
  %1361 = vst [vmem:[#allocation2] sm:$0xff] %v1359
  %1362 = vst [vmem:[#allocation2 + $0x8] sm:$0xff] %v1360
  %s1363 = scalar_lea.vmem [#allocation3], 48
  %1364 = vst [vmem:[%s1363] sm:$0xff] %v1359
  %1365 = vst [vmem:[%s1363 + $0x8] sm:$0xff] %v1360
  %s1366 = scalar_lea.vmem %s0, 192
  %v1367 = vld [vmem:[%s1366] sm:$0xff]
  %v1368 = vld [vmem:[%s1366 + $0x8] sm:$0xff]
  %v1369 = vld [vmem:[%s1366 + $0x10] sm:$0xff]
  %v1370 = vld [vmem:[%s1366 + $0x18] sm:$0xff]
  %v1371 = vld [vmem:[%s1366 + $0x20] sm:$0xff]
  %v1372 = vld [vmem:[%s1366 + $0x28] sm:$0xff]
  %v1373 = vld [vmem:[#allocation2] sm:$0xff]
  %v1374 = vld [vmem:[#allocation2 + $0x8] sm:$0xff]
  %1375 = vmatpush.msra.mxu0 %v108
  %1376 = vmatpush.msra.mxu0 %v102
  %1377 = vmatpush.msra.mxu0 %v96
  %1378 = vmatpush.msra.mxu0 %v90
  %1379 = vmatpush.msra.mxu0 %v84
  %1380 = vmatpush.msra.mxu0 %v78
  %1381 = vmatpush.msra.mxu0 %v72
  %1382 = vmatpush.msra.mxu0 %v66
  %1383 = vmatpush.msra.mxu0 %v60
  %1384 = vmatpush.msra.mxu0 %v54
  %1385 = vmatpush.msra.mxu0 %v48
  %1386 = vmatpush.msra.mxu0 %v42
  %1387 = vmatpush.msra.mxu0 %v36
  %1388 = vmatpush.msra.mxu0 %v30
  %1389 = vmatpush.msra.mxu0 %v24
  %1390 = vmatpush.msra.mxu0 %v18
  %1391 = vmatmul.f32.gmra.mxu0 %v1373
  %v1392 = vpop.f32.mrf.mxu0
  %v1393 = vadd.f32 0.0, %v1392
  %1394 = vdwg.mxu0
  %1395 = vmatpush.msra.mxu0 %v204
  %1396 = vmatpush.msra.mxu0 %v198
  %1397 = vmatpush.msra.mxu0 %v192
  %1398 = vmatpush.msra.mxu0 %v186
  %1399 = vmatpush.msra.mxu0 %v180
  %1400 = vmatpush.msra.mxu0 %v174
  %1401 = vmatpush.msra.mxu0 %v168
  %1402 = vmatpush.msra.mxu0 %v162
  %1403 = vmatpush.msra.mxu0 %v156
  %1404 = vmatpush.msra.mxu0 %v150
  %1405 = vmatpush.msra.mxu0 %v144
  %1406 = vmatpush.msra.mxu0 %v138
  %1407 = vmatpush.msra.mxu0 %v132
  %1408 = vmatpush.msra.mxu0 %v126
  %1409 = vmatpush.msra.mxu0 %v120
  %1410 = vmatpush.msra.mxu0 %v114
  %1411 = vmatmul.f32.gmra.mxu0 %v1374
  %v1412 = vpop.f32.mrf.mxu0
  %v1413 = vadd.f32 %v1393, %v1412
  %1414 = vdwg.mxu0
  %1415 = vmatpush.msra.mxu0 %v109
  %1416 = vmatpush.msra.mxu0 %v103
  %1417 = vmatpush.msra.mxu0 %v97
  %1418 = vmatpush.msra.mxu0 %v91
  %1419 = vmatpush.msra.mxu0 %v85
  %1420 = vmatpush.msra.mxu0 %v79
  %1421 = vmatpush.msra.mxu0 %v73
  %1422 = vmatpush.msra.mxu0 %v67
  %1423 = vmatpush.msra.mxu0 %v61
  %1424 = vmatpush.msra.mxu0 %v55
  %1425 = vmatpush.msra.mxu0 %v49
  %1426 = vmatpush.msra.mxu0 %v43
  %1427 = vmatpush.msra.mxu0 %v37
  %1428 = vmatpush.msra.mxu0 %v31
  %1429 = vmatpush.msra.mxu0 %v25
  %1430 = vmatpush.msra.mxu0 %v19
  %1431 = vmatmul.f32.gmra.mxu0 %v1373
  %v1432 = vpop.f32.mrf.mxu0
  %v1433 = vadd.f32 0.0, %v1432
  %1434 = vdwg.mxu0
  %1435 = vmatpush.msra.mxu0 %v205
  %1436 = vmatpush.msra.mxu0 %v199
  %1437 = vmatpush.msra.mxu0 %v193
  %1438 = vmatpush.msra.mxu0 %v187
  %1439 = vmatpush.msra.mxu0 %v181
  %1440 = vmatpush.msra.mxu0 %v175
  %1441 = vmatpush.msra.mxu0 %v169
  %1442 = vmatpush.msra.mxu0 %v163
  %1443 = vmatpush.msra.mxu0 %v157
  %1444 = vmatpush.msra.mxu0 %v151
  %1445 = vmatpush.msra.mxu0 %v145
  %1446 = vmatpush.msra.mxu0 %v139
  %1447 = vmatpush.msra.mxu0 %v133
  %1448 = vmatpush.msra.mxu0 %v127
  %1449 = vmatpush.msra.mxu0 %v121
  %1450 = vmatpush.msra.mxu0 %v115
  %1451 = vmatmul.f32.gmra.mxu0 %v1374
  %v1452 = vpop.f32.mrf.mxu0
  %v1453 = vadd.f32 %v1433, %v1452
  %1454 = vdwg.mxu0
  %1455 = vmatpush.msra.mxu0 %v110
  %1456 = vmatpush.msra.mxu0 %v104
  %1457 = vmatpush.msra.mxu0 %v98
  %1458 = vmatpush.msra.mxu0 %v92
  %1459 = vmatpush.msra.mxu0 %v86
  %1460 = vmatpush.msra.mxu0 %v80
  %1461 = vmatpush.msra.mxu0 %v74
  %1462 = vmatpush.msra.mxu0 %v68
  %1463 = vmatpush.msra.mxu0 %v62
  %1464 = vmatpush.msra.mxu0 %v56
  %1465 = vmatpush.msra.mxu0 %v50
  %1466 = vmatpush.msra.mxu0 %v44
  %1467 = vmatpush.msra.mxu0 %v38
  %1468 = vmatpush.msra.mxu0 %v32
  %1469 = vmatpush.msra.mxu0 %v26
  %1470 = vmatpush.msra.mxu0 %v20
  %1471 = vmatmul.f32.gmra.mxu0 %v1373
  %v1472 = vpop.f32.mrf.mxu0
  %v1473 = vadd.f32 0.0, %v1472
  %1474 = vdwg.mxu0
  %1475 = vmatpush.msra.mxu0 %v206
  %1476 = vmatpush.msra.mxu0 %v200
  %1477 = vmatpush.msra.mxu0 %v194
  %1478 = vmatpush.msra.mxu0 %v188
  %1479 = vmatpush.msra.mxu0 %v182
  %1480 = vmatpush.msra.mxu0 %v176
  %1481 = vmatpush.msra.mxu0 %v170
  %1482 = vmatpush.msra.mxu0 %v164
  %1483 = vmatpush.msra.mxu0 %v158
  %1484 = vmatpush.msra.mxu0 %v152
  %1485 = vmatpush.msra.mxu0 %v146
  %1486 = vmatpush.msra.mxu0 %v140
  %1487 = vmatpush.msra.mxu0 %v134
  %1488 = vmatpush.msra.mxu0 %v128
  %1489 = vmatpush.msra.mxu0 %v122
  %1490 = vmatpush.msra.mxu0 %v116
  %1491 = vmatmul.f32.gmra.mxu0 %v1374
  %v1492 = vpop.f32.mrf.mxu0
  %v1493 = vadd.f32 %v1473, %v1492
  %1494 = vdwg.mxu0
  %1495 = vmatpush.msra.mxu0 %v111
  %1496 = vmatpush.msra.mxu0 %v105
  %1497 = vmatpush.msra.mxu0 %v99
  %1498 = vmatpush.msra.mxu0 %v93
  %1499 = vmatpush.msra.mxu0 %v87
  %1500 = vmatpush.msra.mxu0 %v81
  %1501 = vmatpush.msra.mxu0 %v75
  %1502 = vmatpush.msra.mxu0 %v69
  %1503 = vmatpush.msra.mxu0 %v63
  %1504 = vmatpush.msra.mxu0 %v57
  %1505 = vmatpush.msra.mxu0 %v51
  %1506 = vmatpush.msra.mxu0 %v45
  %1507 = vmatpush.msra.mxu0 %v39
  %1508 = vmatpush.msra.mxu0 %v33
  %1509 = vmatpush.msra.mxu0 %v27
  %1510 = vmatpush.msra.mxu0 %v21
  %1511 = vmatmul.f32.gmra.mxu0 %v1373
  %v1512 = vpop.f32.mrf.mxu0
  %v1513 = vadd.f32 0.0, %v1512
  %1514 = vdwg.mxu0
  %1515 = vmatpush.msra.mxu0 %v207
  %1516 = vmatpush.msra.mxu0 %v201
  %1517 = vmatpush.msra.mxu0 %v195
  %1518 = vmatpush.msra.mxu0 %v189
  %1519 = vmatpush.msra.mxu0 %v183
  %1520 = vmatpush.msra.mxu0 %v177
  %1521 = vmatpush.msra.mxu0 %v171
  %1522 = vmatpush.msra.mxu0 %v165
  %1523 = vmatpush.msra.mxu0 %v159
  %1524 = vmatpush.msra.mxu0 %v153
  %1525 = vmatpush.msra.mxu0 %v147
  %1526 = vmatpush.msra.mxu0 %v141
  %1527 = vmatpush.msra.mxu0 %v135
  %1528 = vmatpush.msra.mxu0 %v129
  %1529 = vmatpush.msra.mxu0 %v123
  %1530 = vmatpush.msra.mxu0 %v117
  %1531 = vmatmul.f32.gmra.mxu0 %v1374
  %v1532 = vpop.f32.mrf.mxu0
  %v1533 = vadd.f32 %v1513, %v1532
  %1534 = vdwg.mxu0
  %1535 = vmatpush.msra.mxu0 %v112
  %1536 = vmatpush.msra.mxu0 %v106
  %1537 = vmatpush.msra.mxu0 %v100
  %1538 = vmatpush.msra.mxu0 %v94
  %1539 = vmatpush.msra.mxu0 %v88
  %1540 = vmatpush.msra.mxu0 %v82
  %1541 = vmatpush.msra.mxu0 %v76
  %1542 = vmatpush.msra.mxu0 %v70
  %1543 = vmatpush.msra.mxu0 %v64
  %1544 = vmatpush.msra.mxu0 %v58
  %1545 = vmatpush.msra.mxu0 %v52
  %1546 = vmatpush.msra.mxu0 %v46
  %1547 = vmatpush.msra.mxu0 %v40
  %1548 = vmatpush.msra.mxu0 %v34
  %1549 = vmatpush.msra.mxu0 %v28
  %1550 = vmatpush.msra.mxu0 %v22
  %1551 = vmatmul.f32.gmra.mxu0 %v1373
  %v1552 = vpop.f32.mrf.mxu0
  %v1553 = vadd.f32 0.0, %v1552
  %1554 = vdwg.mxu0
  %1555 = vmatpush.msra.mxu0 %v208
  %1556 = vmatpush.msra.mxu0 %v202
  %1557 = vmatpush.msra.mxu0 %v196
  %1558 = vmatpush.msra.mxu0 %v190
  %1559 = vmatpush.msra.mxu0 %v184
  %1560 = vmatpush.msra.mxu0 %v178
  %1561 = vmatpush.msra.mxu0 %v172
  %1562 = vmatpush.msra.mxu0 %v166
  %1563 = vmatpush.msra.mxu0 %v160
  %1564 = vmatpush.msra.mxu0 %v154
  %1565 = vmatpush.msra.mxu0 %v148
  %1566 = vmatpush.msra.mxu0 %v142
  %1567 = vmatpush.msra.mxu0 %v136
  %1568 = vmatpush.msra.mxu0 %v130
  %1569 = vmatpush.msra.mxu0 %v124
  %1570 = vmatpush.msra.mxu0 %v118
  %1571 = vmatmul.f32.gmra.mxu0 %v1374
  %v1572 = vpop.f32.mrf.mxu0
  %v1573 = vadd.f32 %v1553, %v1572
  %1574 = vdwg.mxu0
  %1575 = vmatpush.msra.mxu0 %v113
  %1576 = vmatpush.msra.mxu0 %v107
  %1577 = vmatpush.msra.mxu0 %v101
  %1578 = vmatpush.msra.mxu0 %v95
  %1579 = vmatpush.msra.mxu0 %v89
  %1580 = vmatpush.msra.mxu0 %v83
  %1581 = vmatpush.msra.mxu0 %v77
  %1582 = vmatpush.msra.mxu0 %v71
  %1583 = vmatpush.msra.mxu0 %v65
  %1584 = vmatpush.msra.mxu0 %v59
  %1585 = vmatpush.msra.mxu0 %v53
  %1586 = vmatpush.msra.mxu0 %v47
  %1587 = vmatpush.msra.mxu0 %v41
  %1588 = vmatpush.msra.mxu0 %v35
  %1589 = vmatpush.msra.mxu0 %v29
  %1590 = vmatpush.msra.mxu0 %v23
  %1591 = vmatmul.f32.gmra.mxu0 %v1373
  %v1592 = vpop.f32.mrf.mxu0
  %v1593 = vadd.f32 0.0, %v1592
  %1594 = vdwg.mxu0
  %1595 = vmatpush.msra.mxu0 %v209
  %1596 = vmatpush.msra.mxu0 %v203
  %1597 = vmatpush.msra.mxu0 %v197
  %1598 = vmatpush.msra.mxu0 %v191
  %1599 = vmatpush.msra.mxu0 %v185
  %1600 = vmatpush.msra.mxu0 %v179
  %1601 = vmatpush.msra.mxu0 %v173
  %1602 = vmatpush.msra.mxu0 %v167
  %1603 = vmatpush.msra.mxu0 %v161
  %1604 = vmatpush.msra.mxu0 %v155
  %1605 = vmatpush.msra.mxu0 %v149
  %1606 = vmatpush.msra.mxu0 %v143
  %1607 = vmatpush.msra.mxu0 %v137
  %1608 = vmatpush.msra.mxu0 %v131
  %1609 = vmatpush.msra.mxu0 %v125
  %1610 = vmatpush.msra.mxu0 %v119
  %1611 = vmatmul.f32.gmra.mxu0 %v1374
  %v1612 = vpop.f32.mrf.mxu0
  %v1613 = vadd.f32 %v1593, %v1612
  %1614 = vdwg.mxu0
  %v1615 = vadd.f32 %v1367, %v1413
  %v1616 = vadd.f32 %v1368, %v1453
  %v1617 = vmul.f32 %v1615, 0.5
  %v1618 = vmul.f32 %v1616, 0.5
  %v1619 = vtanh.pop %v1617
  %v1620 = vtanh.pop %v1618
  %v1621 = vadd.f32 %v1619, 1.0
  %v1622 = vadd.f32 %v1620, 1.0
  %v1623 = vmul.f32 %v1621, 0.5
  %v1624 = vmul.f32 %v1622, 0.5
  %v1625 = vadd.f32 %v1369, %v1493
  %v1626 = vadd.f32 %v1370, %v1533
  %v1627 = vmul.f32 %v1625, 0.5
  %v1628 = vmul.f32 %v1626, 0.5
  %v1629 = vtanh.pop %v1627
  %v1630 = vtanh.pop %v1628
  %v1631 = vadd.f32 %v1629, 1.0
  %v1632 = vadd.f32 %v1630, 1.0
  %v1633 = vmul.f32 %v1631, 0.5
  %v1634 = vmul.f32 %v1632, 0.5
  %v1635 = vadd.f32 %v1573, %v212
  %v1636 = vadd.f32 %v1613, %v213
  %v1637 = vmul.f32 %v1623, %v1635
  %v1638 = vmul.f32 %v1624, %v1636
  %v1639 = vadd.f32 %v1371, %v1637
  %v1640 = vadd.f32 %v1372, %v1638
  %v1641 = vtanh.pop %v1639
  %v1642 = vtanh.pop %v1640
  %v1643 = vsub.f32 %v1373, %v1641
  %v1644 = vsub.f32 %v1374, %v1642
  %v1645 = vmul.f32 %v1633, %v1643
  %v1646 = vmul.f32 %v1634, %v1644
  %v1647 = vadd.f32 %v1641, %v1645
  %v1648 = vadd.f32 %v1642, %v1646
  %1649 = vst [vmem:[#allocation2] sm:$0xff] %v1647
  %1650 = vst [vmem:[#allocation2 + $0x8] sm:$0xff] %v1648
  %s1651 = scalar_lea.vmem [#allocation3], 64
  %1652 = vst [vmem:[%s1651] sm:$0xff] %v1647
  %1653 = vst [vmem:[%s1651 + $0x8] sm:$0xff] %v1648
  %s1654 = scalar_lea.vmem %s0, 240
  %v1655 = vld [vmem:[%s1654] sm:$0xff]
  %v1656 = vld [vmem:[%s1654 + $0x8] sm:$0xff]
  %v1657 = vld [vmem:[%s1654 + $0x10] sm:$0xff]
  %v1658 = vld [vmem:[%s1654 + $0x18] sm:$0xff]
  %v1659 = vld [vmem:[%s1654 + $0x20] sm:$0xff]
  %v1660 = vld [vmem:[%s1654 + $0x28] sm:$0xff]
  %v1661 = vld [vmem:[#allocation2] sm:$0xff]
  %v1662 = vld [vmem:[#allocation2 + $0x8] sm:$0xff]
  %1663 = vmatpush.msra.mxu0 %v108
  %1664 = vmatpush.msra.mxu0 %v102
  %1665 = vmatpush.msra.mxu0 %v96
  %1666 = vmatpush.msra.mxu0 %v90
  %1667 = vmatpush.msra.mxu0 %v84
  %1668 = vmatpush.msra.mxu0 %v78
  %1669 = vmatpush.msra.mxu0 %v72
  %1670 = vmatpush.msra.mxu0 %v66
  %1671 = vmatpush.msra.mxu0 %v60
  %1672 = vmatpush.msra.mxu0 %v54
  %1673 = vmatpush.msra.mxu0 %v48
  %1674 = vmatpush.msra.mxu0 %v42
  %1675 = vmatpush.msra.mxu0 %v36
  %1676 = vmatpush.msra.mxu0 %v30
  %1677 = vmatpush.msra.mxu0 %v24
  %1678 = vmatpush.msra.mxu0 %v18
  %1679 = vmatmul.f32.gmra.mxu0 %v1661
  %v1680 = vpop.f32.mrf.mxu0
  %v1681 = vadd.f32 0.0, %v1680
  %1682 = vdwg.mxu0
  %1683 = vmatpush.msra.mxu0 %v204
  %1684 = vmatpush.msra.mxu0 %v198
  %1685 = vmatpush.msra.mxu0 %v192
  %1686 = vmatpush.msra.mxu0 %v186
  %1687 = vmatpush.msra.mxu0 %v180
  %1688 = vmatpush.msra.mxu0 %v174
  %1689 = vmatpush.msra.mxu0 %v168
  %1690 = vmatpush.msra.mxu0 %v162
  %1691 = vmatpush.msra.mxu0 %v156
  %1692 = vmatpush.msra.mxu0 %v150
  %1693 = vmatpush.msra.mxu0 %v144
  %1694 = vmatpush.msra.mxu0 %v138
  %1695 = vmatpush.msra.mxu0 %v132
  %1696 = vmatpush.msra.mxu0 %v126
  %1697 = vmatpush.msra.mxu0 %v120
  %1698 = vmatpush.msra.mxu0 %v114
  %1699 = vmatmul.f32.gmra.mxu0 %v1662
  %v1700 = vpop.f32.mrf.mxu0
  %v1701 = vadd.f32 %v1681, %v1700
  %1702 = vdwg.mxu0
  %1703 = vmatpush.msra.mxu0 %v109
  %1704 = vmatpush.msra.mxu0 %v103
  %1705 = vmatpush.msra.mxu0 %v97
  %1706 = vmatpush.msra.mxu0 %v91
  %1707 = vmatpush.msra.mxu0 %v85
  %1708 = vmatpush.msra.mxu0 %v79
  %1709 = vmatpush.msra.mxu0 %v73
  %1710 = vmatpush.msra.mxu0 %v67
  %1711 = vmatpush.msra.mxu0 %v61
  %1712 = vmatpush.msra.mxu0 %v55
  %1713 = vmatpush.msra.mxu0 %v49
  %1714 = vmatpush.msra.mxu0 %v43
  %1715 = vmatpush.msra.mxu0 %v37
  %1716 = vmatpush.msra.mxu0 %v31
  %1717 = vmatpush.msra.mxu0 %v25
  %1718 = vmatpush.msra.mxu0 %v19
  %1719 = vmatmul.f32.gmra.mxu0 %v1661
  %v1720 = vpop.f32.mrf.mxu0
  %v1721 = vadd.f32 0.0, %v1720
  %1722 = vdwg.mxu0
  %1723 = vmatpush.msra.mxu0 %v205
  %1724 = vmatpush.msra.mxu0 %v199
  %1725 = vmatpush.msra.mxu0 %v193
  %1726 = vmatpush.msra.mxu0 %v187
  %1727 = vmatpush.msra.mxu0 %v181
  %1728 = vmatpush.msra.mxu0 %v175
  %1729 = vmatpush.msra.mxu0 %v169
  %1730 = vmatpush.msra.mxu0 %v163
  %1731 = vmatpush.msra.mxu0 %v157
  %1732 = vmatpush.msra.mxu0 %v151
  %1733 = vmatpush.msra.mxu0 %v145
  %1734 = vmatpush.msra.mxu0 %v139
  %1735 = vmatpush.msra.mxu0 %v133
  %1736 = vmatpush.msra.mxu0 %v127
  %1737 = vmatpush.msra.mxu0 %v121
  %1738 = vmatpush.msra.mxu0 %v115
  %1739 = vmatmul.f32.gmra.mxu0 %v1662
  %v1740 = vpop.f32.mrf.mxu0
  %v1741 = vadd.f32 %v1721, %v1740
  %1742 = vdwg.mxu0
  %1743 = vmatpush.msra.mxu0 %v110
  %1744 = vmatpush.msra.mxu0 %v104
  %1745 = vmatpush.msra.mxu0 %v98
  %1746 = vmatpush.msra.mxu0 %v92
  %1747 = vmatpush.msra.mxu0 %v86
  %1748 = vmatpush.msra.mxu0 %v80
  %1749 = vmatpush.msra.mxu0 %v74
  %1750 = vmatpush.msra.mxu0 %v68
  %1751 = vmatpush.msra.mxu0 %v62
  %1752 = vmatpush.msra.mxu0 %v56
  %1753 = vmatpush.msra.mxu0 %v50
  %1754 = vmatpush.msra.mxu0 %v44
  %1755 = vmatpush.msra.mxu0 %v38
  %1756 = vmatpush.msra.mxu0 %v32
  %1757 = vmatpush.msra.mxu0 %v26
  %1758 = vmatpush.msra.mxu0 %v20
  %1759 = vmatmul.f32.gmra.mxu0 %v1661
  %v1760 = vpop.f32.mrf.mxu0
  %v1761 = vadd.f32 0.0, %v1760
  %1762 = vdwg.mxu0
  %1763 = vmatpush.msra.mxu0 %v206
  %1764 = vmatpush.msra.mxu0 %v200
  %1765 = vmatpush.msra.mxu0 %v194
  %1766 = vmatpush.msra.mxu0 %v188
  %1767 = vmatpush.msra.mxu0 %v182
  %1768 = vmatpush.msra.mxu0 %v176
  %1769 = vmatpush.msra.mxu0 %v170
  %1770 = vmatpush.msra.mxu0 %v164
  %1771 = vmatpush.msra.mxu0 %v158
  %1772 = vmatpush.msra.mxu0 %v152
  %1773 = vmatpush.msra.mxu0 %v146
  %1774 = vmatpush.msra.mxu0 %v140
  %1775 = vmatpush.msra.mxu0 %v134
  %1776 = vmatpush.msra.mxu0 %v128
  %1777 = vmatpush.msra.mxu0 %v122
  %1778 = vmatpush.msra.mxu0 %v116
  %1779 = vmatmul.f32.gmra.mxu0 %v1662
  %v1780 = vpop.f32.mrf.mxu0
  %v1781 = vadd.f32 %v1761, %v1780
  %1782 = vdwg.mxu0
  %1783 = vmatpush.msra.mxu0 %v111
  %1784 = vmatpush.msra.mxu0 %v105
  %1785 = vmatpush.msra.mxu0 %v99
  %1786 = vmatpush.msra.mxu0 %v93
  %1787 = vmatpush.msra.mxu0 %v87
  %1788 = vmatpush.msra.mxu0 %v81
  %1789 = vmatpush.msra.mxu0 %v75
  %1790 = vmatpush.msra.mxu0 %v69
  %1791 = vmatpush.msra.mxu0 %v63
  %1792 = vmatpush.msra.mxu0 %v57
  %1793 = vmatpush.msra.mxu0 %v51
  %1794 = vmatpush.msra.mxu0 %v45
  %1795 = vmatpush.msra.mxu0 %v39
  %1796 = vmatpush.msra.mxu0 %v33
  %1797 = vmatpush.msra.mxu0 %v27
  %1798 = vmatpush.msra.mxu0 %v21
  %1799 = vmatmul.f32.gmra.mxu0 %v1661
  %v1800 = vpop.f32.mrf.mxu0
  %v1801 = vadd.f32 0.0, %v1800
  %1802 = vdwg.mxu0
  %1803 = vmatpush.msra.mxu0 %v207
  %1804 = vmatpush.msra.mxu0 %v201
  %1805 = vmatpush.msra.mxu0 %v195
  %1806 = vmatpush.msra.mxu0 %v189
  %1807 = vmatpush.msra.mxu0 %v183
  %1808 = vmatpush.msra.mxu0 %v177
  %1809 = vmatpush.msra.mxu0 %v171
  %1810 = vmatpush.msra.mxu0 %v165
  %1811 = vmatpush.msra.mxu0 %v159
  %1812 = vmatpush.msra.mxu0 %v153
  %1813 = vmatpush.msra.mxu0 %v147
  %1814 = vmatpush.msra.mxu0 %v141
  %1815 = vmatpush.msra.mxu0 %v135
  %1816 = vmatpush.msra.mxu0 %v129
  %1817 = vmatpush.msra.mxu0 %v123
  %1818 = vmatpush.msra.mxu0 %v117
  %1819 = vmatmul.f32.gmra.mxu0 %v1662
  %v1820 = vpop.f32.mrf.mxu0
  %v1821 = vadd.f32 %v1801, %v1820
  %1822 = vdwg.mxu0
  %1823 = vmatpush.msra.mxu0 %v112
  %1824 = vmatpush.msra.mxu0 %v106
  %1825 = vmatpush.msra.mxu0 %v100
  %1826 = vmatpush.msra.mxu0 %v94
  %1827 = vmatpush.msra.mxu0 %v88
  %1828 = vmatpush.msra.mxu0 %v82
  %1829 = vmatpush.msra.mxu0 %v76
  %1830 = vmatpush.msra.mxu0 %v70
  %1831 = vmatpush.msra.mxu0 %v64
  %1832 = vmatpush.msra.mxu0 %v58
  %1833 = vmatpush.msra.mxu0 %v52
  %1834 = vmatpush.msra.mxu0 %v46
  %1835 = vmatpush.msra.mxu0 %v40
  %1836 = vmatpush.msra.mxu0 %v34
  %1837 = vmatpush.msra.mxu0 %v28
  %1838 = vmatpush.msra.mxu0 %v22
  %1839 = vmatmul.f32.gmra.mxu0 %v1661
  %v1840 = vpop.f32.mrf.mxu0
  %v1841 = vadd.f32 0.0, %v1840
  %1842 = vdwg.mxu0
  %1843 = vmatpush.msra.mxu0 %v208
  %1844 = vmatpush.msra.mxu0 %v202
  %1845 = vmatpush.msra.mxu0 %v196
  %1846 = vmatpush.msra.mxu0 %v190
  %1847 = vmatpush.msra.mxu0 %v184
  %1848 = vmatpush.msra.mxu0 %v178
  %1849 = vmatpush.msra.mxu0 %v172
  %1850 = vmatpush.msra.mxu0 %v166
  %1851 = vmatpush.msra.mxu0 %v160
  %1852 = vmatpush.msra.mxu0 %v154
  %1853 = vmatpush.msra.mxu0 %v148
  %1854 = vmatpush.msra.mxu0 %v142
  %1855 = vmatpush.msra.mxu0 %v136
  %1856 = vmatpush.msra.mxu0 %v130
  %1857 = vmatpush.msra.mxu0 %v124
  %1858 = vmatpush.msra.mxu0 %v118
  %1859 = vmatmul.f32.gmra.mxu0 %v1662
  %v1860 = vpop.f32.mrf.mxu0
  %v1861 = vadd.f32 %v1841, %v1860
  %1862 = vdwg.mxu0
  %1863 = vmatpush.msra.mxu0 %v113
  %1864 = vmatpush.msra.mxu0 %v107
  %1865 = vmatpush.msra.mxu0 %v101
  %1866 = vmatpush.msra.mxu0 %v95
  %1867 = vmatpush.msra.mxu0 %v89
  %1868 = vmatpush.msra.mxu0 %v83
  %1869 = vmatpush.msra.mxu0 %v77
  %1870 = vmatpush.msra.mxu0 %v71
  %1871 = vmatpush.msra.mxu0 %v65
  %1872 = vmatpush.msra.mxu0 %v59
  %1873 = vmatpush.msra.mxu0 %v53
  %1874 = vmatpush.msra.mxu0 %v47
  %1875 = vmatpush.msra.mxu0 %v41
  %1876 = vmatpush.msra.mxu0 %v35
  %1877 = vmatpush.msra.mxu0 %v29
  %1878 = vmatpush.msra.mxu0 %v23
  %1879 = vmatmul.f32.gmra.mxu0 %v1661
  %v1880 = vpop.f32.mrf.mxu0
  %v1881 = vadd.f32 0.0, %v1880
  %1882 = vdwg.mxu0
  %1883 = vmatpush.msra.mxu0 %v209
  %1884 = vmatpush.msra.mxu0 %v203
  %1885 = vmatpush.msra.mxu0 %v197
  %1886 = vmatpush.msra.mxu0 %v191
  %1887 = vmatpush.msra.mxu0 %v185
  %1888 = vmatpush.msra.mxu0 %v179
  %1889 = vmatpush.msra.mxu0 %v173
  %1890 = vmatpush.msra.mxu0 %v167
  %1891 = vmatpush.msra.mxu0 %v161
  %1892 = vmatpush.msra.mxu0 %v155
  %1893 = vmatpush.msra.mxu0 %v149
  %1894 = vmatpush.msra.mxu0 %v143
  %1895 = vmatpush.msra.mxu0 %v137
  %1896 = vmatpush.msra.mxu0 %v131
  %1897 = vmatpush.msra.mxu0 %v125
  %1898 = vmatpush.msra.mxu0 %v119
  %1899 = vmatmul.f32.gmra.mxu0 %v1662
  %v1900 = vpop.f32.mrf.mxu0
  %v1901 = vadd.f32 %v1881, %v1900
  %1902 = vdwg.mxu0
  %v1903 = vadd.f32 %v1655, %v1701
  %v1904 = vadd.f32 %v1656, %v1741
  %v1905 = vmul.f32 %v1903, 0.5
  %v1906 = vmul.f32 %v1904, 0.5
  %v1907 = vtanh.pop %v1905
  %v1908 = vtanh.pop %v1906
  %v1909 = vadd.f32 %v1907, 1.0
  %v1910 = vadd.f32 %v1908, 1.0
  %v1911 = vmul.f32 %v1909, 0.5
  %v1912 = vmul.f32 %v1910, 0.5
  %v1913 = vadd.f32 %v1657, %v1781
  %v1914 = vadd.f32 %v1658, %v1821
  %v1915 = vmul.f32 %v1913, 0.5
  %v1916 = vmul.f32 %v1914, 0.5
  %v1917 = vtanh.pop %v1915
  %v1918 = vtanh.pop %v1916
  %v1919 = vadd.f32 %v1917, 1.0
  %v1920 = vadd.f32 %v1918, 1.0
  %v1921 = vmul.f32 %v1919, 0.5
  %v1922 = vmul.f32 %v1920, 0.5
  %v1923 = vadd.f32 %v1861, %v212
  %v1924 = vadd.f32 %v1901, %v213
  %v1925 = vmul.f32 %v1911, %v1923
  %v1926 = vmul.f32 %v1912, %v1924
  %v1927 = vadd.f32 %v1659, %v1925
  %v1928 = vadd.f32 %v1660, %v1926
  %v1929 = vtanh.pop %v1927
  %v1930 = vtanh.pop %v1928
  %v1931 = vsub.f32 %v1661, %v1929
  %v1932 = vsub.f32 %v1662, %v1930
  %v1933 = vmul.f32 %v1921, %v1931
  %v1934 = vmul.f32 %v1922, %v1932
  %v1935 = vadd.f32 %v1929, %v1933
  %v1936 = vadd.f32 %v1930, %v1934
  %1937 = vst [vmem:[#allocation2] sm:$0xff] %v1935
  %1938 = vst [vmem:[#allocation2 + $0x8] sm:$0xff] %v1936
  %s1939 = scalar_lea.vmem [#allocation3], 80
  %1940 = vst [vmem:[%s1939] sm:$0xff] %v1935
  %1941 = vst [vmem:[%s1939 + $0x8] sm:$0xff] %v1936
  %s1942 = scalar_lea.vmem %s0, 288
  %v1943 = vld [vmem:[%s1942] sm:$0xff]
  %v1944 = vld [vmem:[%s1942 + $0x8] sm:$0xff]
  %v1945 = vld [vmem:[%s1942 + $0x10] sm:$0xff]
  %v1946 = vld [vmem:[%s1942 + $0x18] sm:$0xff]
  %v1947 = vld [vmem:[%s1942 + $0x20] sm:$0xff]
  %v1948 = vld [vmem:[%s1942 + $0x28] sm:$0xff]
  %v1949 = vld [vmem:[#allocation2] sm:$0xff]
  %v1950 = vld [vmem:[#allocation2 + $0x8] sm:$0xff]
  %1951 = vmatpush.msra.mxu0 %v108
  %1952 = vmatpush.msra.mxu0 %v102
  %1953 = vmatpush.msra.mxu0 %v96
  %1954 = vmatpush.msra.mxu0 %v90
  %1955 = vmatpush.msra.mxu0 %v84
  %1956 = vmatpush.msra.mxu0 %v78
  %1957 = vmatpush.msra.mxu0 %v72
  %1958 = vmatpush.msra.mxu0 %v66
  %1959 = vmatpush.msra.mxu0 %v60
  %1960 = vmatpush.msra.mxu0 %v54
  %1961 = vmatpush.msra.mxu0 %v48
  %1962 = vmatpush.msra.mxu0 %v42
  %1963 = vmatpush.msra.mxu0 %v36
  %1964 = vmatpush.msra.mxu0 %v30
  %1965 = vmatpush.msra.mxu0 %v24
  %1966 = vmatpush.msra.mxu0 %v18
  %1967 = vmatmul.f32.gmra.mxu0 %v1949
  %v1968 = vpop.f32.mrf.mxu0
  %v1969 = vadd.f32 0.0, %v1968
  %1970 = vdwg.mxu0
  %1971 = vmatpush.msra.mxu0 %v204
  %1972 = vmatpush.msra.mxu0 %v198
  %1973 = vmatpush.msra.mxu0 %v192
  %1974 = vmatpush.msra.mxu0 %v186
  %1975 = vmatpush.msra.mxu0 %v180
  %1976 = vmatpush.msra.mxu0 %v174
  %1977 = vmatpush.msra.mxu0 %v168
  %1978 = vmatpush.msra.mxu0 %v162
  %1979 = vmatpush.msra.mxu0 %v156
  %1980 = vmatpush.msra.mxu0 %v150
  %1981 = vmatpush.msra.mxu0 %v144
  %1982 = vmatpush.msra.mxu0 %v138
  %1983 = vmatpush.msra.mxu0 %v132
  %1984 = vmatpush.msra.mxu0 %v126
  %1985 = vmatpush.msra.mxu0 %v120
  %1986 = vmatpush.msra.mxu0 %v114
  %1987 = vmatmul.f32.gmra.mxu0 %v1950
  %v1988 = vpop.f32.mrf.mxu0
  %v1989 = vadd.f32 %v1969, %v1988
  %1990 = vdwg.mxu0
  %1991 = vmatpush.msra.mxu0 %v109
  %1992 = vmatpush.msra.mxu0 %v103
  %1993 = vmatpush.msra.mxu0 %v97
  %1994 = vmatpush.msra.mxu0 %v91
  %1995 = vmatpush.msra.mxu0 %v85
  %1996 = vmatpush.msra.mxu0 %v79
  %1997 = vmatpush.msra.mxu0 %v73
  %1998 = vmatpush.msra.mxu0 %v67
  %1999 = vmatpush.msra.mxu0 %v61
  %2000 = vmatpush.msra.mxu0 %v55
  %2001 = vmatpush.msra.mxu0 %v49
  %2002 = vmatpush.msra.mxu0 %v43
  %2003 = vmatpush.msra.mxu0 %v37
  %2004 = vmatpush.msra.mxu0 %v31
  %2005 = vmatpush.msra.mxu0 %v25
  %2006 = vmatpush.msra.mxu0 %v19
  %2007 = vmatmul.f32.gmra.mxu0 %v1949
  %v2008 = vpop.f32.mrf.mxu0
  %v2009 = vadd.f32 0.0, %v2008
  %2010 = vdwg.mxu0
  %2011 = vmatpush.msra.mxu0 %v205
  %2012 = vmatpush.msra.mxu0 %v199
  %2013 = vmatpush.msra.mxu0 %v193
  %2014 = vmatpush.msra.mxu0 %v187
  %2015 = vmatpush.msra.mxu0 %v181
  %2016 = vmatpush.msra.mxu0 %v175
  %2017 = vmatpush.msra.mxu0 %v169
  %2018 = vmatpush.msra.mxu0 %v163
  %2019 = vmatpush.msra.mxu0 %v157
  %2020 = vmatpush.msra.mxu0 %v151
  %2021 = vmatpush.msra.mxu0 %v145
  %2022 = vmatpush.msra.mxu0 %v139
  %2023 = vmatpush.msra.mxu0 %v133
  %2024 = vmatpush.msra.mxu0 %v127
  %2025 = vmatpush.msra.mxu0 %v121
  %2026 = vmatpush.msra.mxu0 %v115
  %2027 = vmatmul.f32.gmra.mxu0 %v1950
  %v2028 = vpop.f32.mrf.mxu0
  %v2029 = vadd.f32 %v2009, %v2028
  %2030 = vdwg.mxu0
  %2031 = vmatpush.msra.mxu0 %v110
  %2032 = vmatpush.msra.mxu0 %v104
  %2033 = vmatpush.msra.mxu0 %v98
  %2034 = vmatpush.msra.mxu0 %v92
  %2035 = vmatpush.msra.mxu0 %v86
  %2036 = vmatpush.msra.mxu0 %v80
  %2037 = vmatpush.msra.mxu0 %v74
  %2038 = vmatpush.msra.mxu0 %v68
  %2039 = vmatpush.msra.mxu0 %v62
  %2040 = vmatpush.msra.mxu0 %v56
  %2041 = vmatpush.msra.mxu0 %v50
  %2042 = vmatpush.msra.mxu0 %v44
  %2043 = vmatpush.msra.mxu0 %v38
  %2044 = vmatpush.msra.mxu0 %v32
  %2045 = vmatpush.msra.mxu0 %v26
  %2046 = vmatpush.msra.mxu0 %v20
  %2047 = vmatmul.f32.gmra.mxu0 %v1949
  %v2048 = vpop.f32.mrf.mxu0
  %v2049 = vadd.f32 0.0, %v2048
  %2050 = vdwg.mxu0
  %2051 = vmatpush.msra.mxu0 %v206
  %2052 = vmatpush.msra.mxu0 %v200
  %2053 = vmatpush.msra.mxu0 %v194
  %2054 = vmatpush.msra.mxu0 %v188
  %2055 = vmatpush.msra.mxu0 %v182
  %2056 = vmatpush.msra.mxu0 %v176
  %2057 = vmatpush.msra.mxu0 %v170
  %2058 = vmatpush.msra.mxu0 %v164
  %2059 = vmatpush.msra.mxu0 %v158
  %2060 = vmatpush.msra.mxu0 %v152
  %2061 = vmatpush.msra.mxu0 %v146
  %2062 = vmatpush.msra.mxu0 %v140
  %2063 = vmatpush.msra.mxu0 %v134
  %2064 = vmatpush.msra.mxu0 %v128
  %2065 = vmatpush.msra.mxu0 %v122
  %2066 = vmatpush.msra.mxu0 %v116
  %2067 = vmatmul.f32.gmra.mxu0 %v1950
  %v2068 = vpop.f32.mrf.mxu0
  %v2069 = vadd.f32 %v2049, %v2068
  %2070 = vdwg.mxu0
  %2071 = vmatpush.msra.mxu0 %v111
  %2072 = vmatpush.msra.mxu0 %v105
  %2073 = vmatpush.msra.mxu0 %v99
  %2074 = vmatpush.msra.mxu0 %v93
  %2075 = vmatpush.msra.mxu0 %v87
  %2076 = vmatpush.msra.mxu0 %v81
  %2077 = vmatpush.msra.mxu0 %v75
  %2078 = vmatpush.msra.mxu0 %v69
  %2079 = vmatpush.msra.mxu0 %v63
  %2080 = vmatpush.msra.mxu0 %v57
  %2081 = vmatpush.msra.mxu0 %v51
  %2082 = vmatpush.msra.mxu0 %v45
  %2083 = vmatpush.msra.mxu0 %v39
  %2084 = vmatpush.msra.mxu0 %v33
  %2085 = vmatpush.msra.mxu0 %v27
  %2086 = vmatpush.msra.mxu0 %v21
  %2087 = vmatmul.f32.gmra.mxu0 %v1949
  %v2088 = vpop.f32.mrf.mxu0
  %v2089 = vadd.f32 0.0, %v2088
  %2090 = vdwg.mxu0
  %2091 = vmatpush.msra.mxu0 %v207
  %2092 = vmatpush.msra.mxu0 %v201
  %2093 = vmatpush.msra.mxu0 %v195
  %2094 = vmatpush.msra.mxu0 %v189
  %2095 = vmatpush.msra.mxu0 %v183
  %2096 = vmatpush.msra.mxu0 %v177
  %2097 = vmatpush.msra.mxu0 %v171
  %2098 = vmatpush.msra.mxu0 %v165
  %2099 = vmatpush.msra.mxu0 %v159
  %2100 = vmatpush.msra.mxu0 %v153
  %2101 = vmatpush.msra.mxu0 %v147
  %2102 = vmatpush.msra.mxu0 %v141
  %2103 = vmatpush.msra.mxu0 %v135
  %2104 = vmatpush.msra.mxu0 %v129
  %2105 = vmatpush.msra.mxu0 %v123
  %2106 = vmatpush.msra.mxu0 %v117
  %2107 = vmatmul.f32.gmra.mxu0 %v1950
  %v2108 = vpop.f32.mrf.mxu0
  %v2109 = vadd.f32 %v2089, %v2108
  %2110 = vdwg.mxu0
  %2111 = vmatpush.msra.mxu0 %v112
  %2112 = vmatpush.msra.mxu0 %v106
  %2113 = vmatpush.msra.mxu0 %v100
  %2114 = vmatpush.msra.mxu0 %v94
  %2115 = vmatpush.msra.mxu0 %v88
  %2116 = vmatpush.msra.mxu0 %v82
  %2117 = vmatpush.msra.mxu0 %v76
  %2118 = vmatpush.msra.mxu0 %v70
  %2119 = vmatpush.msra.mxu0 %v64
  %2120 = vmatpush.msra.mxu0 %v58
  %2121 = vmatpush.msra.mxu0 %v52
  %2122 = vmatpush.msra.mxu0 %v46
  %2123 = vmatpush.msra.mxu0 %v40
  %2124 = vmatpush.msra.mxu0 %v34
  %2125 = vmatpush.msra.mxu0 %v28
  %2126 = vmatpush.msra.mxu0 %v22
  %2127 = vmatmul.f32.gmra.mxu0 %v1949
  %v2128 = vpop.f32.mrf.mxu0
  %v2129 = vadd.f32 0.0, %v2128
  %2130 = vdwg.mxu0
  %2131 = vmatpush.msra.mxu0 %v208
  %2132 = vmatpush.msra.mxu0 %v202
  %2133 = vmatpush.msra.mxu0 %v196
  %2134 = vmatpush.msra.mxu0 %v190
  %2135 = vmatpush.msra.mxu0 %v184
  %2136 = vmatpush.msra.mxu0 %v178
  %2137 = vmatpush.msra.mxu0 %v172
  %2138 = vmatpush.msra.mxu0 %v166
  %2139 = vmatpush.msra.mxu0 %v160
  %2140 = vmatpush.msra.mxu0 %v154
  %2141 = vmatpush.msra.mxu0 %v148
  %2142 = vmatpush.msra.mxu0 %v142
  %2143 = vmatpush.msra.mxu0 %v136
  %2144 = vmatpush.msra.mxu0 %v130
  %2145 = vmatpush.msra.mxu0 %v124
  %2146 = vmatpush.msra.mxu0 %v118
  %2147 = vmatmul.f32.gmra.mxu0 %v1950
  %v2148 = vpop.f32.mrf.mxu0
  %v2149 = vadd.f32 %v2129, %v2148
  %2150 = vdwg.mxu0
  %2151 = vmatpush.msra.mxu0 %v113
  %2152 = vmatpush.msra.mxu0 %v107
  %2153 = vmatpush.msra.mxu0 %v101
  %2154 = vmatpush.msra.mxu0 %v95
  %2155 = vmatpush.msra.mxu0 %v89
  %2156 = vmatpush.msra.mxu0 %v83
  %2157 = vmatpush.msra.mxu0 %v77
  %2158 = vmatpush.msra.mxu0 %v71
  %2159 = vmatpush.msra.mxu0 %v65
  %2160 = vmatpush.msra.mxu0 %v59
  %2161 = vmatpush.msra.mxu0 %v53
  %2162 = vmatpush.msra.mxu0 %v47
  %2163 = vmatpush.msra.mxu0 %v41
  %2164 = vmatpush.msra.mxu0 %v35
  %2165 = vmatpush.msra.mxu0 %v29
  %2166 = vmatpush.msra.mxu0 %v23
  %2167 = vmatmul.f32.gmra.mxu0 %v1949
  %v2168 = vpop.f32.mrf.mxu0
  %v2169 = vadd.f32 0.0, %v2168
  %2170 = vdwg.mxu0
  %2171 = vmatpush.msra.mxu0 %v209
  %2172 = vmatpush.msra.mxu0 %v203
  %2173 = vmatpush.msra.mxu0 %v197
  %2174 = vmatpush.msra.mxu0 %v191
  %2175 = vmatpush.msra.mxu0 %v185
  %2176 = vmatpush.msra.mxu0 %v179
  %2177 = vmatpush.msra.mxu0 %v173
  %2178 = vmatpush.msra.mxu0 %v167
  %2179 = vmatpush.msra.mxu0 %v161
  %2180 = vmatpush.msra.mxu0 %v155
  %2181 = vmatpush.msra.mxu0 %v149
  %2182 = vmatpush.msra.mxu0 %v143
  %2183 = vmatpush.msra.mxu0 %v137
  %2184 = vmatpush.msra.mxu0 %v131
  %2185 = vmatpush.msra.mxu0 %v125
  %2186 = vmatpush.msra.mxu0 %v119
  %2187 = vmatmul.f32.gmra.mxu0 %v1950
  %v2188 = vpop.f32.mrf.mxu0
  %v2189 = vadd.f32 %v2169, %v2188
  %2190 = vdwg.mxu0
  %v2191 = vadd.f32 %v1943, %v1989
  %v2192 = vadd.f32 %v1944, %v2029
  %v2193 = vmul.f32 %v2191, 0.5
  %v2194 = vmul.f32 %v2192, 0.5
  %v2195 = vtanh.pop %v2193
  %v2196 = vtanh.pop %v2194
  %v2197 = vadd.f32 %v2195, 1.0
  %v2198 = vadd.f32 %v2196, 1.0
  %v2199 = vmul.f32 %v2197, 0.5
  %v2200 = vmul.f32 %v2198, 0.5
  %v2201 = vadd.f32 %v1945, %v2069
  %v2202 = vadd.f32 %v1946, %v2109
  %v2203 = vmul.f32 %v2201, 0.5
  %v2204 = vmul.f32 %v2202, 0.5
  %v2205 = vtanh.pop %v2203
  %v2206 = vtanh.pop %v2204
  %v2207 = vadd.f32 %v2205, 1.0
  %v2208 = vadd.f32 %v2206, 1.0
  %v2209 = vmul.f32 %v2207, 0.5
  %v2210 = vmul.f32 %v2208, 0.5
  %v2211 = vadd.f32 %v2149, %v212
  %v2212 = vadd.f32 %v2189, %v213
  %v2213 = vmul.f32 %v2199, %v2211
  %v2214 = vmul.f32 %v2200, %v2212
  %v2215 = vadd.f32 %v1947, %v2213
  %v2216 = vadd.f32 %v1948, %v2214
  %v2217 = vtanh.pop %v2215
  %v2218 = vtanh.pop %v2216
  %v2219 = vsub.f32 %v1949, %v2217
  %v2220 = vsub.f32 %v1950, %v2218
  %v2221 = vmul.f32 %v2209, %v2219
  %v2222 = vmul.f32 %v2210, %v2220
  %v2223 = vadd.f32 %v2217, %v2221
  %v2224 = vadd.f32 %v2218, %v2222
  %2225 = vst [vmem:[#allocation2] sm:$0xff] %v2223
  %2226 = vst [vmem:[#allocation2 + $0x8] sm:$0xff] %v2224
  %s2227 = scalar_lea.vmem [#allocation3], 96
  %2228 = vst [vmem:[%s2227] sm:$0xff] %v2223
  %2229 = vst [vmem:[%s2227 + $0x8] sm:$0xff] %v2224
  %s2230 = scalar_lea.vmem %s0, 336
  %v2231 = vld [vmem:[%s2230] sm:$0xff]
  %v2232 = vld [vmem:[%s2230 + $0x8] sm:$0xff]
  %v2233 = vld [vmem:[%s2230 + $0x10] sm:$0xff]
  %v2234 = vld [vmem:[%s2230 + $0x18] sm:$0xff]
  %v2235 = vld [vmem:[%s2230 + $0x20] sm:$0xff]
  %v2236 = vld [vmem:[%s2230 + $0x28] sm:$0xff]
  %v2237 = vld [vmem:[#allocation2] sm:$0xff]
  %v2238 = vld [vmem:[#allocation2 + $0x8] sm:$0xff]
  %2239 = vmatpush.msra.mxu0 %v108
  %2240 = vmatpush.msra.mxu0 %v102
  %2241 = vmatpush.msra.mxu0 %v96
  %2242 = vmatpush.msra.mxu0 %v90
  %2243 = vmatpush.msra.mxu0 %v84
  %2244 = vmatpush.msra.mxu0 %v78
  %2245 = vmatpush.msra.mxu0 %v72
  %2246 = vmatpush.msra.mxu0 %v66
  %2247 = vmatpush.msra.mxu0 %v60
  %2248 = vmatpush.msra.mxu0 %v54
  %2249 = vmatpush.msra.mxu0 %v48
  %2250 = vmatpush.msra.mxu0 %v42
  %2251 = vmatpush.msra.mxu0 %v36
  %2252 = vmatpush.msra.mxu0 %v30
  %2253 = vmatpush.msra.mxu0 %v24
  %2254 = vmatpush.msra.mxu0 %v18
  %2255 = vmatmul.f32.gmra.mxu0 %v2237
  %v2256 = vpop.f32.mrf.mxu0
  %v2257 = vadd.f32 0.0, %v2256
  %2258 = vdwg.mxu0
  %2259 = vmatpush.msra.mxu0 %v204
  %2260 = vmatpush.msra.mxu0 %v198
  %2261 = vmatpush.msra.mxu0 %v192
  %2262 = vmatpush.msra.mxu0 %v186
  %2263 = vmatpush.msra.mxu0 %v180
  %2264 = vmatpush.msra.mxu0 %v174
  %2265 = vmatpush.msra.mxu0 %v168
  %2266 = vmatpush.msra.mxu0 %v162
  %2267 = vmatpush.msra.mxu0 %v156
  %2268 = vmatpush.msra.mxu0 %v150
  %2269 = vmatpush.msra.mxu0 %v144
  %2270 = vmatpush.msra.mxu0 %v138
  %2271 = vmatpush.msra.mxu0 %v132
  %2272 = vmatpush.msra.mxu0 %v126
  %2273 = vmatpush.msra.mxu0 %v120
  %2274 = vmatpush.msra.mxu0 %v114
  %2275 = vmatmul.f32.gmra.mxu0 %v2238
  %v2276 = vpop.f32.mrf.mxu0
  %v2277 = vadd.f32 %v2257, %v2276
  %2278 = vdwg.mxu0
  %2279 = vmatpush.msra.mxu0 %v109
  %2280 = vmatpush.msra.mxu0 %v103
  %2281 = vmatpush.msra.mxu0 %v97
  %2282 = vmatpush.msra.mxu0 %v91
  %2283 = vmatpush.msra.mxu0 %v85
  %2284 = vmatpush.msra.mxu0 %v79
  %2285 = vmatpush.msra.mxu0 %v73
  %2286 = vmatpush.msra.mxu0 %v67
  %2287 = vmatpush.msra.mxu0 %v61
  %2288 = vmatpush.msra.mxu0 %v55
  %2289 = vmatpush.msra.mxu0 %v49
  %2290 = vmatpush.msra.mxu0 %v43
  %2291 = vmatpush.msra.mxu0 %v37
  %2292 = vmatpush.msra.mxu0 %v31
  %2293 = vmatpush.msra.mxu0 %v25
  %2294 = vmatpush.msra.mxu0 %v19
  %2295 = vmatmul.f32.gmra.mxu0 %v2237
  %v2296 = vpop.f32.mrf.mxu0
  %v2297 = vadd.f32 0.0, %v2296
  %2298 = vdwg.mxu0
  %2299 = vmatpush.msra.mxu0 %v205
  %2300 = vmatpush.msra.mxu0 %v199
  %2301 = vmatpush.msra.mxu0 %v193
  %2302 = vmatpush.msra.mxu0 %v187
  %2303 = vmatpush.msra.mxu0 %v181
  %2304 = vmatpush.msra.mxu0 %v175
  %2305 = vmatpush.msra.mxu0 %v169
  %2306 = vmatpush.msra.mxu0 %v163
  %2307 = vmatpush.msra.mxu0 %v157
  %2308 = vmatpush.msra.mxu0 %v151
  %2309 = vmatpush.msra.mxu0 %v145
  %2310 = vmatpush.msra.mxu0 %v139
  %2311 = vmatpush.msra.mxu0 %v133
  %2312 = vmatpush.msra.mxu0 %v127
  %2313 = vmatpush.msra.mxu0 %v121
  %2314 = vmatpush.msra.mxu0 %v115
  %2315 = vmatmul.f32.gmra.mxu0 %v2238
  %v2316 = vpop.f32.mrf.mxu0
  %v2317 = vadd.f32 %v2297, %v2316
  %2318 = vdwg.mxu0
  %2319 = vmatpush.msra.mxu0 %v110
  %2320 = vmatpush.msra.mxu0 %v104
  %2321 = vmatpush.msra.mxu0 %v98
  %2322 = vmatpush.msra.mxu0 %v92
  %2323 = vmatpush.msra.mxu0 %v86
  %2324 = vmatpush.msra.mxu0 %v80
  %2325 = vmatpush.msra.mxu0 %v74
  %2326 = vmatpush.msra.mxu0 %v68
  %2327 = vmatpush.msra.mxu0 %v62
  %2328 = vmatpush.msra.mxu0 %v56
  %2329 = vmatpush.msra.mxu0 %v50
  %2330 = vmatpush.msra.mxu0 %v44
  %2331 = vmatpush.msra.mxu0 %v38
  %2332 = vmatpush.msra.mxu0 %v32
  %2333 = vmatpush.msra.mxu0 %v26
  %2334 = vmatpush.msra.mxu0 %v20
  %2335 = vmatmul.f32.gmra.mxu0 %v2237
  %v2336 = vpop.f32.mrf.mxu0
  %v2337 = vadd.f32 0.0, %v2336
  %2338 = vdwg.mxu0
  %2339 = vmatpush.msra.mxu0 %v206
  %2340 = vmatpush.msra.mxu0 %v200
  %2341 = vmatpush.msra.mxu0 %v194
  %2342 = vmatpush.msra.mxu0 %v188
  %2343 = vmatpush.msra.mxu0 %v182
  %2344 = vmatpush.msra.mxu0 %v176
  %2345 = vmatpush.msra.mxu0 %v170
  %2346 = vmatpush.msra.mxu0 %v164
  %2347 = vmatpush.msra.mxu0 %v158
  %2348 = vmatpush.msra.mxu0 %v152
  %2349 = vmatpush.msra.mxu0 %v146
  %2350 = vmatpush.msra.mxu0 %v140
  %2351 = vmatpush.msra.mxu0 %v134
  %2352 = vmatpush.msra.mxu0 %v128
  %2353 = vmatpush.msra.mxu0 %v122
  %2354 = vmatpush.msra.mxu0 %v116
  %2355 = vmatmul.f32.gmra.mxu0 %v2238
  %v2356 = vpop.f32.mrf.mxu0
  %v2357 = vadd.f32 %v2337, %v2356
  %2358 = vdwg.mxu0
  %2359 = vmatpush.msra.mxu0 %v111
  %2360 = vmatpush.msra.mxu0 %v105
  %2361 = vmatpush.msra.mxu0 %v99
  %2362 = vmatpush.msra.mxu0 %v93
  %2363 = vmatpush.msra.mxu0 %v87
  %2364 = vmatpush.msra.mxu0 %v81
  %2365 = vmatpush.msra.mxu0 %v75
  %2366 = vmatpush.msra.mxu0 %v69
  %2367 = vmatpush.msra.mxu0 %v63
  %2368 = vmatpush.msra.mxu0 %v57
  %2369 = vmatpush.msra.mxu0 %v51
  %2370 = vmatpush.msra.mxu0 %v45
  %2371 = vmatpush.msra.mxu0 %v39
  %2372 = vmatpush.msra.mxu0 %v33
  %2373 = vmatpush.msra.mxu0 %v27
  %2374 = vmatpush.msra.mxu0 %v21
  %2375 = vmatmul.f32.gmra.mxu0 %v2237
  %v2376 = vpop.f32.mrf.mxu0
  %v2377 = vadd.f32 0.0, %v2376
  %2378 = vdwg.mxu0
  %2379 = vmatpush.msra.mxu0 %v207
  %2380 = vmatpush.msra.mxu0 %v201
  %2381 = vmatpush.msra.mxu0 %v195
  %2382 = vmatpush.msra.mxu0 %v189
  %2383 = vmatpush.msra.mxu0 %v183
  %2384 = vmatpush.msra.mxu0 %v177
  %2385 = vmatpush.msra.mxu0 %v171
  %2386 = vmatpush.msra.mxu0 %v165
  %2387 = vmatpush.msra.mxu0 %v159
  %2388 = vmatpush.msra.mxu0 %v153
  %2389 = vmatpush.msra.mxu0 %v147
  %2390 = vmatpush.msra.mxu0 %v141
  %2391 = vmatpush.msra.mxu0 %v135
  %2392 = vmatpush.msra.mxu0 %v129
  %2393 = vmatpush.msra.mxu0 %v123
  %2394 = vmatpush.msra.mxu0 %v117
  %2395 = vmatmul.f32.gmra.mxu0 %v2238
  %v2396 = vpop.f32.mrf.mxu0
  %v2397 = vadd.f32 %v2377, %v2396
  %2398 = vdwg.mxu0
  %2399 = vmatpush.msra.mxu0 %v112
  %2400 = vmatpush.msra.mxu0 %v106
  %2401 = vmatpush.msra.mxu0 %v100
  %2402 = vmatpush.msra.mxu0 %v94
  %2403 = vmatpush.msra.mxu0 %v88
  %2404 = vmatpush.msra.mxu0 %v82
  %2405 = vmatpush.msra.mxu0 %v76
  %2406 = vmatpush.msra.mxu0 %v70
  %2407 = vmatpush.msra.mxu0 %v64
  %2408 = vmatpush.msra.mxu0 %v58
  %2409 = vmatpush.msra.mxu0 %v52
  %2410 = vmatpush.msra.mxu0 %v46
  %2411 = vmatpush.msra.mxu0 %v40
  %2412 = vmatpush.msra.mxu0 %v34
  %2413 = vmatpush.msra.mxu0 %v28
  %2414 = vmatpush.msra.mxu0 %v22
  %2415 = vmatmul.f32.gmra.mxu0 %v2237
  %v2416 = vpop.f32.mrf.mxu0
  %v2417 = vadd.f32 0.0, %v2416
  %2418 = vdwg.mxu0
  %2419 = vmatpush.msra.mxu0 %v208
  %2420 = vmatpush.msra.mxu0 %v202
  %2421 = vmatpush.msra.mxu0 %v196
  %2422 = vmatpush.msra.mxu0 %v190
  %2423 = vmatpush.msra.mxu0 %v184
  %2424 = vmatpush.msra.mxu0 %v178
  %2425 = vmatpush.msra.mxu0 %v172
  %2426 = vmatpush.msra.mxu0 %v166
  %2427 = vmatpush.msra.mxu0 %v160
  %2428 = vmatpush.msra.mxu0 %v154
  %2429 = vmatpush.msra.mxu0 %v148
  %2430 = vmatpush.msra.mxu0 %v142
  %2431 = vmatpush.msra.mxu0 %v136
  %2432 = vmatpush.msra.mxu0 %v130
  %2433 = vmatpush.msra.mxu0 %v124
  %2434 = vmatpush.msra.mxu0 %v118
  %2435 = vmatmul.f32.gmra.mxu0 %v2238
  %v2436 = vpop.f32.mrf.mxu0
  %v2437 = vadd.f32 %v2417, %v2436
  %2438 = vdwg.mxu0
  %2439 = vmatpush.msra.mxu0 %v113
  %2440 = vmatpush.msra.mxu0 %v107
  %2441 = vmatpush.msra.mxu0 %v101
  %2442 = vmatpush.msra.mxu0 %v95
  %2443 = vmatpush.msra.mxu0 %v89
  %2444 = vmatpush.msra.mxu0 %v83
  %2445 = vmatpush.msra.mxu0 %v77
  %2446 = vmatpush.msra.mxu0 %v71
  %2447 = vmatpush.msra.mxu0 %v65
  %2448 = vmatpush.msra.mxu0 %v59
  %2449 = vmatpush.msra.mxu0 %v53
  %2450 = vmatpush.msra.mxu0 %v47
  %2451 = vmatpush.msra.mxu0 %v41
  %2452 = vmatpush.msra.mxu0 %v35
  %2453 = vmatpush.msra.mxu0 %v29
  %2454 = vmatpush.msra.mxu0 %v23
  %2455 = vmatmul.f32.gmra.mxu0 %v2237
  %v2456 = vpop.f32.mrf.mxu0
  %v2457 = vadd.f32 0.0, %v2456
  %2458 = vdwg.mxu0
  %2459 = vmatpush.msra.mxu0 %v209
  %2460 = vmatpush.msra.mxu0 %v203
  %2461 = vmatpush.msra.mxu0 %v197
  %2462 = vmatpush.msra.mxu0 %v191
  %2463 = vmatpush.msra.mxu0 %v185
  %2464 = vmatpush.msra.mxu0 %v179
  %2465 = vmatpush.msra.mxu0 %v173
  %2466 = vmatpush.msra.mxu0 %v167
  %2467 = vmatpush.msra.mxu0 %v161
  %2468 = vmatpush.msra.mxu0 %v155
  %2469 = vmatpush.msra.mxu0 %v149
  %2470 = vmatpush.msra.mxu0 %v143
  %2471 = vmatpush.msra.mxu0 %v137
  %2472 = vmatpush.msra.mxu0 %v131
  %2473 = vmatpush.msra.mxu0 %v125
  %2474 = vmatpush.msra.mxu0 %v119
  %2475 = vmatmul.f32.gmra.mxu0 %v2238
  %v2476 = vpop.f32.mrf.mxu0
  %v2477 = vadd.f32 %v2457, %v2476
  %2478 = vdwg.mxu0
  %v2479 = vadd.f32 %v2231, %v2277
  %v2480 = vadd.f32 %v2232, %v2317
  %v2481 = vmul.f32 %v2479, 0.5
  %v2482 = vmul.f32 %v2480, 0.5
  %v2483 = vtanh.pop %v2481
  %v2484 = vtanh.pop %v2482
  %v2485 = vadd.f32 %v2483, 1.0
  %v2486 = vadd.f32 %v2484, 1.0
  %v2487 = vmul.f32 %v2485, 0.5
  %v2488 = vmul.f32 %v2486, 0.5
  %v2489 = vadd.f32 %v2233, %v2357
  %v2490 = vadd.f32 %v2234, %v2397
  %v2491 = vmul.f32 %v2489, 0.5
  %v2492 = vmul.f32 %v2490, 0.5
  %v2493 = vtanh.pop %v2491
  %v2494 = vtanh.pop %v2492
  %v2495 = vadd.f32 %v2493, 1.0
  %v2496 = vadd.f32 %v2494, 1.0
  %v2497 = vmul.f32 %v2495, 0.5
  %v2498 = vmul.f32 %v2496, 0.5
  %v2499 = vadd.f32 %v2437, %v212
  %v2500 = vadd.f32 %v2477, %v213
  %v2501 = vmul.f32 %v2487, %v2499
  %v2502 = vmul.f32 %v2488, %v2500
  %v2503 = vadd.f32 %v2235, %v2501
  %v2504 = vadd.f32 %v2236, %v2502
  %v2505 = vtanh.pop %v2503
  %v2506 = vtanh.pop %v2504
  %v2507 = vsub.f32 %v2237, %v2505
  %v2508 = vsub.f32 %v2238, %v2506
  %v2509 = vmul.f32 %v2497, %v2507
  %v2510 = vmul.f32 %v2498, %v2508
  %v2511 = vadd.f32 %v2505, %v2509
  %v2512 = vadd.f32 %v2506, %v2510
  %2513 = vst [vmem:[#allocation2] sm:$0xff] %v2511
  %2514 = vst [vmem:[#allocation2 + $0x8] sm:$0xff] %v2512
  %s2515 = scalar_lea.vmem [#allocation3], 112
  %2516 = vst [vmem:[%s2515] sm:$0xff] %v2511
  %2517 = vst [vmem:[%s2515 + $0x8] sm:$0xff] %v2512
  %v2518 = vld [vmem:[#allocation3] sm:$0xff]
  %v2519 = vld [vmem:[%s2515 + $0x8] sm:$0xff]
  %v2520 = vadd.f32 %v2518, %v2519
  %2521 = vst [vmem:[%s3] sm:$0xff] %v2520
  %v2522 = vld [vmem:[%s787] sm:$0xff]
  %v2523 = vld [vmem:[%s2227 + $0x8] sm:$0xff]
  %v2524 = vadd.f32 %v2522, %v2523
  %s2525 = scalar_lea.vmem %s3, 8
  %2526 = vst [vmem:[%s2525] sm:$0xff] %v2524
  %v2527 = vld [vmem:[%s1075] sm:$0xff]
  %v2528 = vld [vmem:[%s1939 + $0x8] sm:$0xff]
  %v2529 = vadd.f32 %v2527, %v2528
  %s2530 = scalar_lea.vmem %s3, 16
  %2531 = vst [vmem:[%s2530] sm:$0xff] %v2529
  %v2532 = vld [vmem:[%s1363] sm:$0xff]
  %v2533 = vld [vmem:[%s1651 + $0x8] sm:$0xff]
  %v2534 = vadd.f32 %v2532, %v2533
  %s2535 = scalar_lea.vmem %s3, 24
  %2536 = vst [vmem:[%s2535] sm:$0xff] %v2534
  %v2537 = vld [vmem:[%s1651] sm:$0xff]
  %v2538 = vld [vmem:[%s1363 + $0x8] sm:$0xff]
  %v2539 = vadd.f32 %v2537, %v2538
  %s2540 = scalar_lea.vmem %s3, 32
  %2541 = vst [vmem:[%s2540] sm:$0xff] %v2539
  %v2542 = vld [vmem:[%s1939] sm:$0xff]
  %v2543 = vld [vmem:[%s1075 + $0x8] sm:$0xff]
  %v2544 = vadd.f32 %v2542, %v2543
  %s2545 = scalar_lea.vmem %s3, 40
  %2546 = vst [vmem:[%s2545] sm:$0xff] %v2544
  %v2547 = vld [vmem:[%s2227] sm:$0xff]
  %v2548 = vld [vmem:[%s787 + $0x8] sm:$0xff]
  %v2549 = vadd.f32 %v2547, %v2548
  %s2550 = scalar_lea.vmem %s3, 48
  %2551 = vst [vmem:[%s2550] sm:$0xff] %v2549
  %v2552 = vld [vmem:[%s2515] sm:$0xff]
  %v2553 = vld [vmem:[#allocation3 + $0x8] sm:$0xff]
  %v2554 = vadd.f32 %v2552, %v2553
  %s2555 = scalar_lea.vmem %s3, 56
  %2556 = vst [vmem:[%s2555] sm:$0xff] %v2554
  %v2557 = vld [vmem:[#allocation2] sm:$0xff]
  %2558 = vst [vmem:[%s4] sm:$0xff] %v2557
  %v2559 = vld [vmem:[#allocation2 + $0x8] sm:$0xff]
  %s2560 = scalar_lea.vmem %s4, 8
  %2561 = vst [vmem:[%s2560] sm:$0xff] %v2559
  // Predicated region
  $region14: #{encoder_forward.1} parent=0 // pred_check
    _
  $region15: #{encoder_forward.1} parent=0 // pred_check_branch
    %2563 = sbr.rel (0) target = $region17
  $region16: #{encoder_forward.1} parent=0 // pred_region
    _
  $region17: #{encoder_forward.1} parent=0 // pred_fallthru
    _
  // Predicated region
  $region18: #{encoder_forward.1} parent=0 // pred_check
    _
  $region19: #{encoder_forward.1} parent=0 // pred_check_branch
    %2565 = sbr.rel (0) target = $region21
  $region20: #{encoder_forward.1} parent=0 // pred_region
    _
  $region21: #{encoder_forward.1} parent=0 // pred_fallthru
    _
  // Predicated region
  $region22: #{encoder_forward.1} parent=0 // pred_check
    _
  $region23: #{encoder_forward.1} parent=0 // pred_check_branch
    %2567 = sbr.rel (0) target = $region25
  $region24: #{encoder_forward.1} parent=0 // pred_region
    _
  $region25: #{encoder_forward.1} parent=0 // pred_fallthru
    _
  // Predicated region
  $region26: #{encoder_forward.1} parent=0 // pred_check
    _
  $region27: #{encoder_forward.1} parent=0 // pred_check_branch
    %2569 = sbr.rel (0) target = $region29
  $region28: #{encoder_forward.1} parent=0 // pred_region
    _
  $region29: #{encoder_forward.1} parent=0 // pred_fallthru
    _

</llo_original>
